<compile_context>
chip_gen: v7x
topology: tpu7x:2x2x1
jax: 0.10.0
libtpu: 0.0.40
codegen_flags: <defaults>
</compile_context>

<pallas_src>
import jax
import jax.numpy as jnp
from jax.experimental import pallas as pl
from jax.experimental.pallas import tpu as pltpu

EPS = 1e-5


# ---------------------------------------------------------------------------
# Kernel
# ---------------------------------------------------------------------------
def _bottleneck_kernel(x_ref, w1_ref, b1_ref, w2_ref, b2_ref, w3_ref, b3_ref,
                       out_ref, pad_ref, slab_ref):
    """One batch element, NHWC layout.

    x_ref    : (1, H, W, Cin)  f32   input tile (also the residual)
    w1_ref   : (Cin, P)        bf16  conv1 1x1 weight, BN1 scale folded in
    b1_ref   : (1, P)          f32   BN1 bias
    w2_ref   : (9*P, P)        bf16  conv2 3x3 weight (im2col layout), BN2 scale folded
    b2_ref   : (1, P)          f32   BN2 bias
    w3_ref   : (P, Cout)       bf16  conv3 1x1 weight, BN3 scale folded in
    b3_ref   : (1, Cout)       f32   BN3 bias
    out_ref  : (1, H, W, Cout) f32
    pad_ref  : (H+2, W+2, P)   bf16  VMEM scratch: zero-padded conv2 input
    slab_ref : (H*W, 9*P)      bf16  VMEM scratch: im2col patch slab
    """
    x = x_ref[0]                                   # (H, W, Cin) f32
    H, W, Cin = x.shape
    P = w1_ref.shape[1]
    Cout = w3_ref.shape[1]
    xf = x.reshape(H * W, Cin)                     # residual kept in f32

    # pad_ref persists across grid steps and its interior is fully rewritten
    # every iteration -> only the zero border needs initializing once.
    @pl.when(pl.program_id(0) == 0)
    def _():
        pad_ref[...] = jnp.zeros_like(pad_ref)

    # ---- conv1 (1x1) + bn1 + relu  (bf16 MXU inputs, f32 accumulation) ----
    t1 = jnp.dot(xf.astype(jnp.bfloat16), w1_ref[...],
                 preferred_element_type=jnp.float32)
    t1 = jnp.maximum(t1 + b1_ref[...], 0.0)        # (H*W, P) f32

    # ---- conv2 (3x3, stride=1, pad=1) as ONE im2col matmul ----------------
    # Write the interior of the padded buffer, gather the 9 shifted windows
    # into a (H*W, 9*P) slab, contract against (9*P, P) in one big-K MXU dot.
    pad_ref[1:H + 1, 1:W + 1, :] = t1.reshape(H, W, P).astype(jnp.bfloat16)
    for kh in range(3):
        for kw in range(3):
            tap = kh * 3 + kw
            slab_ref[:, tap * P:(tap + 1) * P] = (
                pad_ref[kh:kh + H, kw:kw + W, :].reshape(H * W, P))
    t2 = jnp.dot(slab_ref[...], w2_ref[...],
                 preferred_element_type=jnp.float32)
    t2 = jnp.maximum(t2 + b2_ref[...], 0.0)        # (H*W, P) f32

    # ---- conv3 (1x1) + bn3 + residual add + relu --------------------------
    t3 = jnp.dot(t2.astype(jnp.bfloat16), w3_ref[...],
                 preferred_element_type=jnp.float32)
    out = jnp.maximum(t3 + b3_ref[...] + xf, 0.0)  # residual add in f32
    out_ref[0] = out.reshape(H, W, Cout).astype(out_ref.dtype)


# ---------------------------------------------------------------------------
# Weight / BN preparation (done once at trace time, outside the kernel)
# ---------------------------------------------------------------------------
def _fold_bn(gamma, beta, mean, var):
    s = gamma / jnp.sqrt(var + EPS)
    b = beta - mean * s
    return s.astype(jnp.float32), b.astype(jnp.float32)


def _prepare_weights(params):
    """Fold BN scales into the conv weights; bf16-cast the MXU operands."""
    s1, b1 = _fold_bn(*params["bn1"])
    s2, b2 = _fold_bn(*params["bn2"])
    s3, b3 = _fold_bn(*params["bn3"])

    # conv1: OIHW (P, Cin, 1, 1) -> (Cin, P); scale output channels.
    w1 = jnp.transpose(params["w1"][:, :, 0, 0], (1, 0)) * s1[None, :]
    P = w1.shape[1]
    # conv2: OIHW (P, P, 3, 3) -> (kh, kw, Cin, Cout) -> (9*P, P) im2col layout.
    w2 = jnp.transpose(params["w2"], (2, 3, 1, 0)).reshape(9 * P, P) * s2[None, :]
    # conv3: OIHW (Cout, P, 1, 1) -> (P, Cout).
    w3 = jnp.transpose(params["w3"][:, :, 0, 0], (1, 0)) * s3[None, :]

    return (w1.astype(jnp.bfloat16), b1.reshape(1, -1),
            w2.astype(jnp.bfloat16), b2.reshape(1, -1),
            w3.astype(jnp.bfloat16), b3.reshape(1, -1))


# ---------------------------------------------------------------------------
# Forward wrappers
# ---------------------------------------------------------------------------
def bottleneck_forward_nhwc(x_nhwc, params):
    """x_nhwc: (N, H, W, Cin) float32. Returns (N, H, W, Cin). NHWC end-to-end."""
    x = x_nhwc.astype(jnp.float32)
    N, H, W, Cin = x.shape
    w1, b1, w2, b2, w3, b3 = _prepare_weights(params)
    P = w1.shape[1]
    Cout = w3.shape[1]
    assert Cout == Cin, "identity shortcut requires inplanes == planes * 4"

    # Size the scoped-VMEM budget from the actual per-step footprint
    # (v5e default scoped limit is 16 MiB; v7x physical is 64 MiB).
    tile_bytes = (2 * (H * W * Cin * 4 + H * W * Cout * 4)   # in/out, double-buffered
                  + (H + 2) * (W + 2) * P * 2                # padded scratch (bf16)
                  + H * W * 9 * P * 2                        # im2col slab (bf16)
                  + (Cin * P + 9 * P * P + P * Cout) * 2     # weights (bf16)
                  + (2 * P + Cout) * 4)                      # biases (f32)
    vmem_limit = int(min(64 * 1024 * 1024,
                         max(32 * 1024 * 1024, 2 * tile_bytes)))

    out = pl.pallas_call(
        _bottleneck_kernel,
        out_shape=jax.ShapeDtypeStruct((N, H, W, Cout), jnp.float32),
        grid=(N,),
        in_specs=[
            pl.BlockSpec((1, H, W, Cin), lambda n: (n, 0, 0, 0)),
            pl.BlockSpec((Cin, P), lambda n: (0, 0)),
            pl.BlockSpec((1, P), lambda n: (0, 0)),
            pl.BlockSpec((9 * P, P), lambda n: (0, 0)),
            pl.BlockSpec((1, P), lambda n: (0, 0)),
            pl.BlockSpec((P, Cout), lambda n: (0, 0)),
            pl.BlockSpec((1, Cout), lambda n: (0, 0)),
        ],
        out_specs=pl.BlockSpec((1, H, W, Cout), lambda n: (n, 0, 0, 0)),
        scratch_shapes=[
            pltpu.VMEM((H + 2, W + 2, P), jnp.bfloat16),   # padded conv2 input
            pltpu.VMEM((H * W, 9 * P), jnp.bfloat16),      # im2col slab
        ],
        compiler_params=pltpu.CompilerParams(
            dimension_semantics=("parallel",),
            vmem_limit_bytes=vmem_limit),
    )(x, w1, b1, w2, b2, w3, b3)
    return out


def bottleneck_forward(x_nchw, params):
    """PyTorch-layout wrapper: x (N, Cin, H, W) -> (N, Cin, H, W)."""
    # TODO(synk): in a full ResNet keep activations NHWC end-to-end; these two
    # transposes are an extra HBM round trip per block.
    x = jnp.transpose(x_nchw, (0, 2, 3, 1))
    out = bottleneck_forward_nhwc(x, params)
    return jnp.transpose(out, (0, 3, 1, 2))


# ---------------------------------------------------------------------------
# References for correctness checking
# ---------------------------------------------------------------------------
def _ref_forward(x_nchw, params):
    """Full-f32 reference with PyTorch semantics (NHWC convs via lax)."""
    def conv(x, w_oihw, pad):
        w = jnp.transpose(w_oihw, (2, 3, 1, 0))                 # HWIO
        return jax.lax.conv_general_dilated(
            x, w, (1, 1), [(pad, pad), (pad, pad)],
            dimension_numbers=("NHWC", "HWIO", "NHWC"))

    def bn(x, gamma, beta, mean, var):
        return (x - mean) / jnp.sqrt(var + EPS) * gamma + beta

    x = jnp.transpose(x_nchw, (0, 2, 3, 1))
    out = jax.nn.relu(bn(conv(x, params["w1"], 0), *params["bn1"]))
    out = jax.nn.relu(bn(conv(out, params["w2"], 1), *params["bn2"]))
    out = bn(conv(out, params["w3"], 0), *params["bn3"])
    out = jax.nn.relu(out + x)
    return jnp.transpose(out, (0, 3, 1, 2))


def _bf16_ref_forward(x_nchw, params):
    """Reference that mirrors the kernel's arithmetic exactly: BN scales folded
    into weights, MXU inputs rounded to bf16, accumulation / bias / residual
    in f32."""
    w1, b1, w2, b2, w3, b3 = _prepare_weights(params)
    f32 = lambda a: a.astype(jnp.float32)
    x = jnp.transpose(x_nchw, (0, 2, 3, 1)).astype(jnp.float32)   # NHWC
    N, H, W, Cin = x.shape
    P = w1.shape[1]
    xf = x.reshape(N, H * W, Cin)

    t1 = jnp.einsum("nkc,cp->nkp", f32(xf.astype(jnp.bfloat16)), f32(w1))
    t1 = jax.nn.relu(t1 + b1)
    tp = jnp.pad(t1.reshape(N, H, W, P).astype(jnp.bfloat16),
                 ((0, 0), (1, 1), (1, 1), (0, 0)))
    slab = jnp.concatenate(
        [tp[:, kh:kh + H, kw:kw + W, :].reshape(N, H * W, P)
         for kh in range(3) for kw in range(3)], axis=-1)
    t2 = jnp.einsum("nkc,cp->nkp", f32(slab), f32(w2))
    t2 = jax.nn.relu(t2 + b2)
    t3 = jnp.einsum("nkp,pc->nkc", f32(t2.astype(jnp.bfloat16)), f32(w3))
    out = jax.nn.relu(t3 + b3 + xf)
    return jnp.transpose(out.reshape(N, H, W, Cin), (0, 3, 1, 2))


def make_params(key, inplanes, planes):
    ks = jax.random.split(key, 16)

    def bn_params(k, c):
        k1, k2, k3, k4 = jax.random.split(k, 4)
        gamma = 1.0 + 0.1 * jax.random.normal(k1, (c,), jnp.float32)
        beta = 0.1 * jax.random.normal(k2, (c,), jnp.float32)
        mean = 0.1 * jax.random.normal(k3, (c,), jnp.float32)
        var = 0.5 + jnp.abs(jax.random.normal(k4, (c,), jnp.float32))
        return (gamma, beta, mean, var)

    return {
        "w1": 0.1 * jax.random.normal(ks[0], (planes, inplanes, 1, 1), jnp.float32),
        "w2": 0.1 * jax.random.normal(ks[1], (planes, planes, 3, 3), jnp.float32),
        "w3": 0.1 * jax.random.normal(ks[2], (planes * 4, planes, 1, 1), jnp.float32),
        "bn1": bn_params(ks[3], planes),
        "bn2": bn_params(ks[4], planes),
        "bn3": bn_params(ks[5], planes * 4),
    }


if __name__ == "__main__":
    key = jax.random.PRNGKey(0)
    k_x, k_p = jax.random.split(key)

    planes = 16
    inplanes = planes * 4          # 64 (identity-shortcut Bottleneck)
    N, H, W = 2, 16, 16

    x = jax.random.normal(k_x, (N, inplanes, H, W), jnp.float32)
    params = make_params(k_p, inplanes, planes)

    out = jax.block_until_ready(bottleneck_forward(x, params))
    assert out.shape == (N, inplanes, H, W)

    # Tight check against a reference that mirrors the kernel's bf16-input /
    # f32-accumulation arithmetic.
    ref_bf16 = _bf16_ref_forward(x, params)
    err_bf16 = float(jnp.max(jnp.abs(out - ref_bf16)))
    assert err_bf16 < 2e-3, f"bf16-matched ref max abs err {err_bf16}"

    # Loose check against the full-f32 PyTorch-semantics reference (the only
    # difference is bf16 rounding of the MXU inputs).
    ref_f32 = _ref_forward(x, params)
    err_f32 = float(jnp.max(jnp.abs(out - ref_f32)))
    assert err_f32 < 5e-2, f"f32 ref max abs err {err_f32}"

    print("KERNEL_OK")
</pallas_src>

<mosaic_0001>
module attributes {stable_mosaic.version = 11 : i64} {
  func.func @_bottleneck_kernel(%arg0: i32, %arg1: memref<1x16x16x64xf32, #tpu.memory_space<vmem>>, %arg2: memref<64x16xbf16, #tpu.memory_space<vmem>>, %arg3: memref<1x16xf32, #tpu.memory_space<vmem>>, %arg4: memref<144x16xbf16, #tpu.memory_space<vmem>>, %arg5: memref<1x16xf32, #tpu.memory_space<vmem>>, %arg6: memref<16x64xbf16, #tpu.memory_space<vmem>>, %arg7: memref<1x64xf32, #tpu.memory_space<vmem>>, %arg8: memref<1x16x16x64xf32, #tpu.memory_space<vmem>>, %arg9: memref<18x18x16xbf16, #tpu.memory_space<vmem>>, %arg10: memref<256x144xbf16, #tpu.memory_space<vmem>>) attributes {dimension_semantics = [#tpu.dimension_semantics<parallel>], iteration_bounds = array<i64: 2>, scalar_prefetch = 0 : i64, scratch_operands = 2 : i64, tpu.core_type = #tpu.core_type<tc>, window_params = [{transform_indices = @transform_0, window_bounds = array<i64: 1, 16, 16, 64>}, {pipeline_mode = #tpu.pipeline_mode<synchronous>, transform_indices = @transform_1, window_bounds = array<i64: 64, 16>}, {pipeline_mode = #tpu.pipeline_mode<synchronous>, transform_indices = @transform_2, window_bounds = array<i64: 1, 16>}, {pipeline_mode = #tpu.pipeline_mode<synchronous>, transform_indices = @transform_3, window_bounds = array<i64: 144, 16>}, {pipeline_mode = #tpu.pipeline_mode<synchronous>, transform_indices = @transform_4, window_bounds = array<i64: 1, 16>}, {pipeline_mode = #tpu.pipeline_mode<synchronous>, transform_indices = @transform_5, window_bounds = array<i64: 16, 64>}, {pipeline_mode = #tpu.pipeline_mode<synchronous>, transform_indices = @transform_6, window_bounds = array<i64: 1, 64>}, {transform_indices = @transform_7, window_bounds = array<i64: 1, 16, 16, 64>}]} {
    %c0 = arith.constant 0 : index
    %c0_0 = arith.constant 0 : index
    %c0_1 = arith.constant 0 : index
    %c0_2 = arith.constant 0 : index
    %0 = vector.load %arg1[%c0, %c0_0, %c0_1, %c0_2] : memref<1x16x16x64xf32, #tpu.memory_space<vmem>>, vector<1x16x16x64xf32>
    %1 = vector.shape_cast %0 : vector<1x16x16x64xf32> to vector<16x16x64xf32>
    %2 = vector.shape_cast %1 : vector<16x16x64xf32> to vector<256x64xf32>
    %c0_i32 = arith.constant 0 : i32
    %3 = arith.cmpi eq, %arg0, %c0_i32 : i32
    %4 = arith.extui %3 : i1 to i32
    %c0_i32_3 = arith.constant 0 : i32
    %5 = arith.cmpi ne, %4, %c0_i32_3 : i32
    scf.if %5 {
      %cst_65 = arith.constant 0.000000e+00 : bf16
      %65 = vector.broadcast %cst_65 : bf16 to vector<18x18x16xbf16>
      %c0_66 = arith.constant 0 : index
      %c0_67 = arith.constant 0 : index
      %c0_68 = arith.constant 0 : index
      %66 = vector.load %arg9[%c0_66, %c0_67, %c0_68] : memref<18x18x16xbf16, #tpu.memory_space<vmem>>, vector<18x18x16xbf16>
      tpu.vector_store %arg9[%c0_66, %c0_67, %c0_68], %65 {strides = array<i32>} : memref<18x18x16xbf16, #tpu.memory_space<vmem>>, vector<18x18x16xbf16>,
    } else {
    }
    %6 = arith.truncf %2 : vector<256x64xf32> to vector<256x64xbf16>
    %c0_4 = arith.constant 0 : index
    %c0_5 = arith.constant 0 : index
    %7 = vector.load %arg2[%c0_4, %c0_5] : memref<64x16xbf16, #tpu.memory_space<vmem>>, vector<64x16xbf16>
    %cst = arith.constant dense<0.000000e+00> : vector<256x16xf32>
    %8 = tpu.matmul %6, %7, %cst {dimension_numbers = #tpu.dot_dimension_numbers<[1], [0], [0], [1], [0, 0, 1, 1], [], []>} : vector<256x64xbf16>, vector<64x16xbf16>, vector<256x16xf32> -> vector<256x16xf32>
    %c0_6 = arith.constant 0 : index
    %c0_7 = arith.constant 0 : index
    %9 = vector.load %arg3[%c0_6, %c0_7] : memref<1x16xf32, #tpu.memory_space<vmem>>, vector<1x16xf32>
    %10 = vector.broadcast %9 : vector<1x16xf32> to vector<256x16xf32>
    %11 = arith.addf %8, %10 : vector<256x16xf32>
    %cst_8 = arith.constant 0.000000e+00 : f32
    %12 = vector.broadcast %cst_8 : f32 to vector<256x16xf32>
    %13 = arith.maximumf %11, %12 : vector<256x16xf32>
    %14 = vector.shape_cast %13 : vector<256x16xf32> to vector<16x16x16xf32>
    %15 = arith.truncf %14 : vector<16x16x16xf32> to vector<16x16x16xbf16>
    %c1 = arith.constant 1 : index
    %c1_9 = arith.constant 1 : index
    %c0_10 = arith.constant 0 : index
    %16 = vector.load %arg9[%c1, %c1_9, %c0_10] : memref<18x18x16xbf16, #tpu.memory_space<vmem>>, vector<16x16x16xbf16>
    tpu.vector_store %arg9[%c1, %c1_9, %c0_10], %15 {strides = array<i32>} : memref<18x18x16xbf16, #tpu.memory_space<vmem>>, vector<16x16x16xbf16>,
    %c0_11 = arith.constant 0 : index
    %c0_12 = arith.constant 0 : index
    %c0_13 = arith.constant 0 : index
    %17 = vector.load %arg9[%c0_11, %c0_12, %c0_13] : memref<18x18x16xbf16, #tpu.memory_space<vmem>>, vector<16x16x16xbf16>
    %18 = vector.shape_cast %17 : vector<16x16x16xbf16> to vector<256x16xbf16>
    %c0_14 = arith.constant 0 : index
    %c0_15 = arith.constant 0 : index
    %19 = vector.load %arg10[%c0_14, %c0_15] : memref<256x144xbf16, #tpu.memory_space<vmem>>, vector<256x16xbf16>
    tpu.vector_store %arg10[%c0_14, %c0_15], %18 {strides = array<i32>} : memref<256x144xbf16, #tpu.memory_space<vmem>>, vector<256x16xbf16>,
    %c0_16 = arith.constant 0 : index
    %c1_17 = arith.constant 1 : index
    %c0_18 = arith.constant 0 : index
    %20 = vector.load %arg9[%c0_16, %c1_17, %c0_18] : memref<18x18x16xbf16, #tpu.memory_space<vmem>>, vector<16x16x16xbf16>
    %21 = vector.shape_cast %20 : vector<16x16x16xbf16> to vector<256x16xbf16>
    %c0_19 = arith.constant 0 : index
    %c16 = arith.constant 16 : index
    %22 = vector.load %arg10[%c0_19, %c16] : memref<256x144xbf16, #tpu.memory_space<vmem>>, vector<256x16xbf16>
    tpu.vector_store %arg10[%c0_19, %c16], %21 {strides = array<i32>} : memref<256x144xbf16, #tpu.memory_space<vmem>>, vector<256x16xbf16>,
    %c0_20 = arith.constant 0 : index
    %c2 = arith.constant 2 : index
    %c0_21 = arith.constant 0 : index
    %23 = vector.load %arg9[%c0_20, %c2, %c0_21] : memref<18x18x16xbf16, #tpu.memory_space<vmem>>, vector<16x16x16xbf16>
    %24 = vector.shape_cast %23 : vector<16x16x16xbf16> to vector<256x16xbf16>
    %c0_22 = arith.constant 0 : index
    %c32 = arith.constant 32 : index
    %25 = vector.load %arg10[%c0_22, %c32] : memref<256x144xbf16, #tpu.memory_space<vmem>>, vector<256x16xbf16>
    tpu.vector_store %arg10[%c0_22, %c32], %24 {strides = array<i32>} : memref<256x144xbf16, #tpu.memory_space<vmem>>, vector<256x16xbf16>,
    %c1_23 = arith.constant 1 : index
    %c0_24 = arith.constant 0 : index
    %c0_25 = arith.constant 0 : index
    %26 = vector.load %arg9[%c1_23, %c0_24, %c0_25] : memref<18x18x16xbf16, #tpu.memory_space<vmem>>, vector<16x16x16xbf16>
    %27 = vector.shape_cast %26 : vector<16x16x16xbf16> to vector<256x16xbf16>
    %c0_26 = arith.constant 0 : index
    %c48 = arith.constant 48 : index
    %28 = vector.load %arg10[%c0_26, %c48] : memref<256x144xbf16, #tpu.memory_space<vmem>>, vector<256x16xbf16>
    tpu.vector_store %arg10[%c0_26, %c48], %27 {strides = array<i32>} : memref<256x144xbf16, #tpu.memory_space<vmem>>, vector<256x16xbf16>,
    %c1_27 = arith.constant 1 : index
    %c1_28 = arith.constant 1 : index
    %c0_29 = arith.constant 0 : index
    %29 = vector.load %arg9[%c1_27, %c1_28, %c0_29] : memref<18x18x16xbf16, #tpu.memory_space<vmem>>, vector<16x16x16xbf16>
    %30 = vector.shape_cast %29 : vector<16x16x16xbf16> to vector<256x16xbf16>
    %c0_30 = arith.constant 0 : index
    %c64 = arith.constant 64 : index
    %31 = vector.load %arg10[%c0_30, %c64] : memref<256x144xbf16, #tpu.memory_space<vmem>>, vector<256x16xbf16>
    tpu.vector_store %arg10[%c0_30, %c64], %30 {strides = array<i32>} : memref<256x144xbf16, #tpu.memory_space<vmem>>, vector<256x16xbf16>,
    %c1_31 = arith.constant 1 : index
    %c2_32 = arith.constant 2 : index
    %c0_33 = arith.constant 0 : index
    %32 = vector.load %arg9[%c1_31, %c2_32, %c0_33] : memref<18x18x16xbf16, #tpu.memory_space<vmem>>, vector<16x16x16xbf16>
    %33 = vector.shape_cast %32 : vector<16x16x16xbf16> to vector<256x16xbf16>
    %c0_34 = arith.constant 0 : index
    %c80 = arith.constant 80 : index
    %34 = vector.load %arg10[%c0_34, %c80] : memref<256x144xbf16, #tpu.memory_space<vmem>>, vector<256x16xbf16>
    tpu.vector_store %arg10[%c0_34, %c80], %33 {strides = array<i32>} : memref<256x144xbf16, #tpu.memory_space<vmem>>, vector<256x16xbf16>,
    %c2_35 = arith.constant 2 : index
    %c0_36 = arith.constant 0 : index
    %c0_37 = arith.constant 0 : index
    %35 = vector.load %arg9[%c2_35, %c0_36, %c0_37] : memref<18x18x16xbf16, #tpu.memory_space<vmem>>, vector<16x16x16xbf16>
    %36 = vector.shape_cast %35 : vector<16x16x16xbf16> to vector<256x16xbf16>
    %c0_38 = arith.constant 0 : index
    %c96 = arith.constant 96 : index
    %37 = vector.load %arg10[%c0_38, %c96] : memref<256x144xbf16, #tpu.memory_space<vmem>>, vector<256x16xbf16>
    tpu.vector_store %arg10[%c0_38, %c96], %36 {strides = array<i32>} : memref<256x144xbf16, #tpu.memory_space<vmem>>, vector<256x16xbf16>,
    %c2_39 = arith.constant 2 : index
    %c1_40 = arith.constant 1 : index
    %c0_41 = arith.constant 0 : index
    %38 = vector.load %arg9[%c2_39, %c1_40, %c0_41] : memref<18x18x16xbf16, #tpu.memory_space<vmem>>, vector<16x16x16xbf16>
    %39 = vector.shape_cast %38 : vector<16x16x16xbf16> to vector<256x16xbf16>
    %c0_42 = arith.constant 0 : index
    %c112 = arith.constant 112 : index
    %40 = vector.load %arg10[%c0_42, %c112] : memref<256x144xbf16, #tpu.memory_space<vmem>>, vector<256x16xbf16>
    tpu.vector_store %arg10[%c0_42, %c112], %39 {strides = array<i32>} : memref<256x144xbf16, #tpu.memory_space<vmem>>, vector<256x16xbf16>,
    %c2_43 = arith.constant 2 : index
    %c2_44 = arith.constant 2 : index
    %c0_45 = arith.constant 0 : index
    %41 = vector.load %arg9[%c2_43, %c2_44, %c0_45] : memref<18x18x16xbf16, #tpu.memory_space<vmem>>, vector<16x16x16xbf16>
    %42 = vector.shape_cast %41 : vector<16x16x16xbf16> to vector<256x16xbf16>
    %c0_46 = arith.constant 0 : index
    %c128 = arith.constant 128 : index
    %43 = vector.load %arg10[%c0_46, %c128] : memref<256x144xbf16, #tpu.memory_space<vmem>>, vector<256x16xbf16>
    tpu.vector_store %arg10[%c0_46, %c128], %42 {strides = array<i32>} : memref<256x144xbf16, #tpu.memory_space<vmem>>, vector<256x16xbf16>,
    %c0_47 = arith.constant 0 : index
    %c0_48 = arith.constant 0 : index
    %44 = vector.load %arg10[%c0_47, %c0_48] : memref<256x144xbf16, #tpu.memory_space<vmem>>, vector<256x144xbf16>
    %c0_49 = arith.constant 0 : index
    %c0_50 = arith.constant 0 : index
    %45 = vector.load %arg4[%c0_49, %c0_50] : memref<144x16xbf16, #tpu.memory_space<vmem>>, vector<144x16xbf16>
    %cst_51 = arith.constant dense<0.000000e+00> : vector<256x16xf32>
    %46 = tpu.matmul %44, %45, %cst_51 {dimension_numbers = #tpu.dot_dimension_numbers<[1], [0], [0], [1], [0, 0, 1, 1], [], []>} : vector<256x144xbf16>, vector<144x16xbf16>, vector<256x16xf32> -> vector<256x16xf32>
    %c0_52 = arith.constant 0 : index
    %c0_53 = arith.constant 0 : index
    %47 = vector.load %arg5[%c0_52, %c0_53] : memref<1x16xf32, #tpu.memory_space<vmem>>, vector<1x16xf32>
    %48 = vector.broadcast %47 : vector<1x16xf32> to vector<256x16xf32>
    %49 = arith.addf %46, %48 : vector<256x16xf32>
    %cst_54 = arith.constant 0.000000e+00 : f32
    %50 = vector.broadcast %cst_54 : f32 to vector<256x16xf32>
    %51 = arith.maximumf %49, %50 : vector<256x16xf32>
    %52 = arith.truncf %51 : vector<256x16xf32> to vector<256x16xbf16>
    %c0_55 = arith.constant 0 : index
    %c0_56 = arith.constant 0 : index
    %53 = vector.load %arg6[%c0_55, %c0_56] : memref<16x64xbf16, #tpu.memory_space<vmem>>, vector<16x64xbf16>
    %cst_57 = arith.constant dense<0.000000e+00> : vector<256x64xf32>
    %54 = tpu.matmul %52, %53, %cst_57 {dimension_numbers = #tpu.dot_dimension_numbers<[1], [0], [0], [1], [0, 0, 1, 1], [], []>} : vector<256x16xbf16>, vector<16x64xbf16>, vector<256x64xf32> -> vector<256x64xf32>
    %c0_58 = arith.constant 0 : index
    %c0_59 = arith.constant 0 : index
    %55 = vector.load %arg7[%c0_58, %c0_59] : memref<1x64xf32, #tpu.memory_space<vmem>>, vector<1x64xf32>
    %56 = vector.broadcast %55 : vector<1x64xf32> to vector<256x64xf32>
    %57 = arith.addf %54, %56 : vector<256x64xf32>
    %58 = arith.addf %57, %2 : vector<256x64xf32>
    %cst_60 = arith.constant 0.000000e+00 : f32
    %59 = vector.broadcast %cst_60 : f32 to vector<256x64xf32>
    %60 = arith.maximumf %58, %59 : vector<256x64xf32>
    %61 = vector.shape_cast %60 : vector<256x64xf32> to vector<16x16x64xf32>
    %c0_61 = arith.constant 0 : index
    %c0_62 = arith.constant 0 : index
    %c0_63 = arith.constant 0 : index
    %c0_64 = arith.constant 0 : index
    %62 = vector.load %arg8[%c0_61, %c0_62, %c0_63, %c0_64] : memref<1x16x16x64xf32, #tpu.memory_space<vmem>>, vector<1x16x16x64xf32>
    %63 = vector.shape_cast %62 : vector<1x16x16x64xf32> to vector<16x16x64xf32>
    %64 = vector.shape_cast %61 : vector<16x16x64xf32> to vector<1x16x16x64xf32>
    tpu.vector_store %arg8[%c0_61, %c0_62, %c0_63, %c0_64], %64 {strides = array<i32>} : memref<1x16x16x64xf32, #tpu.memory_space<vmem>>, vector<1x16x16x64xf32>,
    return
  }
  func.func @transform_0(%arg0: i32) -> (i32, i32, i32, i32) {
    %c0_i32 = arith.constant 0 : i32
    %c0_i32_0 = arith.constant 0 : i32
    %c0_i32_1 = arith.constant 0 : i32
    %c0_i32_2 = arith.constant 0 : i32
    return %arg0, %c0_i32, %c0_i32_0, %c0_i32_1 : i32, i32, i32, i32
  }
  func.func @transform_1(%arg0: i32) -> (i32, i32) {
    %c0_i32 = arith.constant 0 : i32
    %c0_i32_0 = arith.constant 0 : i32
    %c0_i32_1 = arith.constant 0 : i32
    return %c0_i32, %c0_i32_0 : i32, i32
  }
  func.func @transform_2(%arg0: i32) -> (i32, i32) {
    %c0_i32 = arith.constant 0 : i32
    %c0_i32_0 = arith.constant 0 : i32
    %c0_i32_1 = arith.constant 0 : i32
    return %c0_i32, %c0_i32_0 : i32, i32
  }
  func.func @transform_3(%arg0: i32) -> (i32, i32) {
    %c0_i32 = arith.constant 0 : i32
    %c0_i32_0 = arith.constant 0 : i32
    %c0_i32_1 = arith.constant 0 : i32
    return %c0_i32, %c0_i32_0 : i32, i32
  }
  func.func @transform_4(%arg0: i32) -> (i32, i32) {
    %c0_i32 = arith.constant 0 : i32
    %c0_i32_0 = arith.constant 0 : i32
    %c0_i32_1 = arith.constant 0 : i32
    return %c0_i32, %c0_i32_0 : i32, i32
  }
  func.func @transform_5(%arg0: i32) -> (i32, i32) {
    %c0_i32 = arith.constant 0 : i32
    %c0_i32_0 = arith.constant 0 : i32
    %c0_i32_1 = arith.constant 0 : i32
    return %c0_i32, %c0_i32_0 : i32, i32
  }
  func.func @transform_6(%arg0: i32) -> (i32, i32) {
    %c0_i32 = arith.constant 0 : i32
    %c0_i32_0 = arith.constant 0 : i32
    %c0_i32_1 = arith.constant 0 : i32
    return %c0_i32, %c0_i32_0 : i32, i32
  }
  func.func @transform_7(%arg0: i32) -> (i32, i32, i32, i32) {
    %c0_i32 = arith.constant 0 : i32
    %c0_i32_0 = arith.constant 0 : i32
    %c0_i32_1 = arith.constant 0 : i32
    %c0_i32_2 = arith.constant 0 : i32
    return %arg0, %c0_i32, %c0_i32_0, %c0_i32_1 : i32, i32, i32, i32
  }
}

</mosaic_0001>

<llo_original>
// kernel: tpu_custom_call.1
$region0: #{tpu_custom_call.1}
  #allocation0 [shape = 'u32[]', space=smem, size = 0x4, offset = 0x4, fixed_abs, tag = 'smem constant byte address 0x4 - core index']
  #allocation1 [shape = 'u32[144,128]{1,0:T(1,128)}', space=vmem, size = 0x12000, scoped, tag = 'internal scratch']
  #allocation2 [shape = 'bf16[18,18,16]{2,1,0:T(8,128)(2,1)}', space=vmem, size = 0x1b000, scoped, tag = 'scratch operand']
  #allocation3 [shape = 'bf16[256,144]{1,0:T(16,128)(2,1)}', space=vmem, size = 0x20000, scoped, tag = 'scratch operand']
  %s0 = inlined_call_operand.hbm [shape: f32[2,16,16,64], index: 0, kind: input, shape index: {}]
  %s1 = inlined_call_operand.vmem [shape: bf16[64,16], index: 1, kind: input, shape index: {}]
  %s2 = inlined_call_operand.vmem [shape: f32[1,16], index: 2, kind: input, shape index: {}]
  %s3 = inlined_call_operand.vmem [shape: bf16[144,16], index: 3, kind: input, shape index: {}]
  %s4 = inlined_call_operand.vmem [shape: f32[1,16], index: 4, kind: input, shape index: {}]
  %s5 = inlined_call_operand.vmem [shape: bf16[16,64], index: 5, kind: input, shape index: {}]
  %s6 = inlined_call_operand.vmem [shape: f32[1,64], index: 6, kind: input, shape index: {}]
  %s7 = inlined_call_operand.hbm [shape: f32[2,16,16,64], index: 7, kind: output, shape index: {}]
  %s8 = sld [smem:[#allocation0]]
  $region69: #{tpu_custom_call.1} parent=0
    _
  %s10 = ssub.s32 1, %s8
  %s11 = scalar_select 0, %s10, %s8
  $region1: #{tpu_custom_call.1} parent=0
    #allocation4 [shape = 'u8[262144]{0}', space=vmem, size = 0x40000, scoped, tag = 'input window, operand 0']
    #allocation5 [shape = 's32[2]{0}', space=sflag, size = 0x8, scoped, tag = 'scoped memory for tpu_custom_call.1']
    #allocation6 [shape = 's32[2]{0}', space=sflag, size = 0x8, scoped, tag = 'scoped memory for tpu_custom_call.1']
    #allocation7 [shape = 'u8[262144]{0}', space=vmem, size = 0x40000, scoped, tag = 'output window, operand 0']
    %12 = vsyncpa [#allocation5], 0
    %s13 = scalar_lea.sflag [#allocation5], 1
    %14 = vsyncpa %s13, 0
    %15 = vsyncpa [#allocation6], 0
    %s16 = scalar_lea.sflag [#allocation6], 1
    %17 = vsyncpa %s16, 0
    loop: start=0, step=1, limit=4
    $region2: #{tpu_custom_call.1} parent=1 // loop_pre_header
      _
    $region3: #{tpu_custom_call.1} parent=1 // loop_header
      %s19 = sphi 0, %s23
      %p20 = scmp.ge.s32.totalorder %s19, 4
      %s29 = sphi 0, %s31
      %s32 = sphi 0, %s29
      %s33 = sphi 0, %s32
      %s49 = sphi 0, %s33
      %s53 = sphi 0, %s53
      %s55 = sphi 0, %s53
      %s56 = sphi 0, %s55
      %s70 = sphi 0, %s56
      %s74 = sphi 0, %s74
      %s76 = sphi 0, %s74
      %s77 = sphi 0, %s76
      %s91 = sphi 0, %s77
      %s95 = sphi 0, %s95
      %s97 = sphi 0, %s95
      %s98 = sphi 0, %s97
      %s112 = sphi 0, %s98
      %s116 = sphi 0, %s116
      %s118 = sphi 0, %s116
      %s119 = sphi 0, %s118
      %s133 = sphi 0, %s119
      %s137 = sphi 0, %s137
      %s139 = sphi 0, %s137
      %s140 = sphi 0, %s139
      %s154 = sphi 0, %s140
      %s158 = sphi 0, %s158
      %s160 = sphi 0, %s158
      %s161 = sphi 0, %s160
      %s175 = sphi 0, %s161
      %s181 = sphi 0, %s183
      %s184 = sphi 0, %s181
      %s185 = sphi 0, %s184
      %s201 = sphi 0, %s185
    $region4: #{tpu_custom_call.1} parent=1 // loop_header_branch
      %22 = sbr.rel (%p20) target = $region8
    $region5: #{tpu_custom_call.1} parent=1 // loop_body
      %s24 = ssub.s32 %s19, 1
      %s25 = ssub.s32 %s19, 2
      %s26 = sadd.s32 %s19, 1
      %s27 = ssub.s32 %s19, %s26
      %p28 = scmp.eq.s32.totalorder %s27, 0
      %s30 = sadd.s32 %s29, 1
      %s31 = scalar_select %p28, %s29, %s30
      %p34 = pneg %p28
      %p35 = scmp.eq.s32.totalorder %s19, 1
      %p36 = por %p34, %p35
      %p37 = scmp.ne.s32.totalorder %s29, %s32
      %p38 = scmp.eq.s32.totalorder %s19, 0
      %p39 = por %p37, %p38
      %p40 = scmp.ne.s32.totalorder %s29, %s32
      %p41 = scmp.eq.s32.totalorder %s24, 1
      %p42 = por %p40, %p41
      %p43 = scmp.ne.s32.totalorder %s32, %s33
      %p44 = scmp.eq.s32.totalorder %s24, 0
      %p45 = por %p43, %p44
      %p46 = scmp.ne.s32.totalorder %s32, %s33
      %p47 = scmp.eq.s32.totalorder %s25, 1
      %p48 = por %p46, %p47
      %p50 = scmp.ne.s32.totalorder %s33, %s49
      %p51 = scmp.eq.s32.totalorder %s25, 0
      %p52 = por %p50, %p51
      %s54 = sadd.s32 %s53, 1
      %p57 = scmp.eq.s32.totalorder %s19, 1
      %p58 = scmp.ne.s32.totalorder %s53, %s55
      %p59 = scmp.eq.s32.totalorder %s19, 0
      %p60 = por %p58, %p59
      %p61 = scmp.ne.s32.totalorder %s53, %s55
      %p62 = scmp.eq.s32.totalorder %s24, 1
      %p63 = por %p61, %p62
      %p64 = scmp.ne.s32.totalorder %s55, %s56
      %p65 = scmp.eq.s32.totalorder %s24, 0
      %p66 = por %p64, %p65
      %p67 = scmp.ne.s32.totalorder %s55, %s56
      %p68 = scmp.eq.s32.totalorder %s25, 1
      %p69 = por %p67, %p68
      %p71 = scmp.ne.s32.totalorder %s56, %s70
      %p72 = scmp.eq.s32.totalorder %s25, 0
      %p73 = por %p71, %p72
      %s75 = sadd.s32 %s74, 1
      %p78 = scmp.eq.s32.totalorder %s19, 1
      %p79 = scmp.ne.s32.totalorder %s74, %s76
      %p80 = scmp.eq.s32.totalorder %s19, 0
      %p81 = por %p79, %p80
      %p82 = scmp.ne.s32.totalorder %s74, %s76
      %p83 = scmp.eq.s32.totalorder %s24, 1
      %p84 = por %p82, %p83
      %p85 = scmp.ne.s32.totalorder %s76, %s77
      %p86 = scmp.eq.s32.totalorder %s24, 0
      %p87 = por %p85, %p86
      %p88 = scmp.ne.s32.totalorder %s76, %s77
      %p89 = scmp.eq.s32.totalorder %s25, 1
      %p90 = por %p88, %p89
      %p92 = scmp.ne.s32.totalorder %s77, %s91
      %p93 = scmp.eq.s32.totalorder %s25, 0
      %p94 = por %p92, %p93
      %s96 = sadd.s32 %s95, 1
      %p99 = scmp.eq.s32.totalorder %s19, 1
      %p100 = scmp.ne.s32.totalorder %s95, %s97
      %p101 = scmp.eq.s32.totalorder %s19, 0
      %p102 = por %p100, %p101
      %p103 = scmp.ne.s32.totalorder %s95, %s97
      %p104 = scmp.eq.s32.totalorder %s24, 1
      %p105 = por %p103, %p104
      %p106 = scmp.ne.s32.totalorder %s97, %s98
      %p107 = scmp.eq.s32.totalorder %s24, 0
      %p108 = por %p106, %p107
      %p109 = scmp.ne.s32.totalorder %s97, %s98
      %p110 = scmp.eq.s32.totalorder %s25, 1
      %p111 = por %p109, %p110
      %p113 = scmp.ne.s32.totalorder %s98, %s112
      %p114 = scmp.eq.s32.totalorder %s25, 0
      %p115 = por %p113, %p114
      %s117 = sadd.s32 %s116, 1
      %p120 = scmp.eq.s32.totalorder %s19, 1
      %p121 = scmp.ne.s32.totalorder %s116, %s118
      %p122 = scmp.eq.s32.totalorder %s19, 0
      %p123 = por %p121, %p122
      %p124 = scmp.ne.s32.totalorder %s116, %s118
      %p125 = scmp.eq.s32.totalorder %s24, 1
      %p126 = por %p124, %p125
      %p127 = scmp.ne.s32.totalorder %s118, %s119
      %p128 = scmp.eq.s32.totalorder %s24, 0
      %p129 = por %p127, %p128
      %p130 = scmp.ne.s32.totalorder %s118, %s119
      %p131 = scmp.eq.s32.totalorder %s25, 1
      %p132 = por %p130, %p131
      %p134 = scmp.ne.s32.totalorder %s119, %s133
      %p135 = scmp.eq.s32.totalorder %s25, 0
      %p136 = por %p134, %p135
      %s138 = sadd.s32 %s137, 1
      %p141 = scmp.eq.s32.totalorder %s19, 1
      %p142 = scmp.ne.s32.totalorder %s137, %s139
      %p143 = scmp.eq.s32.totalorder %s19, 0
      %p144 = por %p142, %p143
      %p145 = scmp.ne.s32.totalorder %s137, %s139
      %p146 = scmp.eq.s32.totalorder %s24, 1
      %p147 = por %p145, %p146
      %p148 = scmp.ne.s32.totalorder %s139, %s140
      %p149 = scmp.eq.s32.totalorder %s24, 0
      %p150 = por %p148, %p149
      %p151 = scmp.ne.s32.totalorder %s139, %s140
      %p152 = scmp.eq.s32.totalorder %s25, 1
      %p153 = por %p151, %p152
      %p155 = scmp.ne.s32.totalorder %s140, %s154
      %p156 = scmp.eq.s32.totalorder %s25, 0
      %p157 = por %p155, %p156
      %s159 = sadd.s32 %s158, 1
      %p162 = scmp.eq.s32.totalorder %s19, 1
      %p163 = scmp.ne.s32.totalorder %s158, %s160
      %p164 = scmp.eq.s32.totalorder %s19, 0
      %p165 = por %p163, %p164
      %p166 = scmp.ne.s32.totalorder %s158, %s160
      %p167 = scmp.eq.s32.totalorder %s24, 1
      %p168 = por %p166, %p167
      %p169 = scmp.ne.s32.totalorder %s160, %s161
      %p170 = scmp.eq.s32.totalorder %s24, 0
      %p171 = por %p169, %p170
      %p172 = scmp.ne.s32.totalorder %s160, %s161
      %p173 = scmp.eq.s32.totalorder %s25, 1
      %p174 = por %p172, %p173
      %p176 = scmp.ne.s32.totalorder %s161, %s175
      %p177 = scmp.eq.s32.totalorder %s25, 0
      %p178 = por %p176, %p177
      %s179 = ssub.s32 %s19, %s26
      %p180 = scmp.eq.s32.totalorder %s179, 0
      %s182 = sadd.s32 %s181, 1
      %s183 = scalar_select %p180, %s181, %s182
      %p186 = pneg %p180
      %p187 = scmp.eq.s32.totalorder %s19, 1
      %p188 = por %p186, %p187
      %p189 = scmp.ne.s32.totalorder %s181, %s184
      %p190 = scmp.eq.s32.totalorder %s19, 0
      %p191 = por %p189, %p190
      %p192 = scmp.ne.s32.totalorder %s181, %s184
      %p193 = scmp.eq.s32.totalorder %s24, 1
      %p194 = por %p192, %p193
      %p195 = scmp.ne.s32.totalorder %s184, %s185
      %p196 = scmp.eq.s32.totalorder %s24, 0
      %p197 = por %p195, %p196
      %p198 = scmp.ne.s32.totalorder %s184, %s185
      %p199 = scmp.eq.s32.totalorder %s25, 1
      %p200 = por %p198, %p199
      %p202 = scmp.ne.s32.totalorder %s185, %s201
      %p203 = scmp.eq.s32.totalorder %s25, 0
      %p204 = por %p202, %p203
      %p205 = scmp.le.s32.totalorder 1, %s19
      %p206 = scmp.lt.s32.totalorder %s19, 3
      %p207 = pnand %p205, %p206
      %p208 = pneg %p207
      // Predicated region
      $region9: #{tpu_custom_call.1} parent=5 // pred_check
        _
      $region10: #{tpu_custom_call.1} parent=5 // pred_check_branch
        %210 = sbr.rel (%p207) target = $region12
      $region11: #{tpu_custom_call.1} parent=5 // pred_region
        %s211 = ssub.s32 %s19, 1
        // Predicated region
        $region13: #{tpu_custom_call.1} parent=11 // pred_check
          %p212 = pneg %p66
        $region14: #{tpu_custom_call.1} parent=11 // pred_check_branch
          %214 = sbr.rel (%p212) target = $region16
        $region15: #{tpu_custom_call.1} parent=11 // pred_region
          _
        $region16: #{tpu_custom_call.1} parent=11 // pred_fallthru
          _
        // Predicated region
        $region17: #{tpu_custom_call.1} parent=11 // pred_check
          %p215 = pneg %p87
        $region18: #{tpu_custom_call.1} parent=11 // pred_check_branch
          %217 = sbr.rel (%p215) target = $region20
        $region19: #{tpu_custom_call.1} parent=11 // pred_region
          _
        $region20: #{tpu_custom_call.1} parent=11 // pred_fallthru
          _
        // Predicated region
        $region21: #{tpu_custom_call.1} parent=11 // pred_check
          %p218 = pneg %p108
        $region22: #{tpu_custom_call.1} parent=11 // pred_check_branch
          %220 = sbr.rel (%p218) target = $region24
        $region23: #{tpu_custom_call.1} parent=11 // pred_region
          _
        $region24: #{tpu_custom_call.1} parent=11 // pred_fallthru
          _
        // Predicated region
        $region25: #{tpu_custom_call.1} parent=11 // pred_check
          %p221 = pneg %p129
        $region26: #{tpu_custom_call.1} parent=11 // pred_check_branch
          %223 = sbr.rel (%p221) target = $region28
        $region27: #{tpu_custom_call.1} parent=11 // pred_region
          _
        $region28: #{tpu_custom_call.1} parent=11 // pred_fallthru
          _
        // Predicated region
        $region29: #{tpu_custom_call.1} parent=11 // pred_check
          %p224 = pneg %p150
        $region30: #{tpu_custom_call.1} parent=11 // pred_check_branch
          %226 = sbr.rel (%p224) target = $region32
        $region31: #{tpu_custom_call.1} parent=11 // pred_region
          _
        $region32: #{tpu_custom_call.1} parent=11 // pred_fallthru
          _
        // Predicated region
        $region33: #{tpu_custom_call.1} parent=11 // pred_check
          %p227 = pneg %p171
        $region34: #{tpu_custom_call.1} parent=11 // pred_check_branch
          %229 = sbr.rel (%p227) target = $region36
        $region35: #{tpu_custom_call.1} parent=11 // pred_region
          _
        $region36: #{tpu_custom_call.1} parent=11 // pred_fallthru
          _
      $region12: #{tpu_custom_call.1} parent=5 // pred_fallthru
        _
      %p230 = scmp.lt.s32.totalorder %s19, 2
      // Predicated region
      $region37: #{tpu_custom_call.1} parent=5 // pred_check
        %p231 = pneg %p230
      $region38: #{tpu_custom_call.1} parent=5 // pred_check_branch
        %233 = sbr.rel (%p231) target = $region40
      $region39: #{tpu_custom_call.1} parent=5 // pred_region
        // Predicated region
        $region41: #{tpu_custom_call.1} parent=39 // pred_check
          %p234 = pneg %p39
        $region42: #{tpu_custom_call.1} parent=39 // pred_check_branch
          %236 = sbr.rel (%p234) target = $region44
        $region43: #{tpu_custom_call.1} parent=39 // pred_region
          %s237 = sand.u32 %s29, 1
          %s238 = scalar_lea.sflag [#allocation5], %s237
          %s239 = sand.u32 %s29, 1
          %s240 = smul.addr %s239, 256
          %s241 = scalar_lea.vmem [#allocation4], %s240
          %s243 = ssub.s32 4096, 4096
          %244 = vsyncadd %s238, %s243
          %s245 = smul.addr %s19, 32
          %s246 = smul.addr %s245, 128
          %s247 = scalar_lea.hbm %s0, %s246
          %s248 = sshll.u32 %s241, 4
          %s249 = int_to_ptr.vmem [resolvable:$true] %s248
          %254 = dma.hbm_to_vmem [thread:$0]  %s247, 4096, %s249, %s238, 128, 128, 8
        $region44: #{tpu_custom_call.1} parent=39 // pred_fallthru
          _
      $region40: #{tpu_custom_call.1} parent=5 // pred_fallthru
        _
      %p255 = scmp.le.s32.totalorder 1, %s19
      %p256 = scmp.lt.s32.totalorder %s19, 3
      %p257 = pnand %p255, %p256
      %p258 = pneg %p257
      // Predicated region
      $region45: #{tpu_custom_call.1} parent=5 // pred_check
        _
      $region46: #{tpu_custom_call.1} parent=5 // pred_check_branch
        %260 = sbr.rel (%p257) target = $region48
      $region47: #{tpu_custom_call.1} parent=5 // pred_region
        %s261 = ssub.s32 %s19, 1
        %s262 = sand.u32 %s32, 1
        %s263 = scalar_lea.sflag [#allocation5], %s262
        %s264 = sand.u32 %s32, 1
        %s265 = smul.addr %s264, 256
        %s266 = scalar_lea.vmem [#allocation4], %s265
        // Predicated region
        $region49: #{tpu_custom_call.1} parent=47 // pred_check
          %p267 = pneg %p45
        $region50: #{tpu_custom_call.1} parent=47 // pred_check_branch
          %269 = sbr.rel (%p267) target = $region52
        $region51: #{tpu_custom_call.1} parent=47 // pred_region
          %270 = dma.done %s263, 4096
        $region52: #{tpu_custom_call.1} parent=47 // pred_fallthru
          _
        %s271 = sand.u32 %s32, 1
        %s272 = scalar_lea.sflag [#allocation5], %s271
        %s273 = sand.u32 %s32, 1
        %s274 = smul.addr %s273, 256
        %s275 = scalar_lea.vmem [#allocation4], %s274
        %p276 = pneg %p45
        %p277 = pneg %p42
        %p278 = pneg %p66
        %p279 = pneg %p63
        %p280 = pneg %p87
        %p281 = pneg %p84
        %p282 = pneg %p108
        %p283 = pneg %p105
        %p284 = pneg %p129
        %p285 = pneg %p126
        %p286 = pneg %p150
        %p287 = pneg %p147
        %p288 = pneg %p171
        %p289 = pneg %p168
        %p290 = pneg %p197
        %p291 = pneg %p194
        %s292 = sand.u32 %s184, 1
        %s293 = scalar_lea.sflag [#allocation6], %s292
        %s294 = sand.u32 %s184, 1
        %s295 = smul.addr %s294, 256
        %s296 = scalar_lea.vmem [#allocation7], %s295
        %v298 = vld [vmem:[%s266] sm:$0xff]
        %v299 = vld [vmem:[%s266 + $0x8] sm:$0xff]
        %v300 = vld [vmem:[%s266 + $0x10] sm:$0xff]
        %v301 = vld [vmem:[%s266 + $0x18] sm:$0xff]
        %v302 = vld [vmem:[%s266 + $0x20] sm:$0xff]
        %v303 = vld [vmem:[%s266 + $0x28] sm:$0xff]
        %v304 = vld [vmem:[%s266 + $0x30] sm:$0xff]
        %v305 = vld [vmem:[%s266 + $0x38] sm:$0xff]
        %v306 = vld [vmem:[%s266 + $0x40] sm:$0xff]
        %v307 = vld [vmem:[%s266 + $0x48] sm:$0xff]
        %v308 = vld [vmem:[%s266 + $0x50] sm:$0xff]
        %v309 = vld [vmem:[%s266 + $0x58] sm:$0xff]
        %v310 = vld [vmem:[%s266 + $0x60] sm:$0xff]
        %v311 = vld [vmem:[%s266 + $0x68] sm:$0xff]
        %v312 = vld [vmem:[%s266 + $0x70] sm:$0xff]
        %v313 = vld [vmem:[%s266 + $0x78] sm:$0xff]
        %v314 = vld [vmem:[%s266 + $0x80] sm:$0xff]
        %v315 = vld [vmem:[%s266 + $0x88] sm:$0xff]
        %v316 = vld [vmem:[%s266 + $0x90] sm:$0xff]
        %v317 = vld [vmem:[%s266 + $0x98] sm:$0xff]
        %v318 = vld [vmem:[%s266 + $0xa0] sm:$0xff]
        %v319 = vld [vmem:[%s266 + $0xa8] sm:$0xff]
        %v320 = vld [vmem:[%s266 + $0xb0] sm:$0xff]
        %v321 = vld [vmem:[%s266 + $0xb8] sm:$0xff]
        %v322 = vld [vmem:[%s266 + $0xc0] sm:$0xff]
        %v323 = vld [vmem:[%s266 + $0xc8] sm:$0xff]
        %v324 = vld [vmem:[%s266 + $0xd0] sm:$0xff]
        %v325 = vld [vmem:[%s266 + $0xd8] sm:$0xff]
        %v326 = vld [vmem:[%s266 + $0xe0] sm:$0xff]
        %v327 = vld [vmem:[%s266 + $0xe8] sm:$0xff]
        %v328 = vld [vmem:[%s266 + $0xf0] sm:$0xff]
        %v329 = vld [vmem:[%s266 + $0xf8] sm:$0xff]
        %p330 = scmp.eq.s32.totalorder %s24, 0
        // Predicated region
        $region53: #{tpu_custom_call.1} parent=47 // pred_check
          %p331 = pneg %p330
        $region54: #{tpu_custom_call.1} parent=47 // pred_check_branch
          %333 = sbr.rel (%p331) target = $region56
        $region55: #{tpu_custom_call.1} parent=47 // pred_region
          %vm334 = vcmask 125952
          %335 = vst.msk [vmem:[#allocation2] sm:$0xf] %vm334, 0
          %336 = vst.msk [vmem:[#allocation2 + $0x4] sm:$0xf] %vm334, 0
          %vm337 = vcmask 122880
          %338 = vst.msk [vmem:[#allocation2 + $0x8] sm:$0x1] %vm337, 0
          %339 = vst.msk [vmem:[#allocation2 + $0xc] sm:$0xf] %vm334, 0
          %340 = vst.msk [vmem:[#allocation2 + $0x10] sm:$0xf] %vm334, 0
          %341 = vst.msk [vmem:[#allocation2 + $0x14] sm:$0x1] %vm337, 0
          %342 = vst.msk [vmem:[#allocation2 + $0x18] sm:$0xf] %vm334, 0
          %343 = vst.msk [vmem:[#allocation2 + $0x1c] sm:$0xf] %vm334, 0
          %344 = vst.msk [vmem:[#allocation2 + $0x20] sm:$0x1] %vm337, 0
          %345 = vst.msk [vmem:[#allocation2 + $0x24] sm:$0xf] %vm334, 0
          %346 = vst.msk [vmem:[#allocation2 + $0x28] sm:$0xf] %vm334, 0
          %347 = vst.msk [vmem:[#allocation2 + $0x2c] sm:$0x1] %vm337, 0
          %348 = vst.msk [vmem:[#allocation2 + $0x30] sm:$0xf] %vm334, 0
          %349 = vst.msk [vmem:[#allocation2 + $0x34] sm:$0xf] %vm334, 0
          %350 = vst.msk [vmem:[#allocation2 + $0x38] sm:$0x1] %vm337, 0
          %351 = vst.msk [vmem:[#allocation2 + $0x3c] sm:$0xf] %vm334, 0
          %352 = vst.msk [vmem:[#allocation2 + $0x40] sm:$0xf] %vm334, 0
          %353 = vst.msk [vmem:[#allocation2 + $0x44] sm:$0x1] %vm337, 0
          %354 = vst.msk [vmem:[#allocation2 + $0x48] sm:$0xf] %vm334, 0
          %355 = vst.msk [vmem:[#allocation2 + $0x4c] sm:$0xf] %vm334, 0
          %356 = vst.msk [vmem:[#allocation2 + $0x50] sm:$0x1] %vm337, 0
          %357 = vst.msk [vmem:[#allocation2 + $0x54] sm:$0xf] %vm334, 0
          %358 = vst.msk [vmem:[#allocation2 + $0x58] sm:$0xf] %vm334, 0
          %359 = vst.msk [vmem:[#allocation2 + $0x5c] sm:$0x1] %vm337, 0
          %360 = vst.msk [vmem:[#allocation2 + $0x60] sm:$0xf] %vm334, 0
          %361 = vst.msk [vmem:[#allocation2 + $0x64] sm:$0xf] %vm334, 0
          %362 = vst.msk [vmem:[#allocation2 + $0x68] sm:$0x1] %vm337, 0
          %363 = vst.msk [vmem:[#allocation2 + $0x6c] sm:$0xf] %vm334, 0
          %364 = vst.msk [vmem:[#allocation2 + $0x70] sm:$0xf] %vm334, 0
          %365 = vst.msk [vmem:[#allocation2 + $0x74] sm:$0x1] %vm337, 0
          %366 = vst.msk [vmem:[#allocation2 + $0x78] sm:$0xf] %vm334, 0
          %367 = vst.msk [vmem:[#allocation2 + $0x7c] sm:$0xf] %vm334, 0
          %368 = vst.msk [vmem:[#allocation2 + $0x80] sm:$0x1] %vm337, 0
          %369 = vst.msk [vmem:[#allocation2 + $0x84] sm:$0xf] %vm334, 0
          %370 = vst.msk [vmem:[#allocation2 + $0x88] sm:$0xf] %vm334, 0
          %371 = vst.msk [vmem:[#allocation2 + $0x8c] sm:$0x1] %vm337, 0
          %372 = vst.msk [vmem:[#allocation2 + $0x90] sm:$0xf] %vm334, 0
          %373 = vst.msk [vmem:[#allocation2 + $0x94] sm:$0xf] %vm334, 0
          %374 = vst.msk [vmem:[#allocation2 + $0x98] sm:$0x1] %vm337, 0
          %375 = vst.msk [vmem:[#allocation2 + $0x9c] sm:$0xf] %vm334, 0
          %376 = vst.msk [vmem:[#allocation2 + $0xa0] sm:$0xf] %vm334, 0
          %377 = vst.msk [vmem:[#allocation2 + $0xa4] sm:$0x1] %vm337, 0
          %378 = vst.msk [vmem:[#allocation2 + $0xa8] sm:$0xf] %vm334, 0
          %379 = vst.msk [vmem:[#allocation2 + $0xac] sm:$0xf] %vm334, 0
          %380 = vst.msk [vmem:[#allocation2 + $0xb0] sm:$0x1] %vm337, 0
          %381 = vst.msk [vmem:[#allocation2 + $0xb4] sm:$0xf] %vm334, 0
          %382 = vst.msk [vmem:[#allocation2 + $0xb8] sm:$0xf] %vm334, 0
          %383 = vst.msk [vmem:[#allocation2 + $0xbc] sm:$0x1] %vm337, 0
          %384 = vst.msk [vmem:[#allocation2 + $0xc0] sm:$0xf] %vm334, 0
          %385 = vst.msk [vmem:[#allocation2 + $0xc4] sm:$0xf] %vm334, 0
          %386 = vst.msk [vmem:[#allocation2 + $0xc8] sm:$0x1] %vm337, 0
          %387 = vst.msk [vmem:[#allocation2 + $0xcc] sm:$0xf] %vm334, 0
          %388 = vst.msk [vmem:[#allocation2 + $0xd0] sm:$0xf] %vm334, 0
          %389 = vst.msk [vmem:[#allocation2 + $0xd4] sm:$0x1] %vm337, 0
        $region56: #{tpu_custom_call.1} parent=47 // pred_fallthru
          _
        %v390 = vpack.c.bf16 %v299, %v298
        %v391 = vpack.c.bf16 %v301, %v300
        %v392 = vpack.c.bf16 %v303, %v302
        %v393 = vpack.c.bf16 %v305, %v304
        %v394 = vpack.c.bf16 %v307, %v306
        %v395 = vpack.c.bf16 %v309, %v308
        %v396 = vpack.c.bf16 %v311, %v310
        %v397 = vpack.c.bf16 %v313, %v312
        %v398 = vpack.c.bf16 %v315, %v314
        %v399 = vpack.c.bf16 %v317, %v316
        %v400 = vpack.c.bf16 %v319, %v318
        %v401 = vpack.c.bf16 %v321, %v320
        %v402 = vpack.c.bf16 %v323, %v322
        %v403 = vpack.c.bf16 %v325, %v324
        %v404 = vpack.c.bf16 %v327, %v326
        %v405 = vpack.c.bf16 %v329, %v328
        %v406 = vld [vmem:[%s1] sm:$0xf]
        %v407 = vld [vmem:[%s1 + $0x4] sm:$0xf]
        %v408 = vld [vmem:[%s1 + $0x8] sm:$0xf]
        %v409 = vld [vmem:[%s1 + $0xc] sm:$0xf]
        %v410 = vld [vmem:[%s1 + $0x10] sm:$0xf]
        %v411 = vld [vmem:[%s1 + $0x14] sm:$0xf]
        %v412 = vld [vmem:[%s1 + $0x18] sm:$0xf]
        %v413 = vld [vmem:[%s1 + $0x1c] sm:$0xf]
        %v414 = vld [vmem:[%s2] sm:$0x1]
        %v416 = vlaneseq
        %v417 = vshrl.u32 %v416, 7
        %v418 = vsub.s32 0, %v417
        %v419 = vrot.slane %v414, %v418
        %v429 = vunpack.c.l.b16 %v406
        %v430 = vunpack.c.l.b16 %v407
        %v431 = vunpack.c.l.b16 %v408
        %v432 = vunpack.c.l.b16 %v409
        %v433 = vunpack.c.l.b16 %v410
        %v434 = vunpack.c.l.b16 %v411
        %v435 = vunpack.c.l.b16 %v412
        %v436 = vunpack.c.l.b16 %v413
        %v437 = vpack.c.b16 %v430, %v429
        %v438 = vpack.c.b16 %v432, %v431
        %v439 = vpack.c.b16 %v434, %v433
        %v440 = vpack.c.b16 %v436, %v435
        %vm445 = vcmask 523264
        %v447 = vsel %vm445, %v390, 0
        %v450 = vsel %vm445, %v391, 0
        %v453 = vsel %vm445, %v392, 0
        %v456 = vsel %vm445, %v393, 0
        %v459 = vsel %vm445, %v394, 0
        %v462 = vsel %vm445, %v395, 0
        %v465 = vsel %vm445, %v396, 0
        %v468 = vsel %vm445, %v397, 0
        %v471 = vsel %vm445, %v398, 0
        %v474 = vsel %vm445, %v399, 0
        %v477 = vsel %vm445, %v400, 0
        %v480 = vsel %vm445, %v401, 0
        %v483 = vsel %vm445, %v402, 0
        %v486 = vsel %vm445, %v403, 0
        %v489 = vsel %vm445, %v404, 0
        %v492 = vsel %vm445, %v405, 0
        %494 = vmatprep.subr.bf16.mxu0 0
        %495 = vmatpush1.bf16.msra.mxu0 %v437
        %496 = vmatprep.subr.bf16.mxu0 0
        %497 = vmatpush1.bf16.msra.mxu0 %v438
        %498 = vmatprep.subr.bf16.mxu0 0
        %499 = vmatpush1.bf16.msra.mxu0 %v439
        %500 = vmatprep.subr.bf16.mxu0 0
        %501 = vmatpush1.bf16.msra.mxu0 %v440
        %502 = vmatprep.subr.bf16.mxu0 0
        %503 = vmatpush1.bf16.msra.mxu0 0
        %504 = vmatprep.subr.bf16.mxu0 0
        %505 = vmatpush1.bf16.msra.mxu0 0
        %506 = vmatprep.subr.bf16.mxu0 0
        %507 = vmatpush1.bf16.msra.mxu0 0
        %508 = vmatprep.subr.bf16.mxu0 0
        %509 = vmatpush1.bf16.msra.mxu0 0
        %510 = vmatprep.subr.bf16.mxu0 0
        %511 = vmatpush1.bf16.msra.mxu0 0
        %512 = vmatprep.subr.bf16.mxu0 0
        %513 = vmatpush1.bf16.msra.mxu0 0
        %514 = vmatprep.subr.bf16.mxu0 0
        %515 = vmatpush1.bf16.msra.mxu0 0
        %516 = vmatprep.subr.bf16.mxu0 0
        %517 = vmatpush1.bf16.msra.mxu0 0
        %518 = vmatprep.subr.bf16.mxu0 0
        %519 = vmatpush1.bf16.msra.mxu0 0
        %520 = vmatprep.subr.bf16.mxu0 0
        %521 = vmatpush1.bf16.msra.mxu0 0
        %522 = vmatprep.subr.bf16.mxu0 0
        %523 = vmatpush1.bf16.msra.mxu0 0
        %524 = vmatprep.subr.bf16.mxu0 0
        %525 = vmatpush1.bf16.msra.mxu0 0
        %526 = vmatprep.mubr.bf16.mxu0 0
        %527 = vmatmul.mubr.bf16.gmra.mrb[0].mxu0 %v447
        %v528 = vpop.f32.mrb[0].mxu0
        %v529 = vadd.f32 %v419, %v528
        %v530 = vpop.f32.mrb[0].mxu0
        %v531 = vpop.f32.mrb[0].mxu0
        %v532 = vadd.f32 %v419, %v531
        %v533 = vpop.f32.mrb[0].mxu0
        %534 = vmatprep.mubr.bf16.mxu0 0
        %535 = vmatmul.mubr.bf16.gmra.mrb[0].mxu0 %v450
        %v536 = vpop.f32.mrb[0].mxu0
        %v537 = vadd.f32 %v419, %v536
        %v538 = vpop.f32.mrb[0].mxu0
        %v539 = vpop.f32.mrb[0].mxu0
        %v540 = vadd.f32 %v419, %v539
        %v541 = vpop.f32.mrb[0].mxu0
        %542 = vmatprep.mubr.bf16.mxu0 0
        %543 = vmatmul.mubr.bf16.gmra.mrb[0].mxu0 %v453
        %v544 = vpop.f32.mrb[0].mxu0
        %v545 = vadd.f32 %v419, %v544
        %v546 = vpop.f32.mrb[0].mxu0
        %v547 = vpop.f32.mrb[0].mxu0
        %v548 = vadd.f32 %v419, %v547
        %v549 = vpop.f32.mrb[0].mxu0
        %550 = vmatprep.mubr.bf16.mxu0 0
        %551 = vmatmul.mubr.bf16.gmra.mrb[0].mxu0 %v456
        %v552 = vpop.f32.mrb[0].mxu0
        %v553 = vadd.f32 %v419, %v552
        %v554 = vpop.f32.mrb[0].mxu0
        %v555 = vpop.f32.mrb[0].mxu0
        %v556 = vadd.f32 %v419, %v555
        %v557 = vpop.f32.mrb[0].mxu0
        %558 = vmatprep.mubr.bf16.mxu0 0
        %559 = vmatmul.mubr.bf16.gmra.mrb[0].mxu0 %v459
        %v560 = vpop.f32.mrb[0].mxu0
        %v561 = vadd.f32 %v419, %v560
        %v562 = vpop.f32.mrb[0].mxu0
        %v563 = vpop.f32.mrb[0].mxu0
        %v564 = vadd.f32 %v419, %v563
        %v565 = vpop.f32.mrb[0].mxu0
        %566 = vmatprep.mubr.bf16.mxu0 0
        %567 = vmatmul.mubr.bf16.gmra.mrb[0].mxu0 %v462
        %v568 = vpop.f32.mrb[0].mxu0
        %v569 = vadd.f32 %v419, %v568
        %v570 = vpop.f32.mrb[0].mxu0
        %v571 = vpop.f32.mrb[0].mxu0
        %v572 = vadd.f32 %v419, %v571
        %v573 = vpop.f32.mrb[0].mxu0
        %574 = vmatprep.mubr.bf16.mxu0 0
        %575 = vmatmul.mubr.bf16.gmra.mrb[0].mxu0 %v465
        %v576 = vpop.f32.mrb[0].mxu0
        %v577 = vadd.f32 %v419, %v576
        %v578 = vpop.f32.mrb[0].mxu0
        %v579 = vpop.f32.mrb[0].mxu0
        %v580 = vadd.f32 %v419, %v579
        %v581 = vpop.f32.mrb[0].mxu0
        %582 = vmatprep.mubr.bf16.mxu0 0
        %583 = vmatmul.mubr.bf16.gmra.mrb[0].mxu0 %v468
        %v584 = vpop.f32.mrb[0].mxu0
        %v585 = vadd.f32 %v419, %v584
        %v586 = vpop.f32.mrb[0].mxu0
        %v587 = vpop.f32.mrb[0].mxu0
        %v588 = vadd.f32 %v419, %v587
        %v589 = vpop.f32.mrb[0].mxu0
        %590 = vmatprep.mubr.bf16.mxu0 0
        %591 = vmatmul.mubr.bf16.gmra.mrb[0].mxu0 %v471
        %v592 = vpop.f32.mrb[0].mxu0
        %v593 = vadd.f32 %v419, %v592
        %v594 = vpop.f32.mrb[0].mxu0
        %v595 = vpop.f32.mrb[0].mxu0
        %v596 = vadd.f32 %v419, %v595
        %v597 = vpop.f32.mrb[0].mxu0
        %598 = vmatprep.mubr.bf16.mxu0 0
        %599 = vmatmul.mubr.bf16.gmra.mrb[0].mxu0 %v474
        %v600 = vpop.f32.mrb[0].mxu0
        %v601 = vadd.f32 %v419, %v600
        %v602 = vpop.f32.mrb[0].mxu0
        %v603 = vpop.f32.mrb[0].mxu0
        %v604 = vadd.f32 %v419, %v603
        %v605 = vpop.f32.mrb[0].mxu0
        %606 = vmatprep.mubr.bf16.mxu0 0
        %607 = vmatmul.mubr.bf16.gmra.mrb[0].mxu0 %v477
        %v608 = vpop.f32.mrb[0].mxu0
        %v609 = vadd.f32 %v419, %v608
        %v610 = vpop.f32.mrb[0].mxu0
        %v611 = vpop.f32.mrb[0].mxu0
        %v612 = vadd.f32 %v419, %v611
        %v613 = vpop.f32.mrb[0].mxu0
        %614 = vmatprep.mubr.bf16.mxu0 0
        %615 = vmatmul.mubr.bf16.gmra.mrb[0].mxu0 %v480
        %v616 = vpop.f32.mrb[0].mxu0
        %v617 = vadd.f32 %v419, %v616
        %v618 = vpop.f32.mrb[0].mxu0
        %v619 = vpop.f32.mrb[0].mxu0
        %v620 = vadd.f32 %v419, %v619
        %v621 = vpop.f32.mrb[0].mxu0
        %622 = vmatprep.mubr.bf16.mxu0 0
        %623 = vmatmul.mubr.bf16.gmra.mrb[0].mxu0 %v483
        %v624 = vpop.f32.mrb[0].mxu0
        %v625 = vadd.f32 %v419, %v624
        %v626 = vpop.f32.mrb[0].mxu0
        %v627 = vpop.f32.mrb[0].mxu0
        %v628 = vadd.f32 %v419, %v627
        %v629 = vpop.f32.mrb[0].mxu0
        %630 = vmatprep.mubr.bf16.mxu0 0
        %631 = vmatmul.mubr.bf16.gmra.mrb[0].mxu0 %v486
        %v632 = vpop.f32.mrb[0].mxu0
        %v633 = vadd.f32 %v419, %v632
        %v634 = vpop.f32.mrb[0].mxu0
        %v635 = vpop.f32.mrb[0].mxu0
        %v636 = vadd.f32 %v419, %v635
        %v637 = vpop.f32.mrb[0].mxu0
        %638 = vmatprep.mubr.bf16.mxu0 0
        %639 = vmatmul.mubr.bf16.gmra.mrb[0].mxu0 %v489
        %v640 = vpop.f32.mrb[0].mxu0
        %v641 = vadd.f32 %v419, %v640
        %v642 = vpop.f32.mrb[0].mxu0
        %v643 = vpop.f32.mrb[0].mxu0
        %v644 = vadd.f32 %v419, %v643
        %v645 = vpop.f32.mrb[0].mxu0
        %646 = vmatprep.mubr.bf16.mxu0 0
        %647 = vmatmul.mubr.bf16.gmra.mrb[0].mxu0 %v492
        %v648 = vpop.f32.mrb[0].mxu0
        %v649 = vadd.f32 %v419, %v648
        %v650 = vpop.f32.mrb[0].mxu0
        %v651 = vpop.f32.mrb[0].mxu0
        %v652 = vadd.f32 %v419, %v651
        %v653 = vpop.f32.mrb[0].mxu0
        %654 = vdwg.mxu0
        %v655 = vmax.f32 %v529, 0.0
        %v656 = vmax.f32 %v532, 0.0
        %v657 = vmax.f32 %v537, 0.0
        %v658 = vmax.f32 %v540, 0.0
        %v659 = vmax.f32 %v545, 0.0
        %v660 = vmax.f32 %v548, 0.0
        %v661 = vmax.f32 %v553, 0.0
        %v662 = vmax.f32 %v556, 0.0
        %v663 = vmax.f32 %v561, 0.0
        %v664 = vmax.f32 %v564, 0.0
        %v665 = vmax.f32 %v569, 0.0
        %v666 = vmax.f32 %v572, 0.0
        %v667 = vmax.f32 %v577, 0.0
        %v668 = vmax.f32 %v580, 0.0
        %v669 = vmax.f32 %v585, 0.0
        %v670 = vmax.f32 %v588, 0.0
        %v671 = vmax.f32 %v593, 0.0
        %v672 = vmax.f32 %v596, 0.0
        %v673 = vmax.f32 %v601, 0.0
        %v674 = vmax.f32 %v604, 0.0
        %v675 = vmax.f32 %v609, 0.0
        %v676 = vmax.f32 %v612, 0.0
        %v677 = vmax.f32 %v617, 0.0
        %v678 = vmax.f32 %v620, 0.0
        %v679 = vmax.f32 %v625, 0.0
        %v680 = vmax.f32 %v628, 0.0
        %v681 = vmax.f32 %v633, 0.0
        %v682 = vmax.f32 %v636, 0.0
        %v683 = vmax.f32 %v641, 0.0
        %v684 = vmax.f32 %v644, 0.0
        %v685 = vmax.f32 %v649, 0.0
        %v686 = vmax.f32 %v652, 0.0
        %v687 = vpack.c.bf16 %v656, %v655
        %v688 = vpack.c.bf16 %v658, %v657
        %v689 = vpack.c.bf16 %v660, %v659
        %v690 = vpack.c.bf16 %v662, %v661
        %v691 = vpack.c.bf16 %v664, %v663
        %v692 = vpack.c.bf16 %v666, %v665
        %v693 = vpack.c.bf16 %v668, %v667
        %v694 = vpack.c.bf16 %v670, %v669
        %v695 = vpack.c.bf16 %v672, %v671
        %v696 = vpack.c.bf16 %v674, %v673
        %v697 = vpack.c.bf16 %v676, %v675
        %v698 = vpack.c.bf16 %v678, %v677
        %v699 = vpack.c.bf16 %v680, %v679
        %v700 = vpack.c.bf16 %v682, %v681
        %v701 = vpack.c.bf16 %v684, %v683
        %v702 = vpack.c.bf16 %v686, %v685
        %v719 = vunpack.c.l.b16 %v687
        %v720 = vunpack.c.h.b16 %v687
        %v721 = vunpack.c.l.b16 %v688
        %v722 = vunpack.c.h.b16 %v688
        %v723 = vunpack.c.l.b16 %v689
        %v724 = vunpack.c.h.b16 %v689
        %v725 = vunpack.c.l.b16 %v690
        %v726 = vunpack.c.h.b16 %v690
        %v727 = vunpack.c.l.b16 %v691
        %v728 = vunpack.c.h.b16 %v691
        %v729 = vunpack.c.l.b16 %v692
        %v730 = vunpack.c.h.b16 %v692
        %v731 = vunpack.c.l.b16 %v693
        %v732 = vunpack.c.h.b16 %v693
        %v733 = vunpack.c.l.b16 %v694
        %v734 = vunpack.c.h.b16 %v694
        %v735 = vunpack.c.l.b16 %v695
        %v736 = vunpack.c.h.b16 %v695
        %v737 = vunpack.c.l.b16 %v696
        %v738 = vunpack.c.h.b16 %v696
        %v739 = vunpack.c.l.b16 %v697
        %v740 = vunpack.c.h.b16 %v697
        %v741 = vunpack.c.l.b16 %v698
        %v742 = vunpack.c.h.b16 %v698
        %v743 = vunpack.c.l.b16 %v699
        %v744 = vunpack.c.h.b16 %v699
        %v745 = vunpack.c.l.b16 %v700
        %v746 = vunpack.c.h.b16 %v700
        %v747 = vunpack.c.l.b16 %v701
        %v748 = vunpack.c.h.b16 %v701
        %v749 = vunpack.c.l.b16 %v702
        %v750 = vunpack.c.h.b16 %v702
        %v751 = vpack.c.b16 %v719, %v719
        %v752 = vpack.c.b16 %v720, %v720
        %v753 = vpack.c.b16 %v721, %v721
        %v754 = vpack.c.b16 %v722, %v722
        %v755 = vpack.c.b16 %v723, %v723
        %v756 = vpack.c.b16 %v724, %v724
        %v757 = vpack.c.b16 %v725, %v725
        %v758 = vpack.c.b16 %v726, %v726
        %v759 = vpack.c.b16 %v727, %v727
        %v760 = vpack.c.b16 %v728, %v728
        %v761 = vpack.c.b16 %v729, %v729
        %v762 = vpack.c.b16 %v730, %v730
        %v763 = vpack.c.b16 %v731, %v731
        %v764 = vpack.c.b16 %v732, %v732
        %v765 = vpack.c.b16 %v733, %v733
        %v766 = vpack.c.b16 %v734, %v734
        %v767 = vpack.c.b16 %v735, %v735
        %v768 = vpack.c.b16 %v736, %v736
        %v769 = vpack.c.b16 %v737, %v737
        %v770 = vpack.c.b16 %v738, %v738
        %v771 = vpack.c.b16 %v739, %v739
        %v772 = vpack.c.b16 %v740, %v740
        %v773 = vpack.c.b16 %v741, %v741
        %v774 = vpack.c.b16 %v742, %v742
        %v775 = vpack.c.b16 %v743, %v743
        %v776 = vpack.c.b16 %v744, %v744
        %v777 = vpack.c.b16 %v745, %v745
        %v778 = vpack.c.b16 %v746, %v746
        %v779 = vpack.c.b16 %v747, %v747
        %v780 = vpack.c.b16 %v748, %v748
        %v781 = vpack.c.b16 %v749, %v749
        %v782 = vpack.c.b16 %v750, %v750
        %vm783 = vsmask.f32 256
        %vm784 = vsmask.f32 4368
        %vm785 = vmor %vm783, %vm784
        %v787 = vshrl.u32 %v751, 16
        %v789 = vrot.slane %v787, 7
        %v790 = vshll.u32 %v751, 16
        %v792 = vor.u32 %v789, %v790
        %v793 = vrot.slane %v789, 4
        %v795 = vshrl.u32 %v752, 16
        %v797 = vrot.slane %v795, 7
        %v798 = vshll.u32 %v752, 16
        %v800 = vor.u32 %v797, %v798
        %v801 = vsel %vm785, %v793, %v800
        %v802 = vrot.slane %v797, 4
        %v804 = vshrl.u32 %v753, 16
        %v806 = vrot.slane %v804, 7
        %v807 = vshll.u32 %v753, 16
        %v809 = vor.u32 %v806, %v807
        %v810 = vrot.slane %v806, 4
        %v812 = vshrl.u32 %v754, 16
        %v814 = vrot.slane %v812, 7
        %v815 = vshll.u32 %v754, 16
        %v817 = vor.u32 %v814, %v815
        %v818 = vsel %vm785, %v810, %v817
        %v819 = vrot.slane %v814, 4
        %v821 = vshrl.u32 %v755, 16
        %v823 = vrot.slane %v821, 7
        %v824 = vshll.u32 %v755, 16
        %v826 = vor.u32 %v823, %v824
        %v827 = vrot.slane %v823, 4
        %v829 = vshrl.u32 %v756, 16
        %v831 = vrot.slane %v829, 7
        %v832 = vshll.u32 %v756, 16
        %v834 = vor.u32 %v831, %v832
        %v835 = vsel %vm785, %v827, %v834
        %v836 = vrot.slane %v831, 4
        %v838 = vshrl.u32 %v757, 16
        %v840 = vrot.slane %v838, 7
        %v841 = vshll.u32 %v757, 16
        %v843 = vor.u32 %v840, %v841
        %v844 = vrot.slane %v840, 4
        %v846 = vshrl.u32 %v758, 16
        %v848 = vrot.slane %v846, 7
        %v849 = vshll.u32 %v758, 16
        %v851 = vor.u32 %v848, %v849
        %v852 = vsel %vm785, %v844, %v851
        %v853 = vrot.slane %v848, 4
        %v855 = vshrl.u32 %v759, 16
        %v857 = vrot.slane %v855, 7
        %v858 = vshll.u32 %v759, 16
        %v860 = vor.u32 %v857, %v858
        %v861 = vrot.slane %v857, 4
        %v863 = vshrl.u32 %v760, 16
        %v865 = vrot.slane %v863, 7
        %v866 = vshll.u32 %v760, 16
        %v868 = vor.u32 %v865, %v866
        %v869 = vsel %vm785, %v861, %v868
        %v870 = vrot.slane %v865, 4
        %v872 = vshrl.u32 %v761, 16
        %v874 = vrot.slane %v872, 7
        %v875 = vshll.u32 %v761, 16
        %v877 = vor.u32 %v874, %v875
        %v878 = vrot.slane %v874, 4
        %v880 = vshrl.u32 %v762, 16
        %v882 = vrot.slane %v880, 7
        %v883 = vshll.u32 %v762, 16
        %v885 = vor.u32 %v882, %v883
        %v886 = vsel %vm785, %v878, %v885
        %v887 = vrot.slane %v882, 4
        %v889 = vshrl.u32 %v763, 16
        %v891 = vrot.slane %v889, 7
        %v892 = vshll.u32 %v763, 16
        %v894 = vor.u32 %v891, %v892
        %v895 = vrot.slane %v891, 4
        %v897 = vshrl.u32 %v764, 16
        %v899 = vrot.slane %v897, 7
        %v900 = vshll.u32 %v764, 16
        %v902 = vor.u32 %v899, %v900
        %v903 = vsel %vm785, %v895, %v902
        %v904 = vrot.slane %v899, 4
        %v906 = vshrl.u32 %v765, 16
        %v908 = vrot.slane %v906, 7
        %v909 = vshll.u32 %v765, 16
        %v911 = vor.u32 %v908, %v909
        %v912 = vrot.slane %v908, 4
        %v914 = vshrl.u32 %v766, 16
        %v916 = vrot.slane %v914, 7
        %v917 = vshll.u32 %v766, 16
        %v919 = vor.u32 %v916, %v917
        %v920 = vsel %vm785, %v912, %v919
        %v921 = vrot.slane %v916, 4
        %v923 = vshrl.u32 %v767, 16
        %v925 = vrot.slane %v923, 7
        %v926 = vshll.u32 %v767, 16
        %v928 = vor.u32 %v925, %v926
        %v929 = vrot.slane %v925, 4
        %v931 = vshrl.u32 %v768, 16
        %v933 = vrot.slane %v931, 7
        %v934 = vshll.u32 %v768, 16
        %v936 = vor.u32 %v933, %v934
        %v937 = vsel %vm785, %v929, %v936
        %v938 = vrot.slane %v933, 4
        %v940 = vshrl.u32 %v769, 16
        %v942 = vrot.slane %v940, 7
        %v943 = vshll.u32 %v769, 16
        %v945 = vor.u32 %v942, %v943
        %v946 = vrot.slane %v942, 4
        %v948 = vshrl.u32 %v770, 16
        %v950 = vrot.slane %v948, 7
        %v951 = vshll.u32 %v770, 16
        %v953 = vor.u32 %v950, %v951
        %v954 = vsel %vm785, %v946, %v953
        %v955 = vrot.slane %v950, 4
        %v957 = vshrl.u32 %v771, 16
        %v959 = vrot.slane %v957, 7
        %v960 = vshll.u32 %v771, 16
        %v962 = vor.u32 %v959, %v960
        %v963 = vrot.slane %v959, 4
        %v965 = vshrl.u32 %v772, 16
        %v967 = vrot.slane %v965, 7
        %v968 = vshll.u32 %v772, 16
        %v970 = vor.u32 %v967, %v968
        %v971 = vsel %vm785, %v963, %v970
        %v972 = vrot.slane %v967, 4
        %v974 = vshrl.u32 %v773, 16
        %v976 = vrot.slane %v974, 7
        %v977 = vshll.u32 %v773, 16
        %v979 = vor.u32 %v976, %v977
        %v980 = vrot.slane %v976, 4
        %v982 = vshrl.u32 %v774, 16
        %v984 = vrot.slane %v982, 7
        %v985 = vshll.u32 %v774, 16
        %v987 = vor.u32 %v984, %v985
        %v988 = vsel %vm785, %v980, %v987
        %v989 = vrot.slane %v984, 4
        %v991 = vshrl.u32 %v775, 16
        %v993 = vrot.slane %v991, 7
        %v994 = vshll.u32 %v775, 16
        %v996 = vor.u32 %v993, %v994
        %v997 = vrot.slane %v993, 4
        %v999 = vshrl.u32 %v776, 16
        %v1001 = vrot.slane %v999, 7
        %v1002 = vshll.u32 %v776, 16
        %v1004 = vor.u32 %v1001, %v1002
        %v1005 = vsel %vm785, %v997, %v1004
        %v1006 = vrot.slane %v1001, 4
        %v1008 = vshrl.u32 %v777, 16
        %v1010 = vrot.slane %v1008, 7
        %v1011 = vshll.u32 %v777, 16
        %v1013 = vor.u32 %v1010, %v1011
        %v1014 = vrot.slane %v1010, 4
        %v1016 = vshrl.u32 %v778, 16
        %v1018 = vrot.slane %v1016, 7
        %v1019 = vshll.u32 %v778, 16
        %v1021 = vor.u32 %v1018, %v1019
        %v1022 = vsel %vm785, %v1014, %v1021
        %v1023 = vrot.slane %v1018, 4
        %v1025 = vshrl.u32 %v779, 16
        %v1027 = vrot.slane %v1025, 7
        %v1028 = vshll.u32 %v779, 16
        %v1030 = vor.u32 %v1027, %v1028
        %v1031 = vrot.slane %v1027, 4
        %v1033 = vshrl.u32 %v780, 16
        %v1035 = vrot.slane %v1033, 7
        %v1036 = vshll.u32 %v780, 16
        %v1038 = vor.u32 %v1035, %v1036
        %v1039 = vsel %vm785, %v1031, %v1038
        %v1040 = vrot.slane %v1035, 4
        %v1042 = vshrl.u32 %v781, 16
        %v1044 = vrot.slane %v1042, 7
        %v1045 = vshll.u32 %v781, 16
        %v1047 = vor.u32 %v1044, %v1045
        %v1048 = vrot.slane %v1044, 4
        %v1050 = vshrl.u32 %v782, 16
        %v1052 = vrot.slane %v1050, 7
        %v1053 = vshll.u32 %v782, 16
        %v1055 = vor.u32 %v1052, %v1053
        %v1056 = vsel %vm785, %v1048, %v1055
        %v1057 = vrot.slane %v1052, 4
        %s1106 = scalar_lea.vmem [#allocation2], 12
        %vm1107 = vcmask 125952
        %vm1108 = vsmask.f32 7938
        %vm1109 = vmand %vm1107, %vm1108
        %v1110 = vld [vmem:[%s1106] sm:$0xf]
        %v1111 = vsel %vm1109, %v792, %v1110
        %1112 = vst [vmem:[%s1106] sm:$0xf] %v1111
        %vm1113 = vcmask 125952
        %1114 = vst.msk [vmem:[%s1106 + $0x4] sm:$0xf] %vm1113, %v801
        %vm1115 = vcmask 122880
        %vm1116 = vmand %vm1115, %vm783
        %v1117 = vld [vmem:[%s1106 + $0x8] sm:$0x1]
        %v1118 = vsel %vm1116, %v802, %v1117
        %1119 = vst [vmem:[%s1106 + $0x8] sm:$0x1] %v1118
        %v1120 = vld [vmem:[%s1106 + $0xc] sm:$0xf]
        %v1121 = vsel %vm1109, %v809, %v1120
        %1122 = vst [vmem:[%s1106 + $0xc] sm:$0xf] %v1121
        %1123 = vst.msk [vmem:[%s1106 + $0x10] sm:$0xf] %vm1113, %v818
        %v1124 = vld [vmem:[%s1106 + $0x14] sm:$0x1]
        %v1125 = vsel %vm1116, %v819, %v1124
        %1126 = vst [vmem:[%s1106 + $0x14] sm:$0x1] %v1125
        %v1127 = vld [vmem:[%s1106 + $0x18] sm:$0xf]
        %v1128 = vsel %vm1109, %v826, %v1127
        %1129 = vst [vmem:[%s1106 + $0x18] sm:$0xf] %v1128
        %1130 = vst.msk [vmem:[%s1106 + $0x1c] sm:$0xf] %vm1113, %v835
        %v1131 = vld [vmem:[%s1106 + $0x20] sm:$0x1]
        %v1132 = vsel %vm1116, %v836, %v1131
        %1133 = vst [vmem:[%s1106 + $0x20] sm:$0x1] %v1132
        %v1134 = vld [vmem:[%s1106 + $0x24] sm:$0xf]
        %v1135 = vsel %vm1109, %v843, %v1134
        %1136 = vst [vmem:[%s1106 + $0x24] sm:$0xf] %v1135
        %1137 = vst.msk [vmem:[%s1106 + $0x28] sm:$0xf] %vm1113, %v852
        %v1138 = vld [vmem:[%s1106 + $0x2c] sm:$0x1]
        %v1139 = vsel %vm1116, %v853, %v1138
        %1140 = vst [vmem:[%s1106 + $0x2c] sm:$0x1] %v1139
        %v1141 = vld [vmem:[%s1106 + $0x30] sm:$0xf]
        %v1142 = vsel %vm1109, %v860, %v1141
        %1143 = vst [vmem:[%s1106 + $0x30] sm:$0xf] %v1142
        %1144 = vst.msk [vmem:[%s1106 + $0x34] sm:$0xf] %vm1113, %v869
        %v1145 = vld [vmem:[%s1106 + $0x38] sm:$0x1]
        %v1146 = vsel %vm1116, %v870, %v1145
        %1147 = vst [vmem:[%s1106 + $0x38] sm:$0x1] %v1146
        %v1148 = vld [vmem:[%s1106 + $0x3c] sm:$0xf]
        %v1149 = vsel %vm1109, %v877, %v1148
        %1150 = vst [vmem:[%s1106 + $0x3c] sm:$0xf] %v1149
        %1151 = vst.msk [vmem:[%s1106 + $0x40] sm:$0xf] %vm1113, %v886
        %v1152 = vld [vmem:[%s1106 + $0x44] sm:$0x1]
        %v1153 = vsel %vm1116, %v887, %v1152
        %1154 = vst [vmem:[%s1106 + $0x44] sm:$0x1] %v1153
        %v1155 = vld [vmem:[%s1106 + $0x48] sm:$0xf]
        %v1156 = vsel %vm1109, %v894, %v1155
        %1157 = vst [vmem:[%s1106 + $0x48] sm:$0xf] %v1156
        %1158 = vst.msk [vmem:[%s1106 + $0x4c] sm:$0xf] %vm1113, %v903
        %v1159 = vld [vmem:[%s1106 + $0x50] sm:$0x1]
        %v1160 = vsel %vm1116, %v904, %v1159
        %1161 = vst [vmem:[%s1106 + $0x50] sm:$0x1] %v1160
        %v1162 = vld [vmem:[%s1106 + $0x54] sm:$0xf]
        %v1163 = vsel %vm1109, %v911, %v1162
        %1164 = vst [vmem:[%s1106 + $0x54] sm:$0xf] %v1163
        %1165 = vst.msk [vmem:[%s1106 + $0x58] sm:$0xf] %vm1113, %v920
        %v1166 = vld [vmem:[%s1106 + $0x5c] sm:$0x1]
        %v1167 = vsel %vm1116, %v921, %v1166
        %1168 = vst [vmem:[%s1106 + $0x5c] sm:$0x1] %v1167
        %v1169 = vld [vmem:[%s1106 + $0x60] sm:$0xf]
        %v1170 = vsel %vm1109, %v928, %v1169
        %1171 = vst [vmem:[%s1106 + $0x60] sm:$0xf] %v1170
        %1172 = vst.msk [vmem:[%s1106 + $0x64] sm:$0xf] %vm1113, %v937
        %v1173 = vld [vmem:[%s1106 + $0x68] sm:$0x1]
        %v1174 = vsel %vm1116, %v938, %v1173
        %1175 = vst [vmem:[%s1106 + $0x68] sm:$0x1] %v1174
        %v1176 = vld [vmem:[%s1106 + $0x6c] sm:$0xf]
        %v1177 = vsel %vm1109, %v945, %v1176
        %1178 = vst [vmem:[%s1106 + $0x6c] sm:$0xf] %v1177
        %1179 = vst.msk [vmem:[%s1106 + $0x70] sm:$0xf] %vm1113, %v954
        %v1180 = vld [vmem:[%s1106 + $0x74] sm:$0x1]
        %v1181 = vsel %vm1116, %v955, %v1180
        %1182 = vst [vmem:[%s1106 + $0x74] sm:$0x1] %v1181
        %v1183 = vld [vmem:[%s1106 + $0x78] sm:$0xf]
        %v1184 = vsel %vm1109, %v962, %v1183
        %1185 = vst [vmem:[%s1106 + $0x78] sm:$0xf] %v1184
        %1186 = vst.msk [vmem:[%s1106 + $0x7c] sm:$0xf] %vm1113, %v971
        %v1187 = vld [vmem:[%s1106 + $0x80] sm:$0x1]
        %v1188 = vsel %vm1116, %v972, %v1187
        %1189 = vst [vmem:[%s1106 + $0x80] sm:$0x1] %v1188
        %v1190 = vld [vmem:[%s1106 + $0x84] sm:$0xf]
        %v1191 = vsel %vm1109, %v979, %v1190
        %1192 = vst [vmem:[%s1106 + $0x84] sm:$0xf] %v1191
        %1193 = vst.msk [vmem:[%s1106 + $0x88] sm:$0xf] %vm1113, %v988
        %v1194 = vld [vmem:[%s1106 + $0x8c] sm:$0x1]
        %v1195 = vsel %vm1116, %v989, %v1194
        %1196 = vst [vmem:[%s1106 + $0x8c] sm:$0x1] %v1195
        %v1197 = vld [vmem:[%s1106 + $0x90] sm:$0xf]
        %v1198 = vsel %vm1109, %v996, %v1197
        %1199 = vst [vmem:[%s1106 + $0x90] sm:$0xf] %v1198
        %1200 = vst.msk [vmem:[%s1106 + $0x94] sm:$0xf] %vm1113, %v1005
        %v1201 = vld [vmem:[%s1106 + $0x98] sm:$0x1]
        %v1202 = vsel %vm1116, %v1006, %v1201
        %1203 = vst [vmem:[%s1106 + $0x98] sm:$0x1] %v1202
        %v1204 = vld [vmem:[%s1106 + $0x9c] sm:$0xf]
        %v1205 = vsel %vm1109, %v1013, %v1204
        %1206 = vst [vmem:[%s1106 + $0x9c] sm:$0xf] %v1205
        %1207 = vst.msk [vmem:[%s1106 + $0xa0] sm:$0xf] %vm1113, %v1022
        %v1208 = vld [vmem:[%s1106 + $0xa4] sm:$0x1]
        %v1209 = vsel %vm1116, %v1023, %v1208
        %1210 = vst [vmem:[%s1106 + $0xa4] sm:$0x1] %v1209
        %v1211 = vld [vmem:[%s1106 + $0xa8] sm:$0xf]
        %v1212 = vsel %vm1109, %v1030, %v1211
        %1213 = vst [vmem:[%s1106 + $0xa8] sm:$0xf] %v1212
        %1214 = vst.msk [vmem:[%s1106 + $0xac] sm:$0xf] %vm1113, %v1039
        %v1215 = vld [vmem:[%s1106 + $0xb0] sm:$0x1]
        %v1216 = vsel %vm1116, %v1040, %v1215
        %1217 = vst [vmem:[%s1106 + $0xb0] sm:$0x1] %v1216
        %v1218 = vld [vmem:[%s1106 + $0xb4] sm:$0xf]
        %v1219 = vsel %vm1109, %v1047, %v1218
        %1220 = vst [vmem:[%s1106 + $0xb4] sm:$0xf] %v1219
        %1221 = vst.msk [vmem:[%s1106 + $0xb8] sm:$0xf] %vm1113, %v1056
        %v1222 = vld [vmem:[%s1106 + $0xbc] sm:$0x1]
        %v1223 = vsel %vm1116, %v1057, %v1222
        %1224 = vst [vmem:[%s1106 + $0xbc] sm:$0x1] %v1223
        %v1225 = vld [vmem:[#allocation2] sm:$0xf]
        %v1226 = vld [vmem:[#allocation2 + $0x4] sm:$0xf]
        %v1227 = vld [vmem:[#allocation2 + $0xc] sm:$0xf]
        %v1228 = vld [vmem:[#allocation2 + $0x10] sm:$0xf]
        %v1229 = vld [vmem:[#allocation2 + $0x18] sm:$0xf]
        %v1230 = vld [vmem:[#allocation2 + $0x1c] sm:$0xf]
        %v1231 = vld [vmem:[#allocation2 + $0x24] sm:$0xf]
        %v1232 = vld [vmem:[#allocation2 + $0x28] sm:$0xf]
        %v1233 = vld [vmem:[#allocation2 + $0x30] sm:$0xf]
        %v1234 = vld [vmem:[#allocation2 + $0x34] sm:$0xf]
        %v1235 = vld [vmem:[#allocation2 + $0x3c] sm:$0xf]
        %v1236 = vld [vmem:[#allocation2 + $0x40] sm:$0xf]
        %v1237 = vld [vmem:[#allocation2 + $0x48] sm:$0xf]
        %v1238 = vld [vmem:[#allocation2 + $0x4c] sm:$0xf]
        %v1239 = vld [vmem:[#allocation2 + $0x54] sm:$0xf]
        %v1240 = vld [vmem:[#allocation2 + $0x58] sm:$0xf]
        %v1241 = vld [vmem:[#allocation2 + $0x60] sm:$0xf]
        %v1242 = vld [vmem:[#allocation2 + $0x64] sm:$0xf]
        %v1243 = vld [vmem:[#allocation2 + $0x6c] sm:$0xf]
        %v1244 = vld [vmem:[#allocation2 + $0x70] sm:$0xf]
        %v1245 = vld [vmem:[#allocation2 + $0x78] sm:$0xf]
        %v1246 = vld [vmem:[#allocation2 + $0x7c] sm:$0xf]
        %v1247 = vld [vmem:[#allocation2 + $0x84] sm:$0xf]
        %v1248 = vld [vmem:[#allocation2 + $0x88] sm:$0xf]
        %v1249 = vld [vmem:[#allocation2 + $0x90] sm:$0xf]
        %v1250 = vld [vmem:[#allocation2 + $0x94] sm:$0xf]
        %v1251 = vld [vmem:[#allocation2 + $0x9c] sm:$0xf]
        %v1252 = vld [vmem:[#allocation2 + $0xa0] sm:$0xf]
        %v1253 = vld [vmem:[#allocation2 + $0xa8] sm:$0xf]
        %v1254 = vld [vmem:[#allocation2 + $0xac] sm:$0xf]
        %v1255 = vld [vmem:[#allocation2 + $0xb4] sm:$0xf]
        %v1256 = vld [vmem:[#allocation2 + $0xb8] sm:$0xf]
        %v1289 = vunpack.c.l.b16 %v1225
        %v1290 = vunpack.c.l.b16 %v1226
        %v1291 = vunpack.c.l.b16 %v1227
        %v1292 = vunpack.c.l.b16 %v1228
        %v1293 = vunpack.c.l.b16 %v1229
        %v1294 = vunpack.c.l.b16 %v1230
        %v1295 = vunpack.c.l.b16 %v1231
        %v1296 = vunpack.c.l.b16 %v1232
        %v1297 = vunpack.c.l.b16 %v1233
        %v1298 = vunpack.c.l.b16 %v1234
        %v1299 = vunpack.c.l.b16 %v1235
        %v1300 = vunpack.c.l.b16 %v1236
        %v1301 = vunpack.c.l.b16 %v1237
        %v1302 = vunpack.c.l.b16 %v1238
        %v1303 = vunpack.c.l.b16 %v1239
        %v1304 = vunpack.c.l.b16 %v1240
        %v1305 = vunpack.c.l.b16 %v1241
        %v1306 = vunpack.c.l.b16 %v1242
        %v1307 = vunpack.c.l.b16 %v1243
        %v1308 = vunpack.c.l.b16 %v1244
        %v1309 = vunpack.c.l.b16 %v1245
        %v1310 = vunpack.c.l.b16 %v1246
        %v1311 = vunpack.c.l.b16 %v1247
        %v1312 = vunpack.c.l.b16 %v1248
        %v1313 = vunpack.c.l.b16 %v1249
        %v1314 = vunpack.c.l.b16 %v1250
        %v1315 = vunpack.c.l.b16 %v1251
        %v1316 = vunpack.c.l.b16 %v1252
        %v1317 = vunpack.c.l.b16 %v1253
        %v1318 = vunpack.c.l.b16 %v1254
        %v1319 = vunpack.c.l.b16 %v1255
        %v1320 = vunpack.c.l.b16 %v1256
        %v1321 = vpack.c.b16 %v1290, %v1289
        %v1322 = vpack.c.b16 %v1292, %v1291
        %v1323 = vpack.c.b16 %v1294, %v1293
        %v1324 = vpack.c.b16 %v1296, %v1295
        %v1325 = vpack.c.b16 %v1298, %v1297
        %v1326 = vpack.c.b16 %v1300, %v1299
        %v1327 = vpack.c.b16 %v1302, %v1301
        %v1328 = vpack.c.b16 %v1304, %v1303
        %v1329 = vpack.c.b16 %v1306, %v1305
        %v1330 = vpack.c.b16 %v1308, %v1307
        %v1331 = vpack.c.b16 %v1310, %v1309
        %v1332 = vpack.c.b16 %v1312, %v1311
        %v1333 = vpack.c.b16 %v1314, %v1313
        %v1334 = vpack.c.b16 %v1316, %v1315
        %v1335 = vpack.c.b16 %v1318, %v1317
        %v1336 = vpack.c.b16 %v1320, %v1319
        %vm1353 = vcmask 130048
        %1354 = vst.msk [vmem:[#allocation3] sm:$0xff] %vm1353, %v1321
        %1355 = vst.msk [vmem:[#allocation3 + $0x10] sm:$0xff] %vm1353, %v1322
        %1356 = vst.msk [vmem:[#allocation3 + $0x20] sm:$0xff] %vm1353, %v1323
        %1357 = vst.msk [vmem:[#allocation3 + $0x30] sm:$0xff] %vm1353, %v1324
        %1358 = vst.msk [vmem:[#allocation3 + $0x40] sm:$0xff] %vm1353, %v1325
        %1359 = vst.msk [vmem:[#allocation3 + $0x50] sm:$0xff] %vm1353, %v1326
        %1360 = vst.msk [vmem:[#allocation3 + $0x60] sm:$0xff] %vm1353, %v1327
        %1361 = vst.msk [vmem:[#allocation3 + $0x70] sm:$0xff] %vm1353, %v1328
        %1362 = vst.msk [vmem:[#allocation3 + $0x80] sm:$0xff] %vm1353, %v1329
        %1363 = vst.msk [vmem:[#allocation3 + $0x90] sm:$0xff] %vm1353, %v1330
        %1364 = vst.msk [vmem:[#allocation3 + $0xa0] sm:$0xff] %vm1353, %v1331
        %1365 = vst.msk [vmem:[#allocation3 + $0xb0] sm:$0xff] %vm1353, %v1332
        %1366 = vst.msk [vmem:[#allocation3 + $0xc0] sm:$0xff] %vm1353, %v1333
        %1367 = vst.msk [vmem:[#allocation3 + $0xd0] sm:$0xff] %vm1353, %v1334
        %1368 = vst.msk [vmem:[#allocation3 + $0xe0] sm:$0xff] %vm1353, %v1335
        %1369 = vst.msk [vmem:[#allocation3 + $0xf0] sm:$0xff] %vm1353, %v1336
        %v1370 = vld [vmem:[#allocation2] sm:$0xf]
        %v1371 = vld [vmem:[#allocation2 + $0x4] sm:$0xf]
        %v1372 = vld [vmem:[#allocation2 + $0x8] sm:$0x1]
        %v1373 = vld [vmem:[#allocation2 + $0xc] sm:$0xf]
        %v1374 = vld [vmem:[#allocation2 + $0x10] sm:$0xf]
        %v1375 = vld [vmem:[#allocation2 + $0x14] sm:$0x1]
        %v1376 = vld [vmem:[#allocation2 + $0x18] sm:$0xf]
        %v1377 = vld [vmem:[#allocation2 + $0x1c] sm:$0xf]
        %v1378 = vld [vmem:[#allocation2 + $0x20] sm:$0x1]
        %v1379 = vld [vmem:[#allocation2 + $0x24] sm:$0xf]
        %v1380 = vld [vmem:[#allocation2 + $0x28] sm:$0xf]
        %v1381 = vld [vmem:[#allocation2 + $0x2c] sm:$0x1]
        %v1382 = vld [vmem:[#allocation2 + $0x30] sm:$0xf]
        %v1383 = vld [vmem:[#allocation2 + $0x34] sm:$0xf]
        %v1384 = vld [vmem:[#allocation2 + $0x38] sm:$0x1]
        %v1385 = vld [vmem:[#allocation2 + $0x3c] sm:$0xf]
        %v1386 = vld [vmem:[#allocation2 + $0x40] sm:$0xf]
        %v1387 = vld [vmem:[#allocation2 + $0x44] sm:$0x1]
        %v1388 = vld [vmem:[#allocation2 + $0x48] sm:$0xf]
        %v1389 = vld [vmem:[#allocation2 + $0x4c] sm:$0xf]
        %v1390 = vld [vmem:[#allocation2 + $0x50] sm:$0x1]
        %v1391 = vld [vmem:[#allocation2 + $0x54] sm:$0xf]
        %v1392 = vld [vmem:[#allocation2 + $0x58] sm:$0xf]
        %v1393 = vld [vmem:[#allocation2 + $0x5c] sm:$0x1]
        %v1394 = vld [vmem:[#allocation2 + $0x60] sm:$0xf]
        %v1395 = vld [vmem:[#allocation2 + $0x64] sm:$0xf]
        %v1396 = vld [vmem:[#allocation2 + $0x68] sm:$0x1]
        %v1397 = vld [vmem:[#allocation2 + $0x6c] sm:$0xf]
        %v1398 = vld [vmem:[#allocation2 + $0x70] sm:$0xf]
        %v1399 = vld [vmem:[#allocation2 + $0x74] sm:$0x1]
        %v1400 = vld [vmem:[#allocation2 + $0x78] sm:$0xf]
        %v1401 = vld [vmem:[#allocation2 + $0x7c] sm:$0xf]
        %v1402 = vld [vmem:[#allocation2 + $0x80] sm:$0x1]
        %v1403 = vld [vmem:[#allocation2 + $0x84] sm:$0xf]
        %v1404 = vld [vmem:[#allocation2 + $0x88] sm:$0xf]
        %v1405 = vld [vmem:[#allocation2 + $0x8c] sm:$0x1]
        %v1406 = vld [vmem:[#allocation2 + $0x90] sm:$0xf]
        %v1407 = vld [vmem:[#allocation2 + $0x94] sm:$0xf]
        %v1408 = vld [vmem:[#allocation2 + $0x98] sm:$0x1]
        %v1409 = vld [vmem:[#allocation2 + $0x9c] sm:$0xf]
        %v1410 = vld [vmem:[#allocation2 + $0xa0] sm:$0xf]
        %v1411 = vld [vmem:[#allocation2 + $0xa4] sm:$0x1]
        %v1412 = vld [vmem:[#allocation2 + $0xa8] sm:$0xf]
        %v1413 = vld [vmem:[#allocation2 + $0xac] sm:$0xf]
        %v1414 = vld [vmem:[#allocation2 + $0xb0] sm:$0x1]
        %v1415 = vld [vmem:[#allocation2 + $0xb4] sm:$0xf]
        %v1416 = vld [vmem:[#allocation2 + $0xb8] sm:$0xf]
        %v1417 = vld [vmem:[#allocation2 + $0xbc] sm:$0x1]
        %vm1418 = vsmask.f32 3328
        %vm1419 = vsmask.f32 7440
        %vm1420 = vmor %vm1418, %vm1419
        %v1422 = vshrl.u32 %v1370, 16
        %v1424 = vrot.slane %v1422, 4
        %v1425 = vshll.u32 %v1370, 16
        %v1427 = vrot.slane %v1425, 5
        %v1428 = vor.u32 %v1424, %v1427
        %v1429 = vrot.slane %v1428, 4
        %v1431 = vshll.u32 %v1371, 16
        %v1433 = vrot.slane %v1431, 5
        %v1434 = vsel %vm1420, %v1429, %v1433
        %v1435 = vshrl.u32 %v1371, 16
        %v1437 = vrot.slane %v1435, 4
        %v1438 = vor.u32 %v1437, %v1433
        %v1439 = vrot.slane %v1438, 4
        %v1441 = vshll.u32 %v1372, 16
        %v1443 = vrot.slane %v1441, 5
        %v1444 = vsel %vm1420, %v1439, %v1443
        %v1446 = vshrl.u32 %v1373, 16
        %v1448 = vrot.slane %v1446, 4
        %v1449 = vshll.u32 %v1373, 16
        %v1451 = vrot.slane %v1449, 5
        %v1452 = vor.u32 %v1448, %v1451
        %v1453 = vrot.slane %v1452, 4
        %v1455 = vshll.u32 %v1374, 16
        %v1457 = vrot.slane %v1455, 5
        %v1458 = vsel %vm1420, %v1453, %v1457
        %v1459 = vshrl.u32 %v1374, 16
        %v1461 = vrot.slane %v1459, 4
        %v1462 = vor.u32 %v1461, %v1457
        %v1463 = vrot.slane %v1462, 4
        %v1465 = vshll.u32 %v1375, 16
        %v1467 = vrot.slane %v1465, 5
        %v1468 = vsel %vm1420, %v1463, %v1467
        %v1470 = vshrl.u32 %v1376, 16
        %v1472 = vrot.slane %v1470, 4
        %v1473 = vshll.u32 %v1376, 16
        %v1475 = vrot.slane %v1473, 5
        %v1476 = vor.u32 %v1472, %v1475
        %v1477 = vrot.slane %v1476, 4
        %v1479 = vshll.u32 %v1377, 16
        %v1481 = vrot.slane %v1479, 5
        %v1482 = vsel %vm1420, %v1477, %v1481
        %v1483 = vshrl.u32 %v1377, 16
        %v1485 = vrot.slane %v1483, 4
        %v1486 = vor.u32 %v1485, %v1481
        %v1487 = vrot.slane %v1486, 4
        %v1489 = vshll.u32 %v1378, 16
        %v1491 = vrot.slane %v1489, 5
        %v1492 = vsel %vm1420, %v1487, %v1491
        %v1494 = vshrl.u32 %v1379, 16
        %v1496 = vrot.slane %v1494, 4
        %v1497 = vshll.u32 %v1379, 16
        %v1499 = vrot.slane %v1497, 5
        %v1500 = vor.u32 %v1496, %v1499
        %v1501 = vrot.slane %v1500, 4
        %v1503 = vshll.u32 %v1380, 16
        %v1505 = vrot.slane %v1503, 5
        %v1506 = vsel %vm1420, %v1501, %v1505
        %v1507 = vshrl.u32 %v1380, 16
        %v1509 = vrot.slane %v1507, 4
        %v1510 = vor.u32 %v1509, %v1505
        %v1511 = vrot.slane %v1510, 4
        %v1513 = vshll.u32 %v1381, 16
        %v1515 = vrot.slane %v1513, 5
        %v1516 = vsel %vm1420, %v1511, %v1515
        %v1518 = vshrl.u32 %v1382, 16
        %v1520 = vrot.slane %v1518, 4
        %v1521 = vshll.u32 %v1382, 16
        %v1523 = vrot.slane %v1521, 5
        %v1524 = vor.u32 %v1520, %v1523
        %v1525 = vrot.slane %v1524, 4
        %v1527 = vshll.u32 %v1383, 16
        %v1529 = vrot.slane %v1527, 5
        %v1530 = vsel %vm1420, %v1525, %v1529
        %v1531 = vshrl.u32 %v1383, 16
        %v1533 = vrot.slane %v1531, 4
        %v1534 = vor.u32 %v1533, %v1529
        %v1535 = vrot.slane %v1534, 4
        %v1537 = vshll.u32 %v1384, 16
        %v1539 = vrot.slane %v1537, 5
        %v1540 = vsel %vm1420, %v1535, %v1539
        %v1542 = vshrl.u32 %v1385, 16
        %v1544 = vrot.slane %v1542, 4
        %v1545 = vshll.u32 %v1385, 16
        %v1547 = vrot.slane %v1545, 5
        %v1548 = vor.u32 %v1544, %v1547
        %v1549 = vrot.slane %v1548, 4
        %v1551 = vshll.u32 %v1386, 16
        %v1553 = vrot.slane %v1551, 5
        %v1554 = vsel %vm1420, %v1549, %v1553
        %v1555 = vshrl.u32 %v1386, 16
        %v1557 = vrot.slane %v1555, 4
        %v1558 = vor.u32 %v1557, %v1553
        %v1559 = vrot.slane %v1558, 4
        %v1561 = vshll.u32 %v1387, 16
        %v1563 = vrot.slane %v1561, 5
        %v1564 = vsel %vm1420, %v1559, %v1563
        %v1566 = vshrl.u32 %v1388, 16
        %v1568 = vrot.slane %v1566, 4
        %v1569 = vshll.u32 %v1388, 16
        %v1571 = vrot.slane %v1569, 5
        %v1572 = vor.u32 %v1568, %v1571
        %v1573 = vrot.slane %v1572, 4
        %v1575 = vshll.u32 %v1389, 16
        %v1577 = vrot.slane %v1575, 5
        %v1578 = vsel %vm1420, %v1573, %v1577
        %v1579 = vshrl.u32 %v1389, 16
        %v1581 = vrot.slane %v1579, 4
        %v1582 = vor.u32 %v1581, %v1577
        %v1583 = vrot.slane %v1582, 4
        %v1585 = vshll.u32 %v1390, 16
        %v1587 = vrot.slane %v1585, 5
        %v1588 = vsel %vm1420, %v1583, %v1587
        %v1590 = vshrl.u32 %v1391, 16
        %v1592 = vrot.slane %v1590, 4
        %v1593 = vshll.u32 %v1391, 16
        %v1595 = vrot.slane %v1593, 5
        %v1596 = vor.u32 %v1592, %v1595
        %v1597 = vrot.slane %v1596, 4
        %v1599 = vshll.u32 %v1392, 16
        %v1601 = vrot.slane %v1599, 5
        %v1602 = vsel %vm1420, %v1597, %v1601
        %v1603 = vshrl.u32 %v1392, 16
        %v1605 = vrot.slane %v1603, 4
        %v1606 = vor.u32 %v1605, %v1601
        %v1607 = vrot.slane %v1606, 4
        %v1609 = vshll.u32 %v1393, 16
        %v1611 = vrot.slane %v1609, 5
        %v1612 = vsel %vm1420, %v1607, %v1611
        %v1614 = vshrl.u32 %v1394, 16
        %v1616 = vrot.slane %v1614, 4
        %v1617 = vshll.u32 %v1394, 16
        %v1619 = vrot.slane %v1617, 5
        %v1620 = vor.u32 %v1616, %v1619
        %v1621 = vrot.slane %v1620, 4
        %v1623 = vshll.u32 %v1395, 16
        %v1625 = vrot.slane %v1623, 5
        %v1626 = vsel %vm1420, %v1621, %v1625
        %v1627 = vshrl.u32 %v1395, 16
        %v1629 = vrot.slane %v1627, 4
        %v1630 = vor.u32 %v1629, %v1625
        %v1631 = vrot.slane %v1630, 4
        %v1633 = vshll.u32 %v1396, 16
        %v1635 = vrot.slane %v1633, 5
        %v1636 = vsel %vm1420, %v1631, %v1635
        %v1638 = vshrl.u32 %v1397, 16
        %v1640 = vrot.slane %v1638, 4
        %v1641 = vshll.u32 %v1397, 16
        %v1643 = vrot.slane %v1641, 5
        %v1644 = vor.u32 %v1640, %v1643
        %v1645 = vrot.slane %v1644, 4
        %v1647 = vshll.u32 %v1398, 16
        %v1649 = vrot.slane %v1647, 5
        %v1650 = vsel %vm1420, %v1645, %v1649
        %v1651 = vshrl.u32 %v1398, 16
        %v1653 = vrot.slane %v1651, 4
        %v1654 = vor.u32 %v1653, %v1649
        %v1655 = vrot.slane %v1654, 4
        %v1657 = vshll.u32 %v1399, 16
        %v1659 = vrot.slane %v1657, 5
        %v1660 = vsel %vm1420, %v1655, %v1659
        %v1662 = vshrl.u32 %v1400, 16
        %v1664 = vrot.slane %v1662, 4
        %v1665 = vshll.u32 %v1400, 16
        %v1667 = vrot.slane %v1665, 5
        %v1668 = vor.u32 %v1664, %v1667
        %v1669 = vrot.slane %v1668, 4
        %v1671 = vshll.u32 %v1401, 16
        %v1673 = vrot.slane %v1671, 5
        %v1674 = vsel %vm1420, %v1669, %v1673
        %v1675 = vshrl.u32 %v1401, 16
        %v1677 = vrot.slane %v1675, 4
        %v1678 = vor.u32 %v1677, %v1673
        %v1679 = vrot.slane %v1678, 4
        %v1681 = vshll.u32 %v1402, 16
        %v1683 = vrot.slane %v1681, 5
        %v1684 = vsel %vm1420, %v1679, %v1683
        %v1686 = vshrl.u32 %v1403, 16
        %v1688 = vrot.slane %v1686, 4
        %v1689 = vshll.u32 %v1403, 16
        %v1691 = vrot.slane %v1689, 5
        %v1692 = vor.u32 %v1688, %v1691
        %v1693 = vrot.slane %v1692, 4
        %v1695 = vshll.u32 %v1404, 16
        %v1697 = vrot.slane %v1695, 5
        %v1698 = vsel %vm1420, %v1693, %v1697
        %v1699 = vshrl.u32 %v1404, 16
        %v1701 = vrot.slane %v1699, 4
        %v1702 = vor.u32 %v1701, %v1697
        %v1703 = vrot.slane %v1702, 4
        %v1705 = vshll.u32 %v1405, 16
        %v1707 = vrot.slane %v1705, 5
        %v1708 = vsel %vm1420, %v1703, %v1707
        %v1710 = vshrl.u32 %v1406, 16
        %v1712 = vrot.slane %v1710, 4
        %v1713 = vshll.u32 %v1406, 16
        %v1715 = vrot.slane %v1713, 5
        %v1716 = vor.u32 %v1712, %v1715
        %v1717 = vrot.slane %v1716, 4
        %v1719 = vshll.u32 %v1407, 16
        %v1721 = vrot.slane %v1719, 5
        %v1722 = vsel %vm1420, %v1717, %v1721
        %v1723 = vshrl.u32 %v1407, 16
        %v1725 = vrot.slane %v1723, 4
        %v1726 = vor.u32 %v1725, %v1721
        %v1727 = vrot.slane %v1726, 4
        %v1729 = vshll.u32 %v1408, 16
        %v1731 = vrot.slane %v1729, 5
        %v1732 = vsel %vm1420, %v1727, %v1731
        %v1734 = vshrl.u32 %v1409, 16
        %v1736 = vrot.slane %v1734, 4
        %v1737 = vshll.u32 %v1409, 16
        %v1739 = vrot.slane %v1737, 5
        %v1740 = vor.u32 %v1736, %v1739
        %v1741 = vrot.slane %v1740, 4
        %v1743 = vshll.u32 %v1410, 16
        %v1745 = vrot.slane %v1743, 5
        %v1746 = vsel %vm1420, %v1741, %v1745
        %v1747 = vshrl.u32 %v1410, 16
        %v1749 = vrot.slane %v1747, 4
        %v1750 = vor.u32 %v1749, %v1745
        %v1751 = vrot.slane %v1750, 4
        %v1753 = vshll.u32 %v1411, 16
        %v1755 = vrot.slane %v1753, 5
        %v1756 = vsel %vm1420, %v1751, %v1755
        %v1758 = vshrl.u32 %v1412, 16
        %v1760 = vrot.slane %v1758, 4
        %v1761 = vshll.u32 %v1412, 16
        %v1763 = vrot.slane %v1761, 5
        %v1764 = vor.u32 %v1760, %v1763
        %v1765 = vrot.slane %v1764, 4
        %v1767 = vshll.u32 %v1413, 16
        %v1769 = vrot.slane %v1767, 5
        %v1770 = vsel %vm1420, %v1765, %v1769
        %v1771 = vshrl.u32 %v1413, 16
        %v1773 = vrot.slane %v1771, 4
        %v1774 = vor.u32 %v1773, %v1769
        %v1775 = vrot.slane %v1774, 4
        %v1777 = vshll.u32 %v1414, 16
        %v1779 = vrot.slane %v1777, 5
        %v1780 = vsel %vm1420, %v1775, %v1779
        %v1782 = vshrl.u32 %v1415, 16
        %v1784 = vrot.slane %v1782, 4
        %v1785 = vshll.u32 %v1415, 16
        %v1787 = vrot.slane %v1785, 5
        %v1788 = vor.u32 %v1784, %v1787
        %v1789 = vrot.slane %v1788, 4
        %v1791 = vshll.u32 %v1416, 16
        %v1793 = vrot.slane %v1791, 5
        %v1794 = vsel %vm1420, %v1789, %v1793
        %v1795 = vshrl.u32 %v1416, 16
        %v1797 = vrot.slane %v1795, 4
        %v1798 = vor.u32 %v1797, %v1793
        %v1799 = vrot.slane %v1798, 4
        %v1801 = vshll.u32 %v1417, 16
        %v1803 = vrot.slane %v1801, 5
        %v1804 = vsel %vm1420, %v1799, %v1803
        %v1805 = vunpack.c.l.b16 %v1434
        %v1806 = vunpack.c.l.b16 %v1444
        %v1807 = vunpack.c.l.b16 %v1458
        %v1808 = vunpack.c.l.b16 %v1468
        %v1809 = vunpack.c.l.b16 %v1482
        %v1810 = vunpack.c.l.b16 %v1492
        %v1811 = vunpack.c.l.b16 %v1506
        %v1812 = vunpack.c.l.b16 %v1516
        %v1813 = vunpack.c.l.b16 %v1530
        %v1814 = vunpack.c.l.b16 %v1540
        %v1815 = vunpack.c.l.b16 %v1554
        %v1816 = vunpack.c.l.b16 %v1564
        %v1817 = vunpack.c.l.b16 %v1578
        %v1818 = vunpack.c.l.b16 %v1588
        %v1819 = vunpack.c.l.b16 %v1602
        %v1820 = vunpack.c.l.b16 %v1612
        %v1821 = vunpack.c.l.b16 %v1626
        %v1822 = vunpack.c.l.b16 %v1636
        %v1823 = vunpack.c.l.b16 %v1650
        %v1824 = vunpack.c.l.b16 %v1660
        %v1825 = vunpack.c.l.b16 %v1674
        %v1826 = vunpack.c.l.b16 %v1684
        %v1827 = vunpack.c.l.b16 %v1698
        %v1828 = vunpack.c.l.b16 %v1708
        %v1829 = vunpack.c.l.b16 %v1722
        %v1830 = vunpack.c.l.b16 %v1732
        %v1831 = vunpack.c.l.b16 %v1746
        %v1832 = vunpack.c.l.b16 %v1756
        %v1833 = vunpack.c.l.b16 %v1770
        %v1834 = vunpack.c.l.b16 %v1780
        %v1835 = vunpack.c.l.b16 %v1794
        %v1836 = vunpack.c.l.b16 %v1804
        %v1837 = vpack.c.b16 %v1806, %v1805
        %v1838 = vpack.c.b16 %v1808, %v1807
        %v1839 = vpack.c.b16 %v1810, %v1809
        %v1840 = vpack.c.b16 %v1812, %v1811
        %v1841 = vpack.c.b16 %v1814, %v1813
        %v1842 = vpack.c.b16 %v1816, %v1815
        %v1843 = vpack.c.b16 %v1818, %v1817
        %v1844 = vpack.c.b16 %v1820, %v1819
        %v1845 = vpack.c.b16 %v1822, %v1821
        %v1846 = vpack.c.b16 %v1824, %v1823
        %v1847 = vpack.c.b16 %v1826, %v1825
        %v1848 = vpack.c.b16 %v1828, %v1827
        %v1849 = vpack.c.b16 %v1830, %v1829
        %v1850 = vpack.c.b16 %v1832, %v1831
        %v1851 = vpack.c.b16 %v1834, %v1833
        %v1852 = vpack.c.b16 %v1836, %v1835
        %1853 = vrot.lane.b32.xlu0 %v1837, 16
        %v1854 = vpop.permute.xlu0 %1853
        %1855 = vrot.lane.b32.xlu0 %v1838, 16
        %v1856 = vpop.permute.xlu0 %1855
        %1857 = vrot.lane.b32.xlu0 %v1839, 16
        %v1858 = vpop.permute.xlu0 %1857
        %1859 = vrot.lane.b32.xlu0 %v1840, 16
        %v1860 = vpop.permute.xlu0 %1859
        %1861 = vrot.lane.b32.xlu0 %v1841, 16
        %v1862 = vpop.permute.xlu0 %1861
        %1863 = vrot.lane.b32.xlu0 %v1842, 16
        %v1864 = vpop.permute.xlu0 %1863
        %1865 = vrot.lane.b32.xlu0 %v1843, 16
        %v1866 = vpop.permute.xlu0 %1865
        %1867 = vrot.lane.b32.xlu0 %v1844, 16
        %v1868 = vpop.permute.xlu0 %1867
        %1869 = vrot.lane.b32.xlu0 %v1845, 16
        %v1870 = vpop.permute.xlu0 %1869
        %1871 = vrot.lane.b32.xlu0 %v1846, 16
        %v1872 = vpop.permute.xlu0 %1871
        %1873 = vrot.lane.b32.xlu0 %v1847, 16
        %v1874 = vpop.permute.xlu0 %1873
        %1875 = vrot.lane.b32.xlu0 %v1848, 16
        %v1876 = vpop.permute.xlu0 %1875
        %1877 = vrot.lane.b32.xlu0 %v1849, 16
        %v1878 = vpop.permute.xlu0 %1877
        %1879 = vrot.lane.b32.xlu0 %v1850, 16
        %v1880 = vpop.permute.xlu0 %1879
        %1881 = vrot.lane.b32.xlu0 %v1851, 16
        %v1882 = vpop.permute.xlu0 %1881
        %1883 = vrot.lane.b32.xlu0 %v1852, 16
        %v1884 = vpop.permute.xlu0 %1883
        %vm1901 = vcmask 261248
        %1902 = vst.msk [vmem:[#allocation3] sm:$0xff] %vm1901, %v1854
        %1903 = vst.msk [vmem:[#allocation3 + $0x10] sm:$0xff] %vm1901, %v1856
        %1904 = vst.msk [vmem:[#allocation3 + $0x20] sm:$0xff] %vm1901, %v1858
        %1905 = vst.msk [vmem:[#allocation3 + $0x30] sm:$0xff] %vm1901, %v1860
        %1906 = vst.msk [vmem:[#allocation3 + $0x40] sm:$0xff] %vm1901, %v1862
        %1907 = vst.msk [vmem:[#allocation3 + $0x50] sm:$0xff] %vm1901, %v1864
        %1908 = vst.msk [vmem:[#allocation3 + $0x60] sm:$0xff] %vm1901, %v1866
        %1909 = vst.msk [vmem:[#allocation3 + $0x70] sm:$0xff] %vm1901, %v1868
        %1910 = vst.msk [vmem:[#allocation3 + $0x80] sm:$0xff] %vm1901, %v1870
        %1911 = vst.msk [vmem:[#allocation3 + $0x90] sm:$0xff] %vm1901, %v1872
        %1912 = vst.msk [vmem:[#allocation3 + $0xa0] sm:$0xff] %vm1901, %v1874
        %1913 = vst.msk [vmem:[#allocation3 + $0xb0] sm:$0xff] %vm1901, %v1876
        %1914 = vst.msk [vmem:[#allocation3 + $0xc0] sm:$0xff] %vm1901, %v1878
        %1915 = vst.msk [vmem:[#allocation3 + $0xd0] sm:$0xff] %vm1901, %v1880
        %1916 = vst.msk [vmem:[#allocation3 + $0xe0] sm:$0xff] %vm1901, %v1882
        %1917 = vst.msk [vmem:[#allocation3 + $0xf0] sm:$0xff] %vm1901, %v1884
        %v1918 = vld [vmem:[#allocation2] sm:$0xe]
        %v1919 = vld [vmem:[#allocation2 + $0x4] sm:$0xf]
        %v1920 = vld [vmem:[#allocation2 + $0x8] sm:$0x1]
        %v1921 = vld [vmem:[#allocation2 + $0xc] sm:$0xe]
        %v1922 = vld [vmem:[#allocation2 + $0x10] sm:$0xf]
        %v1923 = vld [vmem:[#allocation2 + $0x14] sm:$0x1]
        %v1924 = vld [vmem:[#allocation2 + $0x18] sm:$0xe]
        %v1925 = vld [vmem:[#allocation2 + $0x1c] sm:$0xf]
        %v1926 = vld [vmem:[#allocation2 + $0x20] sm:$0x1]
        %v1927 = vld [vmem:[#allocation2 + $0x24] sm:$0xe]
        %v1928 = vld [vmem:[#allocation2 + $0x28] sm:$0xf]
        %v1929 = vld [vmem:[#allocation2 + $0x2c] sm:$0x1]
        %v1930 = vld [vmem:[#allocation2 + $0x30] sm:$0xe]
        %v1931 = vld [vmem:[#allocation2 + $0x34] sm:$0xf]
        %v1932 = vld [vmem:[#allocation2 + $0x38] sm:$0x1]
        %v1933 = vld [vmem:[#allocation2 + $0x3c] sm:$0xe]
        %v1934 = vld [vmem:[#allocation2 + $0x40] sm:$0xf]
        %v1935 = vld [vmem:[#allocation2 + $0x44] sm:$0x1]
        %v1936 = vld [vmem:[#allocation2 + $0x48] sm:$0xe]
        %v1937 = vld [vmem:[#allocation2 + $0x4c] sm:$0xf]
        %v1938 = vld [vmem:[#allocation2 + $0x50] sm:$0x1]
        %v1939 = vld [vmem:[#allocation2 + $0x54] sm:$0xe]
        %v1940 = vld [vmem:[#allocation2 + $0x58] sm:$0xf]
        %v1941 = vld [vmem:[#allocation2 + $0x5c] sm:$0x1]
        %v1942 = vld [vmem:[#allocation2 + $0x60] sm:$0xe]
        %v1943 = vld [vmem:[#allocation2 + $0x64] sm:$0xf]
        %v1944 = vld [vmem:[#allocation2 + $0x68] sm:$0x1]
        %v1945 = vld [vmem:[#allocation2 + $0x6c] sm:$0xe]
        %v1946 = vld [vmem:[#allocation2 + $0x70] sm:$0xf]
        %v1947 = vld [vmem:[#allocation2 + $0x74] sm:$0x1]
        %v1948 = vld [vmem:[#allocation2 + $0x78] sm:$0xe]
        %v1949 = vld [vmem:[#allocation2 + $0x7c] sm:$0xf]
        %v1950 = vld [vmem:[#allocation2 + $0x80] sm:$0x1]
        %v1951 = vld [vmem:[#allocation2 + $0x84] sm:$0xe]
        %v1952 = vld [vmem:[#allocation2 + $0x88] sm:$0xf]
        %v1953 = vld [vmem:[#allocation2 + $0x8c] sm:$0x1]
        %v1954 = vld [vmem:[#allocation2 + $0x90] sm:$0xe]
        %v1955 = vld [vmem:[#allocation2 + $0x94] sm:$0xf]
        %v1956 = vld [vmem:[#allocation2 + $0x98] sm:$0x1]
        %v1957 = vld [vmem:[#allocation2 + $0x9c] sm:$0xe]
        %v1958 = vld [vmem:[#allocation2 + $0xa0] sm:$0xf]
        %v1959 = vld [vmem:[#allocation2 + $0xa4] sm:$0x1]
        %v1960 = vld [vmem:[#allocation2 + $0xa8] sm:$0xe]
        %v1961 = vld [vmem:[#allocation2 + $0xac] sm:$0xf]
        %v1962 = vld [vmem:[#allocation2 + $0xb0] sm:$0x1]
        %v1963 = vld [vmem:[#allocation2 + $0xb4] sm:$0xe]
        %v1964 = vld [vmem:[#allocation2 + $0xb8] sm:$0xf]
        %v1965 = vld [vmem:[#allocation2 + $0xbc] sm:$0x1]
        %vm2014 = vcmask 1042432
        %vm2015 = vcmask 1046532
        %vm2016 = vmor %vm2014, %vm2015
        %v2017 = vrot.slane %v1918, 5
        %v2018 = vrot.slane %v2017, 4
        %v2019 = vrot.slane %v1919, 5
        %v2020 = vsel %vm2016, %v2018, %v2019
        %v2021 = vrot.slane %v2019, 4
        %v2022 = vrot.slane %v1920, 5
        %v2023 = vsel %vm2016, %v2021, %v2022
        %v2024 = vrot.slane %v1921, 5
        %v2025 = vrot.slane %v2024, 4
        %v2026 = vrot.slane %v1922, 5
        %v2027 = vsel %vm2016, %v2025, %v2026
        %v2028 = vrot.slane %v2026, 4
        %v2029 = vrot.slane %v1923, 5
        %v2030 = vsel %vm2016, %v2028, %v2029
        %v2031 = vrot.slane %v1924, 5
        %v2032 = vrot.slane %v2031, 4
        %v2033 = vrot.slane %v1925, 5
        %v2034 = vsel %vm2016, %v2032, %v2033
        %v2035 = vrot.slane %v2033, 4
        %v2036 = vrot.slane %v1926, 5
        %v2037 = vsel %vm2016, %v2035, %v2036
        %v2038 = vrot.slane %v1927, 5
        %v2039 = vrot.slane %v2038, 4
        %v2040 = vrot.slane %v1928, 5
        %v2041 = vsel %vm2016, %v2039, %v2040
        %v2042 = vrot.slane %v2040, 4
        %v2043 = vrot.slane %v1929, 5
        %v2044 = vsel %vm2016, %v2042, %v2043
        %v2045 = vrot.slane %v1930, 5
        %v2046 = vrot.slane %v2045, 4
        %v2047 = vrot.slane %v1931, 5
        %v2048 = vsel %vm2016, %v2046, %v2047
        %v2049 = vrot.slane %v2047, 4
        %v2050 = vrot.slane %v1932, 5
        %v2051 = vsel %vm2016, %v2049, %v2050
        %v2052 = vrot.slane %v1933, 5
        %v2053 = vrot.slane %v2052, 4
        %v2054 = vrot.slane %v1934, 5
        %v2055 = vsel %vm2016, %v2053, %v2054
        %v2056 = vrot.slane %v2054, 4
        %v2057 = vrot.slane %v1935, 5
        %v2058 = vsel %vm2016, %v2056, %v2057
        %v2059 = vrot.slane %v1936, 5
        %v2060 = vrot.slane %v2059, 4
        %v2061 = vrot.slane %v1937, 5
        %v2062 = vsel %vm2016, %v2060, %v2061
        %v2063 = vrot.slane %v2061, 4
        %v2064 = vrot.slane %v1938, 5
        %v2065 = vsel %vm2016, %v2063, %v2064
        %v2066 = vrot.slane %v1939, 5
        %v2067 = vrot.slane %v2066, 4
        %v2068 = vrot.slane %v1940, 5
        %v2069 = vsel %vm2016, %v2067, %v2068
        %v2070 = vrot.slane %v2068, 4
        %v2071 = vrot.slane %v1941, 5
        %v2072 = vsel %vm2016, %v2070, %v2071
        %v2073 = vrot.slane %v1942, 5
        %v2074 = vrot.slane %v2073, 4
        %v2075 = vrot.slane %v1943, 5
        %v2076 = vsel %vm2016, %v2074, %v2075
        %v2077 = vrot.slane %v2075, 4
        %v2078 = vrot.slane %v1944, 5
        %v2079 = vsel %vm2016, %v2077, %v2078
        %v2080 = vrot.slane %v1945, 5
        %v2081 = vrot.slane %v2080, 4
        %v2082 = vrot.slane %v1946, 5
        %v2083 = vsel %vm2016, %v2081, %v2082
        %v2084 = vrot.slane %v2082, 4
        %v2085 = vrot.slane %v1947, 5
        %v2086 = vsel %vm2016, %v2084, %v2085
        %v2087 = vrot.slane %v1948, 5
        %v2088 = vrot.slane %v2087, 4
        %v2089 = vrot.slane %v1949, 5
        %v2090 = vsel %vm2016, %v2088, %v2089
        %v2091 = vrot.slane %v2089, 4
        %v2092 = vrot.slane %v1950, 5
        %v2093 = vsel %vm2016, %v2091, %v2092
        %v2094 = vrot.slane %v1951, 5
        %v2095 = vrot.slane %v2094, 4
        %v2096 = vrot.slane %v1952, 5
        %v2097 = vsel %vm2016, %v2095, %v2096
        %v2098 = vrot.slane %v2096, 4
        %v2099 = vrot.slane %v1953, 5
        %v2100 = vsel %vm2016, %v2098, %v2099
        %v2101 = vrot.slane %v1954, 5
        %v2102 = vrot.slane %v2101, 4
        %v2103 = vrot.slane %v1955, 5
        %v2104 = vsel %vm2016, %v2102, %v2103
        %v2105 = vrot.slane %v2103, 4
        %v2106 = vrot.slane %v1956, 5
        %v2107 = vsel %vm2016, %v2105, %v2106
        %v2108 = vrot.slane %v1957, 5
        %v2109 = vrot.slane %v2108, 4
        %v2110 = vrot.slane %v1958, 5
        %v2111 = vsel %vm2016, %v2109, %v2110
        %v2112 = vrot.slane %v2110, 4
        %v2113 = vrot.slane %v1959, 5
        %v2114 = vsel %vm2016, %v2112, %v2113
        %v2115 = vrot.slane %v1960, 5
        %v2116 = vrot.slane %v2115, 4
        %v2117 = vrot.slane %v1961, 5
        %v2118 = vsel %vm2016, %v2116, %v2117
        %v2119 = vrot.slane %v2117, 4
        %v2120 = vrot.slane %v1962, 5
        %v2121 = vsel %vm2016, %v2119, %v2120
        %v2122 = vrot.slane %v1963, 5
        %v2123 = vrot.slane %v2122, 4
        %v2124 = vrot.slane %v1964, 5
        %v2125 = vsel %vm2016, %v2123, %v2124
        %v2126 = vrot.slane %v2124, 4
        %v2127 = vrot.slane %v1965, 5
        %v2128 = vsel %vm2016, %v2126, %v2127
        %v2129 = vunpack.c.l.b16 %v2020
        %v2130 = vunpack.c.l.b16 %v2023
        %v2131 = vunpack.c.l.b16 %v2027
        %v2132 = vunpack.c.l.b16 %v2030
        %v2133 = vunpack.c.l.b16 %v2034
        %v2134 = vunpack.c.l.b16 %v2037
        %v2135 = vunpack.c.l.b16 %v2041
        %v2136 = vunpack.c.l.b16 %v2044
        %v2137 = vunpack.c.l.b16 %v2048
        %v2138 = vunpack.c.l.b16 %v2051
        %v2139 = vunpack.c.l.b16 %v2055
        %v2140 = vunpack.c.l.b16 %v2058
        %v2141 = vunpack.c.l.b16 %v2062
        %v2142 = vunpack.c.l.b16 %v2065
        %v2143 = vunpack.c.l.b16 %v2069
        %v2144 = vunpack.c.l.b16 %v2072
        %v2145 = vunpack.c.l.b16 %v2076
        %v2146 = vunpack.c.l.b16 %v2079
        %v2147 = vunpack.c.l.b16 %v2083
        %v2148 = vunpack.c.l.b16 %v2086
        %v2149 = vunpack.c.l.b16 %v2090
        %v2150 = vunpack.c.l.b16 %v2093
        %v2151 = vunpack.c.l.b16 %v2097
        %v2152 = vunpack.c.l.b16 %v2100
        %v2153 = vunpack.c.l.b16 %v2104
        %v2154 = vunpack.c.l.b16 %v2107
        %v2155 = vunpack.c.l.b16 %v2111
        %v2156 = vunpack.c.l.b16 %v2114
        %v2157 = vunpack.c.l.b16 %v2118
        %v2158 = vunpack.c.l.b16 %v2121
        %v2159 = vunpack.c.l.b16 %v2125
        %v2160 = vunpack.c.l.b16 %v2128
        %v2161 = vpack.c.b16 %v2130, %v2129
        %v2162 = vpack.c.b16 %v2132, %v2131
        %v2163 = vpack.c.b16 %v2134, %v2133
        %v2164 = vpack.c.b16 %v2136, %v2135
        %v2165 = vpack.c.b16 %v2138, %v2137
        %v2166 = vpack.c.b16 %v2140, %v2139
        %v2167 = vpack.c.b16 %v2142, %v2141
        %v2168 = vpack.c.b16 %v2144, %v2143
        %v2169 = vpack.c.b16 %v2146, %v2145
        %v2170 = vpack.c.b16 %v2148, %v2147
        %v2171 = vpack.c.b16 %v2150, %v2149
        %v2172 = vpack.c.b16 %v2152, %v2151
        %v2173 = vpack.c.b16 %v2154, %v2153
        %v2174 = vpack.c.b16 %v2156, %v2155
        %v2175 = vpack.c.b16 %v2158, %v2157
        %v2176 = vpack.c.b16 %v2160, %v2159
        %2177 = vrot.lane.b32.xlu0 %v2161, 32
        %v2178 = vpop.permute.xlu0 %2177
        %2179 = vrot.lane.b32.xlu0 %v2162, 32
        %v2180 = vpop.permute.xlu0 %2179
        %2181 = vrot.lane.b32.xlu0 %v2163, 32
        %v2182 = vpop.permute.xlu0 %2181
        %2183 = vrot.lane.b32.xlu0 %v2164, 32
        %v2184 = vpop.permute.xlu0 %2183
        %2185 = vrot.lane.b32.xlu0 %v2165, 32
        %v2186 = vpop.permute.xlu0 %2185
        %2187 = vrot.lane.b32.xlu0 %v2166, 32
        %v2188 = vpop.permute.xlu0 %2187
        %2189 = vrot.lane.b32.xlu0 %v2167, 32
        %v2190 = vpop.permute.xlu0 %2189
        %2191 = vrot.lane.b32.xlu0 %v2168, 32
        %v2192 = vpop.permute.xlu0 %2191
        %2193 = vrot.lane.b32.xlu0 %v2169, 32
        %v2194 = vpop.permute.xlu0 %2193
        %2195 = vrot.lane.b32.xlu0 %v2170, 32
        %v2196 = vpop.permute.xlu0 %2195
        %2197 = vrot.lane.b32.xlu0 %v2171, 32
        %v2198 = vpop.permute.xlu0 %2197
        %2199 = vrot.lane.b32.xlu0 %v2172, 32
        %v2200 = vpop.permute.xlu0 %2199
        %2201 = vrot.lane.b32.xlu0 %v2173, 32
        %v2202 = vpop.permute.xlu0 %2201
        %2203 = vrot.lane.b32.xlu0 %v2174, 32
        %v2204 = vpop.permute.xlu0 %2203
        %2205 = vrot.lane.b32.xlu0 %v2175, 32
        %v2206 = vpop.permute.xlu0 %2205
        %2207 = vrot.lane.b32.xlu0 %v2176, 32
        %v2208 = vpop.permute.xlu0 %2207
        %vm2225 = vcmask 392448
        %2226 = vst.msk [vmem:[#allocation3] sm:$0xff] %vm2225, %v2178
        %2227 = vst.msk [vmem:[#allocation3 + $0x10] sm:$0xff] %vm2225, %v2180
        %2228 = vst.msk [vmem:[#allocation3 + $0x20] sm:$0xff] %vm2225, %v2182
        %2229 = vst.msk [vmem:[#allocation3 + $0x30] sm:$0xff] %vm2225, %v2184
        %2230 = vst.msk [vmem:[#allocation3 + $0x40] sm:$0xff] %vm2225, %v2186
        %2231 = vst.msk [vmem:[#allocation3 + $0x50] sm:$0xff] %vm2225, %v2188
        %2232 = vst.msk [vmem:[#allocation3 + $0x60] sm:$0xff] %vm2225, %v2190
        %2233 = vst.msk [vmem:[#allocation3 + $0x70] sm:$0xff] %vm2225, %v2192
        %2234 = vst.msk [vmem:[#allocation3 + $0x80] sm:$0xff] %vm2225, %v2194
        %2235 = vst.msk [vmem:[#allocation3 + $0x90] sm:$0xff] %vm2225, %v2196
        %2236 = vst.msk [vmem:[#allocation3 + $0xa0] sm:$0xff] %vm2225, %v2198
        %2237 = vst.msk [vmem:[#allocation3 + $0xb0] sm:$0xff] %vm2225, %v2200
        %2238 = vst.msk [vmem:[#allocation3 + $0xc0] sm:$0xff] %vm2225, %v2202
        %2239 = vst.msk [vmem:[#allocation3 + $0xd0] sm:$0xff] %vm2225, %v2204
        %2240 = vst.msk [vmem:[#allocation3 + $0xe0] sm:$0xff] %vm2225, %v2206
        %2241 = vst.msk [vmem:[#allocation3 + $0xf0] sm:$0xff] %vm2225, %v2208
        %v2242 = vld [vmem:[%s1106] sm:$0xf]
        %v2243 = vld [vmem:[%s1106 + $0x4] sm:$0xf]
        %v2244 = vld [vmem:[%s1106 + $0xc] sm:$0xf]
        %v2245 = vld [vmem:[%s1106 + $0x10] sm:$0xf]
        %v2246 = vld [vmem:[%s1106 + $0x18] sm:$0xf]
        %v2247 = vld [vmem:[%s1106 + $0x1c] sm:$0xf]
        %v2248 = vld [vmem:[%s1106 + $0x24] sm:$0xf]
        %v2249 = vld [vmem:[%s1106 + $0x28] sm:$0xf]
        %v2250 = vld [vmem:[%s1106 + $0x30] sm:$0xf]
        %v2251 = vld [vmem:[%s1106 + $0x34] sm:$0xf]
        %v2252 = vld [vmem:[%s1106 + $0x3c] sm:$0xf]
        %v2253 = vld [vmem:[%s1106 + $0x40] sm:$0xf]
        %v2254 = vld [vmem:[%s1106 + $0x48] sm:$0xf]
        %v2255 = vld [vmem:[%s1106 + $0x4c] sm:$0xf]
        %v2256 = vld [vmem:[%s1106 + $0x54] sm:$0xf]
        %v2257 = vld [vmem:[%s1106 + $0x58] sm:$0xf]
        %v2258 = vld [vmem:[%s1106 + $0x60] sm:$0xf]
        %v2259 = vld [vmem:[%s1106 + $0x64] sm:$0xf]
        %v2260 = vld [vmem:[%s1106 + $0x6c] sm:$0xf]
        %v2261 = vld [vmem:[%s1106 + $0x70] sm:$0xf]
        %v2262 = vld [vmem:[%s1106 + $0x78] sm:$0xf]
        %v2263 = vld [vmem:[%s1106 + $0x7c] sm:$0xf]
        %v2264 = vld [vmem:[%s1106 + $0x84] sm:$0xf]
        %v2265 = vld [vmem:[%s1106 + $0x88] sm:$0xf]
        %v2266 = vld [vmem:[%s1106 + $0x90] sm:$0xf]
        %v2267 = vld [vmem:[%s1106 + $0x94] sm:$0xf]
        %v2268 = vld [vmem:[%s1106 + $0x9c] sm:$0xf]
        %v2269 = vld [vmem:[%s1106 + $0xa0] sm:$0xf]
        %v2270 = vld [vmem:[%s1106 + $0xa8] sm:$0xf]
        %v2271 = vld [vmem:[%s1106 + $0xac] sm:$0xf]
        %v2272 = vld [vmem:[%s1106 + $0xb4] sm:$0xf]
        %v2273 = vld [vmem:[%s1106 + $0xb8] sm:$0xf]
        %v2306 = vunpack.c.l.b16 %v2242
        %v2307 = vunpack.c.l.b16 %v2243
        %v2308 = vunpack.c.l.b16 %v2244
        %v2309 = vunpack.c.l.b16 %v2245
        %v2310 = vunpack.c.l.b16 %v2246
        %v2311 = vunpack.c.l.b16 %v2247
        %v2312 = vunpack.c.l.b16 %v2248
        %v2313 = vunpack.c.l.b16 %v2249
        %v2314 = vunpack.c.l.b16 %v2250
        %v2315 = vunpack.c.l.b16 %v2251
        %v2316 = vunpack.c.l.b16 %v2252
        %v2317 = vunpack.c.l.b16 %v2253
        %v2318 = vunpack.c.l.b16 %v2254
        %v2319 = vunpack.c.l.b16 %v2255
        %v2320 = vunpack.c.l.b16 %v2256
        %v2321 = vunpack.c.l.b16 %v2257
        %v2322 = vunpack.c.l.b16 %v2258
        %v2323 = vunpack.c.l.b16 %v2259
        %v2324 = vunpack.c.l.b16 %v2260
        %v2325 = vunpack.c.l.b16 %v2261
        %v2326 = vunpack.c.l.b16 %v2262
        %v2327 = vunpack.c.l.b16 %v2263
        %v2328 = vunpack.c.l.b16 %v2264
        %v2329 = vunpack.c.l.b16 %v2265
        %v2330 = vunpack.c.l.b16 %v2266
        %v2331 = vunpack.c.l.b16 %v2267
        %v2332 = vunpack.c.l.b16 %v2268
        %v2333 = vunpack.c.l.b16 %v2269
        %v2334 = vunpack.c.l.b16 %v2270
        %v2335 = vunpack.c.l.b16 %v2271
        %v2336 = vunpack.c.l.b16 %v2272
        %v2337 = vunpack.c.l.b16 %v2273
        %v2338 = vpack.c.b16 %v2307, %v2306
        %v2339 = vpack.c.b16 %v2309, %v2308
        %v2340 = vpack.c.b16 %v2311, %v2310
        %v2341 = vpack.c.b16 %v2313, %v2312
        %v2342 = vpack.c.b16 %v2315, %v2314
        %v2343 = vpack.c.b16 %v2317, %v2316
        %v2344 = vpack.c.b16 %v2319, %v2318
        %v2345 = vpack.c.b16 %v2321, %v2320
        %v2346 = vpack.c.b16 %v2323, %v2322
        %v2347 = vpack.c.b16 %v2325, %v2324
        %v2348 = vpack.c.b16 %v2327, %v2326
        %v2349 = vpack.c.b16 %v2329, %v2328
        %v2350 = vpack.c.b16 %v2331, %v2330
        %v2351 = vpack.c.b16 %v2333, %v2332
        %v2352 = vpack.c.b16 %v2335, %v2334
        %v2353 = vpack.c.b16 %v2337, %v2336
        %2354 = vrot.lane.b32.xlu0 %v2338, 48
        %v2355 = vpop.permute.xlu0 %2354
        %2356 = vrot.lane.b32.xlu0 %v2339, 48
        %v2357 = vpop.permute.xlu0 %2356
        %2358 = vrot.lane.b32.xlu0 %v2340, 48
        %v2359 = vpop.permute.xlu0 %2358
        %2360 = vrot.lane.b32.xlu0 %v2341, 48
        %v2361 = vpop.permute.xlu0 %2360
        %2362 = vrot.lane.b32.xlu0 %v2342, 48
        %v2363 = vpop.permute.xlu0 %2362
        %2364 = vrot.lane.b32.xlu0 %v2343, 48
        %v2365 = vpop.permute.xlu0 %2364
        %2366 = vrot.lane.b32.xlu0 %v2344, 48
        %v2367 = vpop.permute.xlu0 %2366
        %2368 = vrot.lane.b32.xlu0 %v2345, 48
        %v2369 = vpop.permute.xlu0 %2368
        %2370 = vrot.lane.b32.xlu0 %v2346, 48
        %v2371 = vpop.permute.xlu0 %2370
        %2372 = vrot.lane.b32.xlu0 %v2347, 48
        %v2373 = vpop.permute.xlu0 %2372
        %2374 = vrot.lane.b32.xlu0 %v2348, 48
        %v2375 = vpop.permute.xlu0 %2374
        %2376 = vrot.lane.b32.xlu0 %v2349, 48
        %v2377 = vpop.permute.xlu0 %2376
        %2378 = vrot.lane.b32.xlu0 %v2350, 48
        %v2379 = vpop.permute.xlu0 %2378
        %2380 = vrot.lane.b32.xlu0 %v2351, 48
        %v2381 = vpop.permute.xlu0 %2380
        %2382 = vrot.lane.b32.xlu0 %v2352, 48
        %v2383 = vpop.permute.xlu0 %2382
        %2384 = vrot.lane.b32.xlu0 %v2353, 48
        %v2385 = vpop.permute.xlu0 %2384
        %vm2402 = vcmask 523648
        %2403 = vst.msk [vmem:[#allocation3] sm:$0xff] %vm2402, %v2355
        %2404 = vst.msk [vmem:[#allocation3 + $0x10] sm:$0xff] %vm2402, %v2357
        %2405 = vst.msk [vmem:[#allocation3 + $0x20] sm:$0xff] %vm2402, %v2359
        %2406 = vst.msk [vmem:[#allocation3 + $0x30] sm:$0xff] %vm2402, %v2361
        %2407 = vst.msk [vmem:[#allocation3 + $0x40] sm:$0xff] %vm2402, %v2363
        %2408 = vst.msk [vmem:[#allocation3 + $0x50] sm:$0xff] %vm2402, %v2365
        %2409 = vst.msk [vmem:[#allocation3 + $0x60] sm:$0xff] %vm2402, %v2367
        %2410 = vst.msk [vmem:[#allocation3 + $0x70] sm:$0xff] %vm2402, %v2369
        %2411 = vst.msk [vmem:[#allocation3 + $0x80] sm:$0xff] %vm2402, %v2371
        %2412 = vst.msk [vmem:[#allocation3 + $0x90] sm:$0xff] %vm2402, %v2373
        %2413 = vst.msk [vmem:[#allocation3 + $0xa0] sm:$0xff] %vm2402, %v2375
        %2414 = vst.msk [vmem:[#allocation3 + $0xb0] sm:$0xff] %vm2402, %v2377
        %2415 = vst.msk [vmem:[#allocation3 + $0xc0] sm:$0xff] %vm2402, %v2379
        %2416 = vst.msk [vmem:[#allocation3 + $0xd0] sm:$0xff] %vm2402, %v2381
        %2417 = vst.msk [vmem:[#allocation3 + $0xe0] sm:$0xff] %vm2402, %v2383
        %2418 = vst.msk [vmem:[#allocation3 + $0xf0] sm:$0xff] %vm2402, %v2385
        %v2419 = vld [vmem:[%s1106] sm:$0xf]
        %v2420 = vld [vmem:[%s1106 + $0x4] sm:$0xf]
        %v2421 = vld [vmem:[%s1106 + $0x8] sm:$0x1]
        %v2422 = vld [vmem:[%s1106 + $0xc] sm:$0xf]
        %v2423 = vld [vmem:[%s1106 + $0x10] sm:$0xf]
        %v2424 = vld [vmem:[%s1106 + $0x14] sm:$0x1]
        %v2425 = vld [vmem:[%s1106 + $0x18] sm:$0xf]
        %v2426 = vld [vmem:[%s1106 + $0x1c] sm:$0xf]
        %v2427 = vld [vmem:[%s1106 + $0x20] sm:$0x1]
        %v2428 = vld [vmem:[%s1106 + $0x24] sm:$0xf]
        %v2429 = vld [vmem:[%s1106 + $0x28] sm:$0xf]
        %v2430 = vld [vmem:[%s1106 + $0x2c] sm:$0x1]
        %v2431 = vld [vmem:[%s1106 + $0x30] sm:$0xf]
        %v2432 = vld [vmem:[%s1106 + $0x34] sm:$0xf]
        %v2433 = vld [vmem:[%s1106 + $0x38] sm:$0x1]
        %v2434 = vld [vmem:[%s1106 + $0x3c] sm:$0xf]
        %v2435 = vld [vmem:[%s1106 + $0x40] sm:$0xf]
        %v2436 = vld [vmem:[%s1106 + $0x44] sm:$0x1]
        %v2437 = vld [vmem:[%s1106 + $0x48] sm:$0xf]
        %v2438 = vld [vmem:[%s1106 + $0x4c] sm:$0xf]
        %v2439 = vld [vmem:[%s1106 + $0x50] sm:$0x1]
        %v2440 = vld [vmem:[%s1106 + $0x54] sm:$0xf]
        %v2441 = vld [vmem:[%s1106 + $0x58] sm:$0xf]
        %v2442 = vld [vmem:[%s1106 + $0x5c] sm:$0x1]
        %v2443 = vld [vmem:[%s1106 + $0x60] sm:$0xf]
        %v2444 = vld [vmem:[%s1106 + $0x64] sm:$0xf]
        %v2445 = vld [vmem:[%s1106 + $0x68] sm:$0x1]
        %v2446 = vld [vmem:[%s1106 + $0x6c] sm:$0xf]
        %v2447 = vld [vmem:[%s1106 + $0x70] sm:$0xf]
        %v2448 = vld [vmem:[%s1106 + $0x74] sm:$0x1]
        %v2449 = vld [vmem:[%s1106 + $0x78] sm:$0xf]
        %v2450 = vld [vmem:[%s1106 + $0x7c] sm:$0xf]
        %v2451 = vld [vmem:[%s1106 + $0x80] sm:$0x1]
        %v2452 = vld [vmem:[%s1106 + $0x84] sm:$0xf]
        %v2453 = vld [vmem:[%s1106 + $0x88] sm:$0xf]
        %v2454 = vld [vmem:[%s1106 + $0x8c] sm:$0x1]
        %v2455 = vld [vmem:[%s1106 + $0x90] sm:$0xf]
        %v2456 = vld [vmem:[%s1106 + $0x94] sm:$0xf]
        %v2457 = vld [vmem:[%s1106 + $0x98] sm:$0x1]
        %v2458 = vld [vmem:[%s1106 + $0x9c] sm:$0xf]
        %v2459 = vld [vmem:[%s1106 + $0xa0] sm:$0xf]
        %v2460 = vld [vmem:[%s1106 + $0xa4] sm:$0x1]
        %v2461 = vld [vmem:[%s1106 + $0xa8] sm:$0xf]
        %v2462 = vld [vmem:[%s1106 + $0xac] sm:$0xf]
        %v2463 = vld [vmem:[%s1106 + $0xb0] sm:$0x1]
        %v2464 = vld [vmem:[%s1106 + $0xb4] sm:$0xf]
        %v2465 = vld [vmem:[%s1106 + $0xb8] sm:$0xf]
        %v2466 = vld [vmem:[%s1106 + $0xbc] sm:$0x1]
        %v2468 = vshrl.u32 %v2419, 16
        %v2470 = vrot.slane %v2468, 4
        %v2471 = vshll.u32 %v2419, 16
        %v2473 = vrot.slane %v2471, 5
        %v2474 = vor.u32 %v2470, %v2473
        %v2475 = vrot.slane %v2474, 4
        %v2477 = vshll.u32 %v2420, 16
        %v2479 = vrot.slane %v2477, 5
        %v2480 = vsel %vm1420, %v2475, %v2479
        %v2481 = vshrl.u32 %v2420, 16
        %v2483 = vrot.slane %v2481, 4
        %v2484 = vor.u32 %v2483, %v2479
        %v2485 = vrot.slane %v2484, 4
        %v2487 = vshll.u32 %v2421, 16
        %v2489 = vrot.slane %v2487, 5
        %v2490 = vsel %vm1420, %v2485, %v2489
        %v2492 = vshrl.u32 %v2422, 16
        %v2494 = vrot.slane %v2492, 4
        %v2495 = vshll.u32 %v2422, 16
        %v2497 = vrot.slane %v2495, 5
        %v2498 = vor.u32 %v2494, %v2497
        %v2499 = vrot.slane %v2498, 4
        %v2501 = vshll.u32 %v2423, 16
        %v2503 = vrot.slane %v2501, 5
        %v2504 = vsel %vm1420, %v2499, %v2503
        %v2505 = vshrl.u32 %v2423, 16
        %v2507 = vrot.slane %v2505, 4
        %v2508 = vor.u32 %v2507, %v2503
        %v2509 = vrot.slane %v2508, 4
        %v2511 = vshll.u32 %v2424, 16
        %v2513 = vrot.slane %v2511, 5
        %v2514 = vsel %vm1420, %v2509, %v2513
        %v2516 = vshrl.u32 %v2425, 16
        %v2518 = vrot.slane %v2516, 4
        %v2519 = vshll.u32 %v2425, 16
        %v2521 = vrot.slane %v2519, 5
        %v2522 = vor.u32 %v2518, %v2521
        %v2523 = vrot.slane %v2522, 4
        %v2525 = vshll.u32 %v2426, 16
        %v2527 = vrot.slane %v2525, 5
        %v2528 = vsel %vm1420, %v2523, %v2527
        %v2529 = vshrl.u32 %v2426, 16
        %v2531 = vrot.slane %v2529, 4
        %v2532 = vor.u32 %v2531, %v2527
        %v2533 = vrot.slane %v2532, 4
        %v2535 = vshll.u32 %v2427, 16
        %v2537 = vrot.slane %v2535, 5
        %v2538 = vsel %vm1420, %v2533, %v2537
        %v2540 = vshrl.u32 %v2428, 16
        %v2542 = vrot.slane %v2540, 4
        %v2543 = vshll.u32 %v2428, 16
        %v2545 = vrot.slane %v2543, 5
        %v2546 = vor.u32 %v2542, %v2545
        %v2547 = vrot.slane %v2546, 4
        %v2549 = vshll.u32 %v2429, 16
        %v2551 = vrot.slane %v2549, 5
        %v2552 = vsel %vm1420, %v2547, %v2551
        %v2553 = vshrl.u32 %v2429, 16
        %v2555 = vrot.slane %v2553, 4
        %v2556 = vor.u32 %v2555, %v2551
        %v2557 = vrot.slane %v2556, 4
        %v2559 = vshll.u32 %v2430, 16
        %v2561 = vrot.slane %v2559, 5
        %v2562 = vsel %vm1420, %v2557, %v2561
        %v2564 = vshrl.u32 %v2431, 16
        %v2566 = vrot.slane %v2564, 4
        %v2567 = vshll.u32 %v2431, 16
        %v2569 = vrot.slane %v2567, 5
        %v2570 = vor.u32 %v2566, %v2569
        %v2571 = vrot.slane %v2570, 4
        %v2573 = vshll.u32 %v2432, 16
        %v2575 = vrot.slane %v2573, 5
        %v2576 = vsel %vm1420, %v2571, %v2575
        %v2577 = vshrl.u32 %v2432, 16
        %v2579 = vrot.slane %v2577, 4
        %v2580 = vor.u32 %v2579, %v2575
        %v2581 = vrot.slane %v2580, 4
        %v2583 = vshll.u32 %v2433, 16
        %v2585 = vrot.slane %v2583, 5
        %v2586 = vsel %vm1420, %v2581, %v2585
        %v2588 = vshrl.u32 %v2434, 16
        %v2590 = vrot.slane %v2588, 4
        %v2591 = vshll.u32 %v2434, 16
        %v2593 = vrot.slane %v2591, 5
        %v2594 = vor.u32 %v2590, %v2593
        %v2595 = vrot.slane %v2594, 4
        %v2597 = vshll.u32 %v2435, 16
        %v2599 = vrot.slane %v2597, 5
        %v2600 = vsel %vm1420, %v2595, %v2599
        %v2601 = vshrl.u32 %v2435, 16
        %v2603 = vrot.slane %v2601, 4
        %v2604 = vor.u32 %v2603, %v2599
        %v2605 = vrot.slane %v2604, 4
        %v2607 = vshll.u32 %v2436, 16
        %v2609 = vrot.slane %v2607, 5
        %v2610 = vsel %vm1420, %v2605, %v2609
        %v2612 = vshrl.u32 %v2437, 16
        %v2614 = vrot.slane %v2612, 4
        %v2615 = vshll.u32 %v2437, 16
        %v2617 = vrot.slane %v2615, 5
        %v2618 = vor.u32 %v2614, %v2617
        %v2619 = vrot.slane %v2618, 4
        %v2621 = vshll.u32 %v2438, 16
        %v2623 = vrot.slane %v2621, 5
        %v2624 = vsel %vm1420, %v2619, %v2623
        %v2625 = vshrl.u32 %v2438, 16
        %v2627 = vrot.slane %v2625, 4
        %v2628 = vor.u32 %v2627, %v2623
        %v2629 = vrot.slane %v2628, 4
        %v2631 = vshll.u32 %v2439, 16
        %v2633 = vrot.slane %v2631, 5
        %v2634 = vsel %vm1420, %v2629, %v2633
        %v2636 = vshrl.u32 %v2440, 16
        %v2638 = vrot.slane %v2636, 4
        %v2639 = vshll.u32 %v2440, 16
        %v2641 = vrot.slane %v2639, 5
        %v2642 = vor.u32 %v2638, %v2641
        %v2643 = vrot.slane %v2642, 4
        %v2645 = vshll.u32 %v2441, 16
        %v2647 = vrot.slane %v2645, 5
        %v2648 = vsel %vm1420, %v2643, %v2647
        %v2649 = vshrl.u32 %v2441, 16
        %v2651 = vrot.slane %v2649, 4
        %v2652 = vor.u32 %v2651, %v2647
        %v2653 = vrot.slane %v2652, 4
        %v2655 = vshll.u32 %v2442, 16
        %v2657 = vrot.slane %v2655, 5
        %v2658 = vsel %vm1420, %v2653, %v2657
        %v2660 = vshrl.u32 %v2443, 16
        %v2662 = vrot.slane %v2660, 4
        %v2663 = vshll.u32 %v2443, 16
        %v2665 = vrot.slane %v2663, 5
        %v2666 = vor.u32 %v2662, %v2665
        %v2667 = vrot.slane %v2666, 4
        %v2669 = vshll.u32 %v2444, 16
        %v2671 = vrot.slane %v2669, 5
        %v2672 = vsel %vm1420, %v2667, %v2671
        %v2673 = vshrl.u32 %v2444, 16
        %v2675 = vrot.slane %v2673, 4
        %v2676 = vor.u32 %v2675, %v2671
        %v2677 = vrot.slane %v2676, 4
        %v2679 = vshll.u32 %v2445, 16
        %v2681 = vrot.slane %v2679, 5
        %v2682 = vsel %vm1420, %v2677, %v2681
        %v2684 = vshrl.u32 %v2446, 16
        %v2686 = vrot.slane %v2684, 4
        %v2687 = vshll.u32 %v2446, 16
        %v2689 = vrot.slane %v2687, 5
        %v2690 = vor.u32 %v2686, %v2689
        %v2691 = vrot.slane %v2690, 4
        %v2693 = vshll.u32 %v2447, 16
        %v2695 = vrot.slane %v2693, 5
        %v2696 = vsel %vm1420, %v2691, %v2695
        %v2697 = vshrl.u32 %v2447, 16
        %v2699 = vrot.slane %v2697, 4
        %v2700 = vor.u32 %v2699, %v2695
        %v2701 = vrot.slane %v2700, 4
        %v2703 = vshll.u32 %v2448, 16
        %v2705 = vrot.slane %v2703, 5
        %v2706 = vsel %vm1420, %v2701, %v2705
        %v2708 = vshrl.u32 %v2449, 16
        %v2710 = vrot.slane %v2708, 4
        %v2711 = vshll.u32 %v2449, 16
        %v2713 = vrot.slane %v2711, 5
        %v2714 = vor.u32 %v2710, %v2713
        %v2715 = vrot.slane %v2714, 4
        %v2717 = vshll.u32 %v2450, 16
        %v2719 = vrot.slane %v2717, 5
        %v2720 = vsel %vm1420, %v2715, %v2719
        %v2721 = vshrl.u32 %v2450, 16
        %v2723 = vrot.slane %v2721, 4
        %v2724 = vor.u32 %v2723, %v2719
        %v2725 = vrot.slane %v2724, 4
        %v2727 = vshll.u32 %v2451, 16
        %v2729 = vrot.slane %v2727, 5
        %v2730 = vsel %vm1420, %v2725, %v2729
        %v2732 = vshrl.u32 %v2452, 16
        %v2734 = vrot.slane %v2732, 4
        %v2735 = vshll.u32 %v2452, 16
        %v2737 = vrot.slane %v2735, 5
        %v2738 = vor.u32 %v2734, %v2737
        %v2739 = vrot.slane %v2738, 4
        %v2741 = vshll.u32 %v2453, 16
        %v2743 = vrot.slane %v2741, 5
        %v2744 = vsel %vm1420, %v2739, %v2743
        %v2745 = vshrl.u32 %v2453, 16
        %v2747 = vrot.slane %v2745, 4
        %v2748 = vor.u32 %v2747, %v2743
        %v2749 = vrot.slane %v2748, 4
        %v2751 = vshll.u32 %v2454, 16
        %v2753 = vrot.slane %v2751, 5
        %v2754 = vsel %vm1420, %v2749, %v2753
        %v2756 = vshrl.u32 %v2455, 16
        %v2758 = vrot.slane %v2756, 4
        %v2759 = vshll.u32 %v2455, 16
        %v2761 = vrot.slane %v2759, 5
        %v2762 = vor.u32 %v2758, %v2761
        %v2763 = vrot.slane %v2762, 4
        %v2765 = vshll.u32 %v2456, 16
        %v2767 = vrot.slane %v2765, 5
        %v2768 = vsel %vm1420, %v2763, %v2767
        %v2769 = vshrl.u32 %v2456, 16
        %v2771 = vrot.slane %v2769, 4
        %v2772 = vor.u32 %v2771, %v2767
        %v2773 = vrot.slane %v2772, 4
        %v2775 = vshll.u32 %v2457, 16
        %v2777 = vrot.slane %v2775, 5
        %v2778 = vsel %vm1420, %v2773, %v2777
        %v2780 = vshrl.u32 %v2458, 16
        %v2782 = vrot.slane %v2780, 4
        %v2783 = vshll.u32 %v2458, 16
        %v2785 = vrot.slane %v2783, 5
        %v2786 = vor.u32 %v2782, %v2785
        %v2787 = vrot.slane %v2786, 4
        %v2789 = vshll.u32 %v2459, 16
        %v2791 = vrot.slane %v2789, 5
        %v2792 = vsel %vm1420, %v2787, %v2791
        %v2793 = vshrl.u32 %v2459, 16
        %v2795 = vrot.slane %v2793, 4
        %v2796 = vor.u32 %v2795, %v2791
        %v2797 = vrot.slane %v2796, 4
        %v2799 = vshll.u32 %v2460, 16
        %v2801 = vrot.slane %v2799, 5
        %v2802 = vsel %vm1420, %v2797, %v2801
        %v2804 = vshrl.u32 %v2461, 16
        %v2806 = vrot.slane %v2804, 4
        %v2807 = vshll.u32 %v2461, 16
        %v2809 = vrot.slane %v2807, 5
        %v2810 = vor.u32 %v2806, %v2809
        %v2811 = vrot.slane %v2810, 4
        %v2813 = vshll.u32 %v2462, 16
        %v2815 = vrot.slane %v2813, 5
        %v2816 = vsel %vm1420, %v2811, %v2815
        %v2817 = vshrl.u32 %v2462, 16
        %v2819 = vrot.slane %v2817, 4
        %v2820 = vor.u32 %v2819, %v2815
        %v2821 = vrot.slane %v2820, 4
        %v2823 = vshll.u32 %v2463, 16
        %v2825 = vrot.slane %v2823, 5
        %v2826 = vsel %vm1420, %v2821, %v2825
        %v2828 = vshrl.u32 %v2464, 16
        %v2830 = vrot.slane %v2828, 4
        %v2831 = vshll.u32 %v2464, 16
        %v2833 = vrot.slane %v2831, 5
        %v2834 = vor.u32 %v2830, %v2833
        %v2835 = vrot.slane %v2834, 4
        %v2837 = vshll.u32 %v2465, 16
        %v2839 = vrot.slane %v2837, 5
        %v2840 = vsel %vm1420, %v2835, %v2839
        %v2841 = vshrl.u32 %v2465, 16
        %v2843 = vrot.slane %v2841, 4
        %v2844 = vor.u32 %v2843, %v2839
        %v2845 = vrot.slane %v2844, 4
        %v2847 = vshll.u32 %v2466, 16
        %v2849 = vrot.slane %v2847, 5
        %v2850 = vsel %vm1420, %v2845, %v2849
        %v2851 = vunpack.c.l.b16 %v2480
        %v2852 = vunpack.c.l.b16 %v2490
        %v2853 = vunpack.c.l.b16 %v2504
        %v2854 = vunpack.c.l.b16 %v2514
        %v2855 = vunpack.c.l.b16 %v2528
        %v2856 = vunpack.c.l.b16 %v2538
        %v2857 = vunpack.c.l.b16 %v2552
        %v2858 = vunpack.c.l.b16 %v2562
        %v2859 = vunpack.c.l.b16 %v2576
        %v2860 = vunpack.c.l.b16 %v2586
        %v2861 = vunpack.c.l.b16 %v2600
        %v2862 = vunpack.c.l.b16 %v2610
        %v2863 = vunpack.c.l.b16 %v2624
        %v2864 = vunpack.c.l.b16 %v2634
        %v2865 = vunpack.c.l.b16 %v2648
        %v2866 = vunpack.c.l.b16 %v2658
        %v2867 = vunpack.c.l.b16 %v2672
        %v2868 = vunpack.c.l.b16 %v2682
        %v2869 = vunpack.c.l.b16 %v2696
        %v2870 = vunpack.c.l.b16 %v2706
        %v2871 = vunpack.c.l.b16 %v2720
        %v2872 = vunpack.c.l.b16 %v2730
        %v2873 = vunpack.c.l.b16 %v2744
        %v2874 = vunpack.c.l.b16 %v2754
        %v2875 = vunpack.c.l.b16 %v2768
        %v2876 = vunpack.c.l.b16 %v2778
        %v2877 = vunpack.c.l.b16 %v2792
        %v2878 = vunpack.c.l.b16 %v2802
        %v2879 = vunpack.c.l.b16 %v2816
        %v2880 = vunpack.c.l.b16 %v2826
        %v2881 = vunpack.c.l.b16 %v2840
        %v2882 = vunpack.c.l.b16 %v2850
        %v2883 = vpack.c.b16 %v2852, %v2851
        %v2884 = vpack.c.b16 %v2854, %v2853
        %v2885 = vpack.c.b16 %v2856, %v2855
        %v2886 = vpack.c.b16 %v2858, %v2857
        %v2887 = vpack.c.b16 %v2860, %v2859
        %v2888 = vpack.c.b16 %v2862, %v2861
        %v2889 = vpack.c.b16 %v2864, %v2863
        %v2890 = vpack.c.b16 %v2866, %v2865
        %v2891 = vpack.c.b16 %v2868, %v2867
        %v2892 = vpack.c.b16 %v2870, %v2869
        %v2893 = vpack.c.b16 %v2872, %v2871
        %v2894 = vpack.c.b16 %v2874, %v2873
        %v2895 = vpack.c.b16 %v2876, %v2875
        %v2896 = vpack.c.b16 %v2878, %v2877
        %v2897 = vpack.c.b16 %v2880, %v2879
        %v2898 = vpack.c.b16 %v2882, %v2881
        %2899 = vrot.lane.b32.xlu0 %v2883, 64
        %v2900 = vpop.permute.xlu0 %2899
        %2901 = vrot.lane.b32.xlu0 %v2884, 64
        %v2902 = vpop.permute.xlu0 %2901
        %2903 = vrot.lane.b32.xlu0 %v2885, 64
        %v2904 = vpop.permute.xlu0 %2903
        %2905 = vrot.lane.b32.xlu0 %v2886, 64
        %v2906 = vpop.permute.xlu0 %2905
        %2907 = vrot.lane.b32.xlu0 %v2887, 64
        %v2908 = vpop.permute.xlu0 %2907
        %2909 = vrot.lane.b32.xlu0 %v2888, 64
        %v2910 = vpop.permute.xlu0 %2909
        %2911 = vrot.lane.b32.xlu0 %v2889, 64
        %v2912 = vpop.permute.xlu0 %2911
        %2913 = vrot.lane.b32.xlu0 %v2890, 64
        %v2914 = vpop.permute.xlu0 %2913
        %2915 = vrot.lane.b32.xlu0 %v2891, 64
        %v2916 = vpop.permute.xlu0 %2915
        %2917 = vrot.lane.b32.xlu0 %v2892, 64
        %v2918 = vpop.permute.xlu0 %2917
        %2919 = vrot.lane.b32.xlu0 %v2893, 64
        %v2920 = vpop.permute.xlu0 %2919
        %2921 = vrot.lane.b32.xlu0 %v2894, 64
        %v2922 = vpop.permute.xlu0 %2921
        %2923 = vrot.lane.b32.xlu0 %v2895, 64
        %v2924 = vpop.permute.xlu0 %2923
        %2925 = vrot.lane.b32.xlu0 %v2896, 64
        %v2926 = vpop.permute.xlu0 %2925
        %2927 = vrot.lane.b32.xlu0 %v2897, 64
        %v2928 = vpop.permute.xlu0 %2927
        %2929 = vrot.lane.b32.xlu0 %v2898, 64
        %v2930 = vpop.permute.xlu0 %2929
        %vm2947 = vcmask 654848
        %2948 = vst.msk [vmem:[#allocation3] sm:$0xff] %vm2947, %v2900
        %2949 = vst.msk [vmem:[#allocation3 + $0x10] sm:$0xff] %vm2947, %v2902
        %2950 = vst.msk [vmem:[#allocation3 + $0x20] sm:$0xff] %vm2947, %v2904
        %2951 = vst.msk [vmem:[#allocation3 + $0x30] sm:$0xff] %vm2947, %v2906
        %2952 = vst.msk [vmem:[#allocation3 + $0x40] sm:$0xff] %vm2947, %v2908
        %2953 = vst.msk [vmem:[#allocation3 + $0x50] sm:$0xff] %vm2947, %v2910
        %2954 = vst.msk [vmem:[#allocation3 + $0x60] sm:$0xff] %vm2947, %v2912
        %2955 = vst.msk [vmem:[#allocation3 + $0x70] sm:$0xff] %vm2947, %v2914
        %2956 = vst.msk [vmem:[#allocation3 + $0x80] sm:$0xff] %vm2947, %v2916
        %2957 = vst.msk [vmem:[#allocation3 + $0x90] sm:$0xff] %vm2947, %v2918
        %2958 = vst.msk [vmem:[#allocation3 + $0xa0] sm:$0xff] %vm2947, %v2920
        %2959 = vst.msk [vmem:[#allocation3 + $0xb0] sm:$0xff] %vm2947, %v2922
        %2960 = vst.msk [vmem:[#allocation3 + $0xc0] sm:$0xff] %vm2947, %v2924
        %2961 = vst.msk [vmem:[#allocation3 + $0xd0] sm:$0xff] %vm2947, %v2926
        %2962 = vst.msk [vmem:[#allocation3 + $0xe0] sm:$0xff] %vm2947, %v2928
        %2963 = vst.msk [vmem:[#allocation3 + $0xf0] sm:$0xff] %vm2947, %v2930
        %v2964 = vld [vmem:[%s1106] sm:$0xe]
        %v2965 = vld [vmem:[%s1106 + $0x4] sm:$0xf]
        %v2966 = vld [vmem:[%s1106 + $0x8] sm:$0x1]
        %v2967 = vld [vmem:[%s1106 + $0xc] sm:$0xe]
        %v2968 = vld [vmem:[%s1106 + $0x10] sm:$0xf]
        %v2969 = vld [vmem:[%s1106 + $0x14] sm:$0x1]
        %v2970 = vld [vmem:[%s1106 + $0x18] sm:$0xe]
        %v2971 = vld [vmem:[%s1106 + $0x1c] sm:$0xf]
        %v2972 = vld [vmem:[%s1106 + $0x20] sm:$0x1]
        %v2973 = vld [vmem:[%s1106 + $0x24] sm:$0xe]
        %v2974 = vld [vmem:[%s1106 + $0x28] sm:$0xf]
        %v2975 = vld [vmem:[%s1106 + $0x2c] sm:$0x1]
        %v2976 = vld [vmem:[%s1106 + $0x30] sm:$0xe]
        %v2977 = vld [vmem:[%s1106 + $0x34] sm:$0xf]
        %v2978 = vld [vmem:[%s1106 + $0x38] sm:$0x1]
        %v2979 = vld [vmem:[%s1106 + $0x3c] sm:$0xe]
        %v2980 = vld [vmem:[%s1106 + $0x40] sm:$0xf]
        %v2981 = vld [vmem:[%s1106 + $0x44] sm:$0x1]
        %v2982 = vld [vmem:[%s1106 + $0x48] sm:$0xe]
        %v2983 = vld [vmem:[%s1106 + $0x4c] sm:$0xf]
        %v2984 = vld [vmem:[%s1106 + $0x50] sm:$0x1]
        %v2985 = vld [vmem:[%s1106 + $0x54] sm:$0xe]
        %v2986 = vld [vmem:[%s1106 + $0x58] sm:$0xf]
        %v2987 = vld [vmem:[%s1106 + $0x5c] sm:$0x1]
        %v2988 = vld [vmem:[%s1106 + $0x60] sm:$0xe]
        %v2989 = vld [vmem:[%s1106 + $0x64] sm:$0xf]
        %v2990 = vld [vmem:[%s1106 + $0x68] sm:$0x1]
        %v2991 = vld [vmem:[%s1106 + $0x6c] sm:$0xe]
        %v2992 = vld [vmem:[%s1106 + $0x70] sm:$0xf]
        %v2993 = vld [vmem:[%s1106 + $0x74] sm:$0x1]
        %v2994 = vld [vmem:[%s1106 + $0x78] sm:$0xe]
        %v2995 = vld [vmem:[%s1106 + $0x7c] sm:$0xf]
        %v2996 = vld [vmem:[%s1106 + $0x80] sm:$0x1]
        %v2997 = vld [vmem:[%s1106 + $0x84] sm:$0xe]
        %v2998 = vld [vmem:[%s1106 + $0x88] sm:$0xf]
        %v2999 = vld [vmem:[%s1106 + $0x8c] sm:$0x1]
        %v3000 = vld [vmem:[%s1106 + $0x90] sm:$0xe]
        %v3001 = vld [vmem:[%s1106 + $0x94] sm:$0xf]
        %v3002 = vld [vmem:[%s1106 + $0x98] sm:$0x1]
        %v3003 = vld [vmem:[%s1106 + $0x9c] sm:$0xe]
        %v3004 = vld [vmem:[%s1106 + $0xa0] sm:$0xf]
        %v3005 = vld [vmem:[%s1106 + $0xa4] sm:$0x1]
        %v3006 = vld [vmem:[%s1106 + $0xa8] sm:$0xe]
        %v3007 = vld [vmem:[%s1106 + $0xac] sm:$0xf]
        %v3008 = vld [vmem:[%s1106 + $0xb0] sm:$0x1]
        %v3009 = vld [vmem:[%s1106 + $0xb4] sm:$0xe]
        %v3010 = vld [vmem:[%s1106 + $0xb8] sm:$0xf]
        %v3011 = vld [vmem:[%s1106 + $0xbc] sm:$0x1]
        %v3060 = vrot.slane %v2964, 5
        %v3061 = vrot.slane %v3060, 4
        %v3062 = vrot.slane %v2965, 5
        %v3063 = vsel %vm2016, %v3061, %v3062
        %v3064 = vrot.slane %v3062, 4
        %v3065 = vrot.slane %v2966, 5
        %v3066 = vsel %vm2016, %v3064, %v3065
        %v3067 = vrot.slane %v2967, 5
        %v3068 = vrot.slane %v3067, 4
        %v3069 = vrot.slane %v2968, 5
        %v3070 = vsel %vm2016, %v3068, %v3069
        %v3071 = vrot.slane %v3069, 4
        %v3072 = vrot.slane %v2969, 5
        %v3073 = vsel %vm2016, %v3071, %v3072
        %v3074 = vrot.slane %v2970, 5
        %v3075 = vrot.slane %v3074, 4
        %v3076 = vrot.slane %v2971, 5
        %v3077 = vsel %vm2016, %v3075, %v3076
        %v3078 = vrot.slane %v3076, 4
        %v3079 = vrot.slane %v2972, 5
        %v3080 = vsel %vm2016, %v3078, %v3079
        %v3081 = vrot.slane %v2973, 5
        %v3082 = vrot.slane %v3081, 4
        %v3083 = vrot.slane %v2974, 5
        %v3084 = vsel %vm2016, %v3082, %v3083
        %v3085 = vrot.slane %v3083, 4
        %v3086 = vrot.slane %v2975, 5
        %v3087 = vsel %vm2016, %v3085, %v3086
        %v3088 = vrot.slane %v2976, 5
        %v3089 = vrot.slane %v3088, 4
        %v3090 = vrot.slane %v2977, 5
        %v3091 = vsel %vm2016, %v3089, %v3090
        %v3092 = vrot.slane %v3090, 4
        %v3093 = vrot.slane %v2978, 5
        %v3094 = vsel %vm2016, %v3092, %v3093
        %v3095 = vrot.slane %v2979, 5
        %v3096 = vrot.slane %v3095, 4
        %v3097 = vrot.slane %v2980, 5
        %v3098 = vsel %vm2016, %v3096, %v3097
        %v3099 = vrot.slane %v3097, 4
        %v3100 = vrot.slane %v2981, 5
        %v3101 = vsel %vm2016, %v3099, %v3100
        %v3102 = vrot.slane %v2982, 5
        %v3103 = vrot.slane %v3102, 4
        %v3104 = vrot.slane %v2983, 5
        %v3105 = vsel %vm2016, %v3103, %v3104
        %v3106 = vrot.slane %v3104, 4
        %v3107 = vrot.slane %v2984, 5
        %v3108 = vsel %vm2016, %v3106, %v3107
        %v3109 = vrot.slane %v2985, 5
        %v3110 = vrot.slane %v3109, 4
        %v3111 = vrot.slane %v2986, 5
        %v3112 = vsel %vm2016, %v3110, %v3111
        %v3113 = vrot.slane %v3111, 4
        %v3114 = vrot.slane %v2987, 5
        %v3115 = vsel %vm2016, %v3113, %v3114
        %v3116 = vrot.slane %v2988, 5
        %v3117 = vrot.slane %v3116, 4
        %v3118 = vrot.slane %v2989, 5
        %v3119 = vsel %vm2016, %v3117, %v3118
        %v3120 = vrot.slane %v3118, 4
        %v3121 = vrot.slane %v2990, 5
        %v3122 = vsel %vm2016, %v3120, %v3121
        %v3123 = vrot.slane %v2991, 5
        %v3124 = vrot.slane %v3123, 4
        %v3125 = vrot.slane %v2992, 5
        %v3126 = vsel %vm2016, %v3124, %v3125
        %v3127 = vrot.slane %v3125, 4
        %v3128 = vrot.slane %v2993, 5
        %v3129 = vsel %vm2016, %v3127, %v3128
        %v3130 = vrot.slane %v2994, 5
        %v3131 = vrot.slane %v3130, 4
        %v3132 = vrot.slane %v2995, 5
        %v3133 = vsel %vm2016, %v3131, %v3132
        %v3134 = vrot.slane %v3132, 4
        %v3135 = vrot.slane %v2996, 5
        %v3136 = vsel %vm2016, %v3134, %v3135
        %v3137 = vrot.slane %v2997, 5
        %v3138 = vrot.slane %v3137, 4
        %v3139 = vrot.slane %v2998, 5
        %v3140 = vsel %vm2016, %v3138, %v3139
        %v3141 = vrot.slane %v3139, 4
        %v3142 = vrot.slane %v2999, 5
        %v3143 = vsel %vm2016, %v3141, %v3142
        %v3144 = vrot.slane %v3000, 5
        %v3145 = vrot.slane %v3144, 4
        %v3146 = vrot.slane %v3001, 5
        %v3147 = vsel %vm2016, %v3145, %v3146
        %v3148 = vrot.slane %v3146, 4
        %v3149 = vrot.slane %v3002, 5
        %v3150 = vsel %vm2016, %v3148, %v3149
        %v3151 = vrot.slane %v3003, 5
        %v3152 = vrot.slane %v3151, 4
        %v3153 = vrot.slane %v3004, 5
        %v3154 = vsel %vm2016, %v3152, %v3153
        %v3155 = vrot.slane %v3153, 4
        %v3156 = vrot.slane %v3005, 5
        %v3157 = vsel %vm2016, %v3155, %v3156
        %v3158 = vrot.slane %v3006, 5
        %v3159 = vrot.slane %v3158, 4
        %v3160 = vrot.slane %v3007, 5
        %v3161 = vsel %vm2016, %v3159, %v3160
        %v3162 = vrot.slane %v3160, 4
        %v3163 = vrot.slane %v3008, 5
        %v3164 = vsel %vm2016, %v3162, %v3163
        %v3165 = vrot.slane %v3009, 5
        %v3166 = vrot.slane %v3165, 4
        %v3167 = vrot.slane %v3010, 5
        %v3168 = vsel %vm2016, %v3166, %v3167
        %v3169 = vrot.slane %v3167, 4
        %v3170 = vrot.slane %v3011, 5
        %v3171 = vsel %vm2016, %v3169, %v3170
        %v3172 = vunpack.c.l.b16 %v3063
        %v3173 = vunpack.c.l.b16 %v3066
        %v3174 = vunpack.c.l.b16 %v3070
        %v3175 = vunpack.c.l.b16 %v3073
        %v3176 = vunpack.c.l.b16 %v3077
        %v3177 = vunpack.c.l.b16 %v3080
        %v3178 = vunpack.c.l.b16 %v3084
        %v3179 = vunpack.c.l.b16 %v3087
        %v3180 = vunpack.c.l.b16 %v3091
        %v3181 = vunpack.c.l.b16 %v3094
        %v3182 = vunpack.c.l.b16 %v3098
        %v3183 = vunpack.c.l.b16 %v3101
        %v3184 = vunpack.c.l.b16 %v3105
        %v3185 = vunpack.c.l.b16 %v3108
        %v3186 = vunpack.c.l.b16 %v3112
        %v3187 = vunpack.c.l.b16 %v3115
        %v3188 = vunpack.c.l.b16 %v3119
        %v3189 = vunpack.c.l.b16 %v3122
        %v3190 = vunpack.c.l.b16 %v3126
        %v3191 = vunpack.c.l.b16 %v3129
        %v3192 = vunpack.c.l.b16 %v3133
        %v3193 = vunpack.c.l.b16 %v3136
        %v3194 = vunpack.c.l.b16 %v3140
        %v3195 = vunpack.c.l.b16 %v3143
        %v3196 = vunpack.c.l.b16 %v3147
        %v3197 = vunpack.c.l.b16 %v3150
        %v3198 = vunpack.c.l.b16 %v3154
        %v3199 = vunpack.c.l.b16 %v3157
        %v3200 = vunpack.c.l.b16 %v3161
        %v3201 = vunpack.c.l.b16 %v3164
        %v3202 = vunpack.c.l.b16 %v3168
        %v3203 = vunpack.c.l.b16 %v3171
        %v3204 = vpack.c.b16 %v3173, %v3172
        %v3205 = vpack.c.b16 %v3175, %v3174
        %v3206 = vpack.c.b16 %v3177, %v3176
        %v3207 = vpack.c.b16 %v3179, %v3178
        %v3208 = vpack.c.b16 %v3181, %v3180
        %v3209 = vpack.c.b16 %v3183, %v3182
        %v3210 = vpack.c.b16 %v3185, %v3184
        %v3211 = vpack.c.b16 %v3187, %v3186
        %v3212 = vpack.c.b16 %v3189, %v3188
        %v3213 = vpack.c.b16 %v3191, %v3190
        %v3214 = vpack.c.b16 %v3193, %v3192
        %v3215 = vpack.c.b16 %v3195, %v3194
        %v3216 = vpack.c.b16 %v3197, %v3196
        %v3217 = vpack.c.b16 %v3199, %v3198
        %v3218 = vpack.c.b16 %v3201, %v3200
        %v3219 = vpack.c.b16 %v3203, %v3202
        %3220 = vrot.lane.b32.xlu0 %v3204, 80
        %v3221 = vpop.permute.xlu0 %3220
        %3222 = vrot.lane.b32.xlu0 %v3205, 80
        %v3223 = vpop.permute.xlu0 %3222
        %3224 = vrot.lane.b32.xlu0 %v3206, 80
        %v3225 = vpop.permute.xlu0 %3224
        %3226 = vrot.lane.b32.xlu0 %v3207, 80
        %v3227 = vpop.permute.xlu0 %3226
        %3228 = vrot.lane.b32.xlu0 %v3208, 80
        %v3229 = vpop.permute.xlu0 %3228
        %3230 = vrot.lane.b32.xlu0 %v3209, 80
        %v3231 = vpop.permute.xlu0 %3230
        %3232 = vrot.lane.b32.xlu0 %v3210, 80
        %v3233 = vpop.permute.xlu0 %3232
        %3234 = vrot.lane.b32.xlu0 %v3211, 80
        %v3235 = vpop.permute.xlu0 %3234
        %3236 = vrot.lane.b32.xlu0 %v3212, 80
        %v3237 = vpop.permute.xlu0 %3236
        %3238 = vrot.lane.b32.xlu0 %v3213, 80
        %v3239 = vpop.permute.xlu0 %3238
        %3240 = vrot.lane.b32.xlu0 %v3214, 80
        %v3241 = vpop.permute.xlu0 %3240
        %3242 = vrot.lane.b32.xlu0 %v3215, 80
        %v3243 = vpop.permute.xlu0 %3242
        %3244 = vrot.lane.b32.xlu0 %v3216, 80
        %v3245 = vpop.permute.xlu0 %3244
        %3246 = vrot.lane.b32.xlu0 %v3217, 80
        %v3247 = vpop.permute.xlu0 %3246
        %3248 = vrot.lane.b32.xlu0 %v3218, 80
        %v3249 = vpop.permute.xlu0 %3248
        %3250 = vrot.lane.b32.xlu0 %v3219, 80
        %v3251 = vpop.permute.xlu0 %3250
        %vm3268 = vcmask 786048
        %3269 = vst.msk [vmem:[#allocation3] sm:$0xff] %vm3268, %v3221
        %3270 = vst.msk [vmem:[#allocation3 + $0x10] sm:$0xff] %vm3268, %v3223
        %3271 = vst.msk [vmem:[#allocation3 + $0x20] sm:$0xff] %vm3268, %v3225
        %3272 = vst.msk [vmem:[#allocation3 + $0x30] sm:$0xff] %vm3268, %v3227
        %3273 = vst.msk [vmem:[#allocation3 + $0x40] sm:$0xff] %vm3268, %v3229
        %3274 = vst.msk [vmem:[#allocation3 + $0x50] sm:$0xff] %vm3268, %v3231
        %3275 = vst.msk [vmem:[#allocation3 + $0x60] sm:$0xff] %vm3268, %v3233
        %3276 = vst.msk [vmem:[#allocation3 + $0x70] sm:$0xff] %vm3268, %v3235
        %3277 = vst.msk [vmem:[#allocation3 + $0x80] sm:$0xff] %vm3268, %v3237
        %3278 = vst.msk [vmem:[#allocation3 + $0x90] sm:$0xff] %vm3268, %v3239
        %3279 = vst.msk [vmem:[#allocation3 + $0xa0] sm:$0xff] %vm3268, %v3241
        %3280 = vst.msk [vmem:[#allocation3 + $0xb0] sm:$0xff] %vm3268, %v3243
        %3281 = vst.msk [vmem:[#allocation3 + $0xc0] sm:$0xff] %vm3268, %v3245
        %3282 = vst.msk [vmem:[#allocation3 + $0xd0] sm:$0xff] %vm3268, %v3247
        %3283 = vst.msk [vmem:[#allocation3 + $0xe0] sm:$0xff] %vm3268, %v3249
        %3284 = vst.msk [vmem:[#allocation3 + $0xf0] sm:$0xff] %vm3268, %v3251
        %s3285 = scalar_lea.vmem [#allocation2], 24
        %v3286 = vld [vmem:[%s3285] sm:$0xf]
        %v3287 = vld [vmem:[%s3285 + $0x4] sm:$0xf]
        %v3288 = vld [vmem:[%s3285 + $0xc] sm:$0xf]
        %v3289 = vld [vmem:[%s3285 + $0x10] sm:$0xf]
        %v3290 = vld [vmem:[%s3285 + $0x18] sm:$0xf]
        %v3291 = vld [vmem:[%s3285 + $0x1c] sm:$0xf]
        %v3292 = vld [vmem:[%s3285 + $0x24] sm:$0xf]
        %v3293 = vld [vmem:[%s3285 + $0x28] sm:$0xf]
        %v3294 = vld [vmem:[%s3285 + $0x30] sm:$0xf]
        %v3295 = vld [vmem:[%s3285 + $0x34] sm:$0xf]
        %v3296 = vld [vmem:[%s3285 + $0x3c] sm:$0xf]
        %v3297 = vld [vmem:[%s3285 + $0x40] sm:$0xf]
        %v3298 = vld [vmem:[%s3285 + $0x48] sm:$0xf]
        %v3299 = vld [vmem:[%s3285 + $0x4c] sm:$0xf]
        %v3300 = vld [vmem:[%s3285 + $0x54] sm:$0xf]
        %v3301 = vld [vmem:[%s3285 + $0x58] sm:$0xf]
        %v3302 = vld [vmem:[%s3285 + $0x60] sm:$0xf]
        %v3303 = vld [vmem:[%s3285 + $0x64] sm:$0xf]
        %v3304 = vld [vmem:[%s3285 + $0x6c] sm:$0xf]
        %v3305 = vld [vmem:[%s3285 + $0x70] sm:$0xf]
        %v3306 = vld [vmem:[%s3285 + $0x78] sm:$0xf]
        %v3307 = vld [vmem:[%s3285 + $0x7c] sm:$0xf]
        %v3308 = vld [vmem:[%s3285 + $0x84] sm:$0xf]
        %v3309 = vld [vmem:[%s3285 + $0x88] sm:$0xf]
        %v3310 = vld [vmem:[%s3285 + $0x90] sm:$0xf]
        %v3311 = vld [vmem:[%s3285 + $0x94] sm:$0xf]
        %v3312 = vld [vmem:[%s3285 + $0x9c] sm:$0xf]
        %v3313 = vld [vmem:[%s3285 + $0xa0] sm:$0xf]
        %v3314 = vld [vmem:[%s3285 + $0xa8] sm:$0xf]
        %v3315 = vld [vmem:[%s3285 + $0xac] sm:$0xf]
        %v3316 = vld [vmem:[%s3285 + $0xb4] sm:$0xf]
        %v3317 = vld [vmem:[%s3285 + $0xb8] sm:$0xf]
        %v3350 = vunpack.c.l.b16 %v3286
        %v3351 = vunpack.c.l.b16 %v3287
        %v3352 = vunpack.c.l.b16 %v3288
        %v3353 = vunpack.c.l.b16 %v3289
        %v3354 = vunpack.c.l.b16 %v3290
        %v3355 = vunpack.c.l.b16 %v3291
        %v3356 = vunpack.c.l.b16 %v3292
        %v3357 = vunpack.c.l.b16 %v3293
        %v3358 = vunpack.c.l.b16 %v3294
        %v3359 = vunpack.c.l.b16 %v3295
        %v3360 = vunpack.c.l.b16 %v3296
        %v3361 = vunpack.c.l.b16 %v3297
        %v3362 = vunpack.c.l.b16 %v3298
        %v3363 = vunpack.c.l.b16 %v3299
        %v3364 = vunpack.c.l.b16 %v3300
        %v3365 = vunpack.c.l.b16 %v3301
        %v3366 = vunpack.c.l.b16 %v3302
        %v3367 = vunpack.c.l.b16 %v3303
        %v3368 = vunpack.c.l.b16 %v3304
        %v3369 = vunpack.c.l.b16 %v3305
        %v3370 = vunpack.c.l.b16 %v3306
        %v3371 = vunpack.c.l.b16 %v3307
        %v3372 = vunpack.c.l.b16 %v3308
        %v3373 = vunpack.c.l.b16 %v3309
        %v3374 = vunpack.c.l.b16 %v3310
        %v3375 = vunpack.c.l.b16 %v3311
        %v3376 = vunpack.c.l.b16 %v3312
        %v3377 = vunpack.c.l.b16 %v3313
        %v3378 = vunpack.c.l.b16 %v3314
        %v3379 = vunpack.c.l.b16 %v3315
        %v3380 = vunpack.c.l.b16 %v3316
        %v3381 = vunpack.c.l.b16 %v3317
        %v3382 = vpack.c.b16 %v3351, %v3350
        %v3383 = vpack.c.b16 %v3353, %v3352
        %v3384 = vpack.c.b16 %v3355, %v3354
        %v3385 = vpack.c.b16 %v3357, %v3356
        %v3386 = vpack.c.b16 %v3359, %v3358
        %v3387 = vpack.c.b16 %v3361, %v3360
        %v3388 = vpack.c.b16 %v3363, %v3362
        %v3389 = vpack.c.b16 %v3365, %v3364
        %v3390 = vpack.c.b16 %v3367, %v3366
        %v3391 = vpack.c.b16 %v3369, %v3368
        %v3392 = vpack.c.b16 %v3371, %v3370
        %v3393 = vpack.c.b16 %v3373, %v3372
        %v3394 = vpack.c.b16 %v3375, %v3374
        %v3395 = vpack.c.b16 %v3377, %v3376
        %v3396 = vpack.c.b16 %v3379, %v3378
        %v3397 = vpack.c.b16 %v3381, %v3380
        %3398 = vrot.lane.b32.xlu0 %v3382, 96
        %v3399 = vpop.permute.xlu0 %3398
        %3400 = vrot.lane.b32.xlu0 %v3383, 96
        %v3401 = vpop.permute.xlu0 %3400
        %3402 = vrot.lane.b32.xlu0 %v3384, 96
        %v3403 = vpop.permute.xlu0 %3402
        %3404 = vrot.lane.b32.xlu0 %v3385, 96
        %v3405 = vpop.permute.xlu0 %3404
        %3406 = vrot.lane.b32.xlu0 %v3386, 96
        %v3407 = vpop.permute.xlu0 %3406
        %3408 = vrot.lane.b32.xlu0 %v3387, 96
        %v3409 = vpop.permute.xlu0 %3408
        %3410 = vrot.lane.b32.xlu0 %v3388, 96
        %v3411 = vpop.permute.xlu0 %3410
        %3412 = vrot.lane.b32.xlu0 %v3389, 96
        %v3413 = vpop.permute.xlu0 %3412
        %3414 = vrot.lane.b32.xlu0 %v3390, 96
        %v3415 = vpop.permute.xlu0 %3414
        %3416 = vrot.lane.b32.xlu0 %v3391, 96
        %v3417 = vpop.permute.xlu0 %3416
        %3418 = vrot.lane.b32.xlu0 %v3392, 96
        %v3419 = vpop.permute.xlu0 %3418
        %3420 = vrot.lane.b32.xlu0 %v3393, 96
        %v3421 = vpop.permute.xlu0 %3420
        %3422 = vrot.lane.b32.xlu0 %v3394, 96
        %v3423 = vpop.permute.xlu0 %3422
        %3424 = vrot.lane.b32.xlu0 %v3395, 96
        %v3425 = vpop.permute.xlu0 %3424
        %3426 = vrot.lane.b32.xlu0 %v3396, 96
        %v3427 = vpop.permute.xlu0 %3426
        %3428 = vrot.lane.b32.xlu0 %v3397, 96
        %v3429 = vpop.permute.xlu0 %3428
        %vm3446 = vcmask 917248
        %3447 = vst.msk [vmem:[#allocation3] sm:$0xff] %vm3446, %v3399
        %3448 = vst.msk [vmem:[#allocation3 + $0x10] sm:$0xff] %vm3446, %v3401
        %3449 = vst.msk [vmem:[#allocation3 + $0x20] sm:$0xff] %vm3446, %v3403
        %3450 = vst.msk [vmem:[#allocation3 + $0x30] sm:$0xff] %vm3446, %v3405
        %3451 = vst.msk [vmem:[#allocation3 + $0x40] sm:$0xff] %vm3446, %v3407
        %3452 = vst.msk [vmem:[#allocation3 + $0x50] sm:$0xff] %vm3446, %v3409
        %3453 = vst.msk [vmem:[#allocation3 + $0x60] sm:$0xff] %vm3446, %v3411
        %3454 = vst.msk [vmem:[#allocation3 + $0x70] sm:$0xff] %vm3446, %v3413
        %3455 = vst.msk [vmem:[#allocation3 + $0x80] sm:$0xff] %vm3446, %v3415
        %3456 = vst.msk [vmem:[#allocation3 + $0x90] sm:$0xff] %vm3446, %v3417
        %3457 = vst.msk [vmem:[#allocation3 + $0xa0] sm:$0xff] %vm3446, %v3419
        %3458 = vst.msk [vmem:[#allocation3 + $0xb0] sm:$0xff] %vm3446, %v3421
        %3459 = vst.msk [vmem:[#allocation3 + $0xc0] sm:$0xff] %vm3446, %v3423
        %3460 = vst.msk [vmem:[#allocation3 + $0xd0] sm:$0xff] %vm3446, %v3425
        %3461 = vst.msk [vmem:[#allocation3 + $0xe0] sm:$0xff] %vm3446, %v3427
        %3462 = vst.msk [vmem:[#allocation3 + $0xf0] sm:$0xff] %vm3446, %v3429
        %v3463 = vld [vmem:[%s3285] sm:$0xf]
        %v3464 = vld [vmem:[%s3285 + $0x4] sm:$0xf]
        %v3465 = vld [vmem:[%s3285 + $0x8] sm:$0x1]
        %v3466 = vld [vmem:[%s3285 + $0xc] sm:$0xf]
        %v3467 = vld [vmem:[%s3285 + $0x10] sm:$0xf]
        %v3468 = vld [vmem:[%s3285 + $0x14] sm:$0x1]
        %v3469 = vld [vmem:[%s3285 + $0x18] sm:$0xf]
        %v3470 = vld [vmem:[%s3285 + $0x1c] sm:$0xf]
        %v3471 = vld [vmem:[%s3285 + $0x20] sm:$0x1]
        %v3472 = vld [vmem:[%s3285 + $0x24] sm:$0xf]
        %v3473 = vld [vmem:[%s3285 + $0x28] sm:$0xf]
        %v3474 = vld [vmem:[%s3285 + $0x2c] sm:$0x1]
        %v3475 = vld [vmem:[%s3285 + $0x30] sm:$0xf]
        %v3476 = vld [vmem:[%s3285 + $0x34] sm:$0xf]
        %v3477 = vld [vmem:[%s3285 + $0x38] sm:$0x1]
        %v3478 = vld [vmem:[%s3285 + $0x3c] sm:$0xf]
        %v3479 = vld [vmem:[%s3285 + $0x40] sm:$0xf]
        %v3480 = vld [vmem:[%s3285 + $0x44] sm:$0x1]
        %v3481 = vld [vmem:[%s3285 + $0x48] sm:$0xf]
        %v3482 = vld [vmem:[%s3285 + $0x4c] sm:$0xf]
        %v3483 = vld [vmem:[%s3285 + $0x50] sm:$0x1]
        %v3484 = vld [vmem:[%s3285 + $0x54] sm:$0xf]
        %v3485 = vld [vmem:[%s3285 + $0x58] sm:$0xf]
        %v3486 = vld [vmem:[%s3285 + $0x5c] sm:$0x1]
        %v3487 = vld [vmem:[%s3285 + $0x60] sm:$0xf]
        %v3488 = vld [vmem:[%s3285 + $0x64] sm:$0xf]
        %v3489 = vld [vmem:[%s3285 + $0x68] sm:$0x1]
        %v3490 = vld [vmem:[%s3285 + $0x6c] sm:$0xf]
        %v3491 = vld [vmem:[%s3285 + $0x70] sm:$0xf]
        %v3492 = vld [vmem:[%s3285 + $0x74] sm:$0x1]
        %v3493 = vld [vmem:[%s3285 + $0x78] sm:$0xf]
        %v3494 = vld [vmem:[%s3285 + $0x7c] sm:$0xf]
        %v3495 = vld [vmem:[%s3285 + $0x80] sm:$0x1]
        %v3496 = vld [vmem:[%s3285 + $0x84] sm:$0xf]
        %v3497 = vld [vmem:[%s3285 + $0x88] sm:$0xf]
        %v3498 = vld [vmem:[%s3285 + $0x8c] sm:$0x1]
        %v3499 = vld [vmem:[%s3285 + $0x90] sm:$0xf]
        %v3500 = vld [vmem:[%s3285 + $0x94] sm:$0xf]
        %v3501 = vld [vmem:[%s3285 + $0x98] sm:$0x1]
        %v3502 = vld [vmem:[%s3285 + $0x9c] sm:$0xf]
        %v3503 = vld [vmem:[%s3285 + $0xa0] sm:$0xf]
        %v3504 = vld [vmem:[%s3285 + $0xa4] sm:$0x1]
        %v3505 = vld [vmem:[%s3285 + $0xa8] sm:$0xf]
        %v3506 = vld [vmem:[%s3285 + $0xac] sm:$0xf]
        %v3507 = vld [vmem:[%s3285 + $0xb0] sm:$0x1]
        %v3508 = vld [vmem:[%s3285 + $0xb4] sm:$0xf]
        %v3509 = vld [vmem:[%s3285 + $0xb8] sm:$0xf]
        %v3510 = vld [vmem:[%s3285 + $0xbc] sm:$0x1]
        %v3512 = vshrl.u32 %v3463, 16
        %v3514 = vrot.slane %v3512, 4
        %v3515 = vshll.u32 %v3463, 16
        %v3517 = vrot.slane %v3515, 5
        %v3518 = vor.u32 %v3514, %v3517
        %v3519 = vrot.slane %v3518, 4
        %v3521 = vshll.u32 %v3464, 16
        %v3523 = vrot.slane %v3521, 5
        %v3524 = vsel %vm1420, %v3519, %v3523
        %v3525 = vshrl.u32 %v3464, 16
        %v3527 = vrot.slane %v3525, 4
        %v3528 = vor.u32 %v3527, %v3523
        %v3529 = vrot.slane %v3528, 4
        %v3531 = vshll.u32 %v3465, 16
        %v3533 = vrot.slane %v3531, 5
        %v3534 = vsel %vm1420, %v3529, %v3533
        %v3536 = vshrl.u32 %v3466, 16
        %v3538 = vrot.slane %v3536, 4
        %v3539 = vshll.u32 %v3466, 16
        %v3541 = vrot.slane %v3539, 5
        %v3542 = vor.u32 %v3538, %v3541
        %v3543 = vrot.slane %v3542, 4
        %v3545 = vshll.u32 %v3467, 16
        %v3547 = vrot.slane %v3545, 5
        %v3548 = vsel %vm1420, %v3543, %v3547
        %v3549 = vshrl.u32 %v3467, 16
        %v3551 = vrot.slane %v3549, 4
        %v3552 = vor.u32 %v3551, %v3547
        %v3553 = vrot.slane %v3552, 4
        %v3555 = vshll.u32 %v3468, 16
        %v3557 = vrot.slane %v3555, 5
        %v3558 = vsel %vm1420, %v3553, %v3557
        %v3560 = vshrl.u32 %v3469, 16
        %v3562 = vrot.slane %v3560, 4
        %v3563 = vshll.u32 %v3469, 16
        %v3565 = vrot.slane %v3563, 5
        %v3566 = vor.u32 %v3562, %v3565
        %v3567 = vrot.slane %v3566, 4
        %v3569 = vshll.u32 %v3470, 16
        %v3571 = vrot.slane %v3569, 5
        %v3572 = vsel %vm1420, %v3567, %v3571
        %v3573 = vshrl.u32 %v3470, 16
        %v3575 = vrot.slane %v3573, 4
        %v3576 = vor.u32 %v3575, %v3571
        %v3577 = vrot.slane %v3576, 4
        %v3579 = vshll.u32 %v3471, 16
        %v3581 = vrot.slane %v3579, 5
        %v3582 = vsel %vm1420, %v3577, %v3581
        %v3584 = vshrl.u32 %v3472, 16
        %v3586 = vrot.slane %v3584, 4
        %v3587 = vshll.u32 %v3472, 16
        %v3589 = vrot.slane %v3587, 5
        %v3590 = vor.u32 %v3586, %v3589
        %v3591 = vrot.slane %v3590, 4
        %v3593 = vshll.u32 %v3473, 16
        %v3595 = vrot.slane %v3593, 5
        %v3596 = vsel %vm1420, %v3591, %v3595
        %v3597 = vshrl.u32 %v3473, 16
        %v3599 = vrot.slane %v3597, 4
        %v3600 = vor.u32 %v3599, %v3595
        %v3601 = vrot.slane %v3600, 4
        %v3603 = vshll.u32 %v3474, 16
        %v3605 = vrot.slane %v3603, 5
        %v3606 = vsel %vm1420, %v3601, %v3605
        %v3608 = vshrl.u32 %v3475, 16
        %v3610 = vrot.slane %v3608, 4
        %v3611 = vshll.u32 %v3475, 16
        %v3613 = vrot.slane %v3611, 5
        %v3614 = vor.u32 %v3610, %v3613
        %v3615 = vrot.slane %v3614, 4
        %v3617 = vshll.u32 %v3476, 16
        %v3619 = vrot.slane %v3617, 5
        %v3620 = vsel %vm1420, %v3615, %v3619
        %v3621 = vshrl.u32 %v3476, 16
        %v3623 = vrot.slane %v3621, 4
        %v3624 = vor.u32 %v3623, %v3619
        %v3625 = vrot.slane %v3624, 4
        %v3627 = vshll.u32 %v3477, 16
        %v3629 = vrot.slane %v3627, 5
        %v3630 = vsel %vm1420, %v3625, %v3629
        %v3632 = vshrl.u32 %v3478, 16
        %v3634 = vrot.slane %v3632, 4
        %v3635 = vshll.u32 %v3478, 16
        %v3637 = vrot.slane %v3635, 5
        %v3638 = vor.u32 %v3634, %v3637
        %v3639 = vrot.slane %v3638, 4
        %v3641 = vshll.u32 %v3479, 16
        %v3643 = vrot.slane %v3641, 5
        %v3644 = vsel %vm1420, %v3639, %v3643
        %v3645 = vshrl.u32 %v3479, 16
        %v3647 = vrot.slane %v3645, 4
        %v3648 = vor.u32 %v3647, %v3643
        %v3649 = vrot.slane %v3648, 4
        %v3651 = vshll.u32 %v3480, 16
        %v3653 = vrot.slane %v3651, 5
        %v3654 = vsel %vm1420, %v3649, %v3653
        %v3656 = vshrl.u32 %v3481, 16
        %v3658 = vrot.slane %v3656, 4
        %v3659 = vshll.u32 %v3481, 16
        %v3661 = vrot.slane %v3659, 5
        %v3662 = vor.u32 %v3658, %v3661
        %v3663 = vrot.slane %v3662, 4
        %v3665 = vshll.u32 %v3482, 16
        %v3667 = vrot.slane %v3665, 5
        %v3668 = vsel %vm1420, %v3663, %v3667
        %v3669 = vshrl.u32 %v3482, 16
        %v3671 = vrot.slane %v3669, 4
        %v3672 = vor.u32 %v3671, %v3667
        %v3673 = vrot.slane %v3672, 4
        %v3675 = vshll.u32 %v3483, 16
        %v3677 = vrot.slane %v3675, 5
        %v3678 = vsel %vm1420, %v3673, %v3677
        %v3680 = vshrl.u32 %v3484, 16
        %v3682 = vrot.slane %v3680, 4
        %v3683 = vshll.u32 %v3484, 16
        %v3685 = vrot.slane %v3683, 5
        %v3686 = vor.u32 %v3682, %v3685
        %v3687 = vrot.slane %v3686, 4
        %v3689 = vshll.u32 %v3485, 16
        %v3691 = vrot.slane %v3689, 5
        %v3692 = vsel %vm1420, %v3687, %v3691
        %v3693 = vshrl.u32 %v3485, 16
        %v3695 = vrot.slane %v3693, 4
        %v3696 = vor.u32 %v3695, %v3691
        %v3697 = vrot.slane %v3696, 4
        %v3699 = vshll.u32 %v3486, 16
        %v3701 = vrot.slane %v3699, 5
        %v3702 = vsel %vm1420, %v3697, %v3701
        %v3704 = vshrl.u32 %v3487, 16
        %v3706 = vrot.slane %v3704, 4
        %v3707 = vshll.u32 %v3487, 16
        %v3709 = vrot.slane %v3707, 5
        %v3710 = vor.u32 %v3706, %v3709
        %v3711 = vrot.slane %v3710, 4
        %v3713 = vshll.u32 %v3488, 16
        %v3715 = vrot.slane %v3713, 5
        %v3716 = vsel %vm1420, %v3711, %v3715
        %v3717 = vshrl.u32 %v3488, 16
        %v3719 = vrot.slane %v3717, 4
        %v3720 = vor.u32 %v3719, %v3715
        %v3721 = vrot.slane %v3720, 4
        %v3723 = vshll.u32 %v3489, 16
        %v3725 = vrot.slane %v3723, 5
        %v3726 = vsel %vm1420, %v3721, %v3725
        %v3728 = vshrl.u32 %v3490, 16
        %v3730 = vrot.slane %v3728, 4
        %v3731 = vshll.u32 %v3490, 16
        %v3733 = vrot.slane %v3731, 5
        %v3734 = vor.u32 %v3730, %v3733
        %v3735 = vrot.slane %v3734, 4
        %v3737 = vshll.u32 %v3491, 16
        %v3739 = vrot.slane %v3737, 5
        %v3740 = vsel %vm1420, %v3735, %v3739
        %v3741 = vshrl.u32 %v3491, 16
        %v3743 = vrot.slane %v3741, 4
        %v3744 = vor.u32 %v3743, %v3739
        %v3745 = vrot.slane %v3744, 4
        %v3747 = vshll.u32 %v3492, 16
        %v3749 = vrot.slane %v3747, 5
        %v3750 = vsel %vm1420, %v3745, %v3749
        %v3752 = vshrl.u32 %v3493, 16
        %v3754 = vrot.slane %v3752, 4
        %v3755 = vshll.u32 %v3493, 16
        %v3757 = vrot.slane %v3755, 5
        %v3758 = vor.u32 %v3754, %v3757
        %v3759 = vrot.slane %v3758, 4
        %v3761 = vshll.u32 %v3494, 16
        %v3763 = vrot.slane %v3761, 5
        %v3764 = vsel %vm1420, %v3759, %v3763
        %v3765 = vshrl.u32 %v3494, 16
        %v3767 = vrot.slane %v3765, 4
        %v3768 = vor.u32 %v3767, %v3763
        %v3769 = vrot.slane %v3768, 4
        %v3771 = vshll.u32 %v3495, 16
        %v3773 = vrot.slane %v3771, 5
        %v3774 = vsel %vm1420, %v3769, %v3773
        %v3776 = vshrl.u32 %v3496, 16
        %v3778 = vrot.slane %v3776, 4
        %v3779 = vshll.u32 %v3496, 16
        %v3781 = vrot.slane %v3779, 5
        %v3782 = vor.u32 %v3778, %v3781
        %v3783 = vrot.slane %v3782, 4
        %v3785 = vshll.u32 %v3497, 16
        %v3787 = vrot.slane %v3785, 5
        %v3788 = vsel %vm1420, %v3783, %v3787
        %v3789 = vshrl.u32 %v3497, 16
        %v3791 = vrot.slane %v3789, 4
        %v3792 = vor.u32 %v3791, %v3787
        %v3793 = vrot.slane %v3792, 4
        %v3795 = vshll.u32 %v3498, 16
        %v3797 = vrot.slane %v3795, 5
        %v3798 = vsel %vm1420, %v3793, %v3797
        %v3800 = vshrl.u32 %v3499, 16
        %v3802 = vrot.slane %v3800, 4
        %v3803 = vshll.u32 %v3499, 16
        %v3805 = vrot.slane %v3803, 5
        %v3806 = vor.u32 %v3802, %v3805
        %v3807 = vrot.slane %v3806, 4
        %v3809 = vshll.u32 %v3500, 16
        %v3811 = vrot.slane %v3809, 5
        %v3812 = vsel %vm1420, %v3807, %v3811
        %v3813 = vshrl.u32 %v3500, 16
        %v3815 = vrot.slane %v3813, 4
        %v3816 = vor.u32 %v3815, %v3811
        %v3817 = vrot.slane %v3816, 4
        %v3819 = vshll.u32 %v3501, 16
        %v3821 = vrot.slane %v3819, 5
        %v3822 = vsel %vm1420, %v3817, %v3821
        %v3824 = vshrl.u32 %v3502, 16
        %v3826 = vrot.slane %v3824, 4
        %v3827 = vshll.u32 %v3502, 16
        %v3829 = vrot.slane %v3827, 5
        %v3830 = vor.u32 %v3826, %v3829
        %v3831 = vrot.slane %v3830, 4
        %v3833 = vshll.u32 %v3503, 16
        %v3835 = vrot.slane %v3833, 5
        %v3836 = vsel %vm1420, %v3831, %v3835
        %v3837 = vshrl.u32 %v3503, 16
        %v3839 = vrot.slane %v3837, 4
        %v3840 = vor.u32 %v3839, %v3835
        %v3841 = vrot.slane %v3840, 4
        %v3843 = vshll.u32 %v3504, 16
        %v3845 = vrot.slane %v3843, 5
        %v3846 = vsel %vm1420, %v3841, %v3845
        %v3848 = vshrl.u32 %v3505, 16
        %v3850 = vrot.slane %v3848, 4
        %v3851 = vshll.u32 %v3505, 16
        %v3853 = vrot.slane %v3851, 5
        %v3854 = vor.u32 %v3850, %v3853
        %v3855 = vrot.slane %v3854, 4
        %v3857 = vshll.u32 %v3506, 16
        %v3859 = vrot.slane %v3857, 5
        %v3860 = vsel %vm1420, %v3855, %v3859
        %v3861 = vshrl.u32 %v3506, 16
        %v3863 = vrot.slane %v3861, 4
        %v3864 = vor.u32 %v3863, %v3859
        %v3865 = vrot.slane %v3864, 4
        %v3867 = vshll.u32 %v3507, 16
        %v3869 = vrot.slane %v3867, 5
        %v3870 = vsel %vm1420, %v3865, %v3869
        %v3872 = vshrl.u32 %v3508, 16
        %v3874 = vrot.slane %v3872, 4
        %v3875 = vshll.u32 %v3508, 16
        %v3877 = vrot.slane %v3875, 5
        %v3878 = vor.u32 %v3874, %v3877
        %v3879 = vrot.slane %v3878, 4
        %v3881 = vshll.u32 %v3509, 16
        %v3883 = vrot.slane %v3881, 5
        %v3884 = vsel %vm1420, %v3879, %v3883
        %v3885 = vshrl.u32 %v3509, 16
        %v3887 = vrot.slane %v3885, 4
        %v3888 = vor.u32 %v3887, %v3883
        %v3889 = vrot.slane %v3888, 4
        %v3891 = vshll.u32 %v3510, 16
        %v3893 = vrot.slane %v3891, 5
        %v3894 = vsel %vm1420, %v3889, %v3893
        %v3895 = vunpack.c.l.b16 %v3524
        %v3896 = vunpack.c.l.b16 %v3534
        %v3897 = vunpack.c.l.b16 %v3548
        %v3898 = vunpack.c.l.b16 %v3558
        %v3899 = vunpack.c.l.b16 %v3572
        %v3900 = vunpack.c.l.b16 %v3582
        %v3901 = vunpack.c.l.b16 %v3596
        %v3902 = vunpack.c.l.b16 %v3606
        %v3903 = vunpack.c.l.b16 %v3620
        %v3904 = vunpack.c.l.b16 %v3630
        %v3905 = vunpack.c.l.b16 %v3644
        %v3906 = vunpack.c.l.b16 %v3654
        %v3907 = vunpack.c.l.b16 %v3668
        %v3908 = vunpack.c.l.b16 %v3678
        %v3909 = vunpack.c.l.b16 %v3692
        %v3910 = vunpack.c.l.b16 %v3702
        %v3911 = vunpack.c.l.b16 %v3716
        %v3912 = vunpack.c.l.b16 %v3726
        %v3913 = vunpack.c.l.b16 %v3740
        %v3914 = vunpack.c.l.b16 %v3750
        %v3915 = vunpack.c.l.b16 %v3764
        %v3916 = vunpack.c.l.b16 %v3774
        %v3917 = vunpack.c.l.b16 %v3788
        %v3918 = vunpack.c.l.b16 %v3798
        %v3919 = vunpack.c.l.b16 %v3812
        %v3920 = vunpack.c.l.b16 %v3822
        %v3921 = vunpack.c.l.b16 %v3836
        %v3922 = vunpack.c.l.b16 %v3846
        %v3923 = vunpack.c.l.b16 %v3860
        %v3924 = vunpack.c.l.b16 %v3870
        %v3925 = vunpack.c.l.b16 %v3884
        %v3926 = vunpack.c.l.b16 %v3894
        %v3927 = vpack.c.b16 %v3896, %v3895
        %v3928 = vpack.c.b16 %v3898, %v3897
        %v3929 = vpack.c.b16 %v3900, %v3899
        %v3930 = vpack.c.b16 %v3902, %v3901
        %v3931 = vpack.c.b16 %v3904, %v3903
        %v3932 = vpack.c.b16 %v3906, %v3905
        %v3933 = vpack.c.b16 %v3908, %v3907
        %v3934 = vpack.c.b16 %v3910, %v3909
        %v3935 = vpack.c.b16 %v3912, %v3911
        %v3936 = vpack.c.b16 %v3914, %v3913
        %v3937 = vpack.c.b16 %v3916, %v3915
        %v3938 = vpack.c.b16 %v3918, %v3917
        %v3939 = vpack.c.b16 %v3920, %v3919
        %v3940 = vpack.c.b16 %v3922, %v3921
        %v3941 = vpack.c.b16 %v3924, %v3923
        %v3942 = vpack.c.b16 %v3926, %v3925
        %3943 = vrot.lane.b32.xlu0 %v3927, 112
        %v3944 = vpop.permute.xlu0 %3943
        %3945 = vrot.lane.b32.xlu0 %v3928, 112
        %v3946 = vpop.permute.xlu0 %3945
        %3947 = vrot.lane.b32.xlu0 %v3929, 112
        %v3948 = vpop.permute.xlu0 %3947
        %3949 = vrot.lane.b32.xlu0 %v3930, 112
        %v3950 = vpop.permute.xlu0 %3949
        %3951 = vrot.lane.b32.xlu0 %v3931, 112
        %v3952 = vpop.permute.xlu0 %3951
        %3953 = vrot.lane.b32.xlu0 %v3932, 112
        %v3954 = vpop.permute.xlu0 %3953
        %3955 = vrot.lane.b32.xlu0 %v3933, 112
        %v3956 = vpop.permute.xlu0 %3955
        %3957 = vrot.lane.b32.xlu0 %v3934, 112
        %v3958 = vpop.permute.xlu0 %3957
        %3959 = vrot.lane.b32.xlu0 %v3935, 112
        %v3960 = vpop.permute.xlu0 %3959
        %3961 = vrot.lane.b32.xlu0 %v3936, 112
        %v3962 = vpop.permute.xlu0 %3961
        %3963 = vrot.lane.b32.xlu0 %v3937, 112
        %v3964 = vpop.permute.xlu0 %3963
        %3965 = vrot.lane.b32.xlu0 %v3938, 112
        %v3966 = vpop.permute.xlu0 %3965
        %3967 = vrot.lane.b32.xlu0 %v3939, 112
        %v3968 = vpop.permute.xlu0 %3967
        %3969 = vrot.lane.b32.xlu0 %v3940, 112
        %v3970 = vpop.permute.xlu0 %3969
        %3971 = vrot.lane.b32.xlu0 %v3941, 112
        %v3972 = vpop.permute.xlu0 %3971
        %3973 = vrot.lane.b32.xlu0 %v3942, 112
        %v3974 = vpop.permute.xlu0 %3973
        %vm3991 = vcmask 1048448
        %3992 = vst.msk [vmem:[#allocation3] sm:$0xff] %vm3991, %v3944
        %3993 = vst.msk [vmem:[#allocation3 + $0x10] sm:$0xff] %vm3991, %v3946
        %3994 = vst.msk [vmem:[#allocation3 + $0x20] sm:$0xff] %vm3991, %v3948
        %3995 = vst.msk [vmem:[#allocation3 + $0x30] sm:$0xff] %vm3991, %v3950
        %3996 = vst.msk [vmem:[#allocation3 + $0x40] sm:$0xff] %vm3991, %v3952
        %3997 = vst.msk [vmem:[#allocation3 + $0x50] sm:$0xff] %vm3991, %v3954
        %3998 = vst.msk [vmem:[#allocation3 + $0x60] sm:$0xff] %vm3991, %v3956
        %3999 = vst.msk [vmem:[#allocation3 + $0x70] sm:$0xff] %vm3991, %v3958
        %4000 = vst.msk [vmem:[#allocation3 + $0x80] sm:$0xff] %vm3991, %v3960
        %4001 = vst.msk [vmem:[#allocation3 + $0x90] sm:$0xff] %vm3991, %v3962
        %4002 = vst.msk [vmem:[#allocation3 + $0xa0] sm:$0xff] %vm3991, %v3964
        %4003 = vst.msk [vmem:[#allocation3 + $0xb0] sm:$0xff] %vm3991, %v3966
        %4004 = vst.msk [vmem:[#allocation3 + $0xc0] sm:$0xff] %vm3991, %v3968
        %4005 = vst.msk [vmem:[#allocation3 + $0xd0] sm:$0xff] %vm3991, %v3970
        %4006 = vst.msk [vmem:[#allocation3 + $0xe0] sm:$0xff] %vm3991, %v3972
        %4007 = vst.msk [vmem:[#allocation3 + $0xf0] sm:$0xff] %vm3991, %v3974
        %v4008 = vld [vmem:[%s3285] sm:$0xe]
        %v4009 = vld [vmem:[%s3285 + $0x4] sm:$0xf]
        %v4010 = vld [vmem:[%s3285 + $0x8] sm:$0x1]
        %v4011 = vld [vmem:[%s3285 + $0xc] sm:$0xe]
        %v4012 = vld [vmem:[%s3285 + $0x10] sm:$0xf]
        %v4013 = vld [vmem:[%s3285 + $0x14] sm:$0x1]
        %v4014 = vld [vmem:[%s3285 + $0x18] sm:$0xe]
        %v4015 = vld [vmem:[%s3285 + $0x1c] sm:$0xf]
        %v4016 = vld [vmem:[%s3285 + $0x20] sm:$0x1]
        %v4017 = vld [vmem:[%s3285 + $0x24] sm:$0xe]
        %v4018 = vld [vmem:[%s3285 + $0x28] sm:$0xf]
        %v4019 = vld [vmem:[%s3285 + $0x2c] sm:$0x1]
        %v4020 = vld [vmem:[%s3285 + $0x30] sm:$0xe]
        %v4021 = vld [vmem:[%s3285 + $0x34] sm:$0xf]
        %v4022 = vld [vmem:[%s3285 + $0x38] sm:$0x1]
        %v4023 = vld [vmem:[%s3285 + $0x3c] sm:$0xe]
        %v4024 = vld [vmem:[%s3285 + $0x40] sm:$0xf]
        %v4025 = vld [vmem:[%s3285 + $0x44] sm:$0x1]
        %v4026 = vld [vmem:[%s3285 + $0x48] sm:$0xe]
        %v4027 = vld [vmem:[%s3285 + $0x4c] sm:$0xf]
        %v4028 = vld [vmem:[%s3285 + $0x50] sm:$0x1]
        %v4029 = vld [vmem:[%s3285 + $0x54] sm:$0xe]
        %v4030 = vld [vmem:[%s3285 + $0x58] sm:$0xf]
        %v4031 = vld [vmem:[%s3285 + $0x5c] sm:$0x1]
        %v4032 = vld [vmem:[%s3285 + $0x60] sm:$0xe]
        %v4033 = vld [vmem:[%s3285 + $0x64] sm:$0xf]
        %v4034 = vld [vmem:[%s3285 + $0x68] sm:$0x1]
        %v4035 = vld [vmem:[%s3285 + $0x6c] sm:$0xe]
        %v4036 = vld [vmem:[%s3285 + $0x70] sm:$0xf]
        %v4037 = vld [vmem:[%s3285 + $0x74] sm:$0x1]
        %v4038 = vld [vmem:[%s3285 + $0x78] sm:$0xe]
        %v4039 = vld [vmem:[%s3285 + $0x7c] sm:$0xf]
        %v4040 = vld [vmem:[%s3285 + $0x80] sm:$0x1]
        %v4041 = vld [vmem:[%s3285 + $0x84] sm:$0xe]
        %v4042 = vld [vmem:[%s3285 + $0x88] sm:$0xf]
        %v4043 = vld [vmem:[%s3285 + $0x8c] sm:$0x1]
        %v4044 = vld [vmem:[%s3285 + $0x90] sm:$0xe]
        %v4045 = vld [vmem:[%s3285 + $0x94] sm:$0xf]
        %v4046 = vld [vmem:[%s3285 + $0x98] sm:$0x1]
        %v4047 = vld [vmem:[%s3285 + $0x9c] sm:$0xe]
        %v4048 = vld [vmem:[%s3285 + $0xa0] sm:$0xf]
        %v4049 = vld [vmem:[%s3285 + $0xa4] sm:$0x1]
        %v4050 = vld [vmem:[%s3285 + $0xa8] sm:$0xe]
        %v4051 = vld [vmem:[%s3285 + $0xac] sm:$0xf]
        %v4052 = vld [vmem:[%s3285 + $0xb0] sm:$0x1]
        %v4053 = vld [vmem:[%s3285 + $0xb4] sm:$0xe]
        %v4054 = vld [vmem:[%s3285 + $0xb8] sm:$0xf]
        %v4055 = vld [vmem:[%s3285 + $0xbc] sm:$0x1]
        %v4104 = vrot.slane %v4008, 5
        %v4105 = vrot.slane %v4104, 4
        %v4106 = vrot.slane %v4009, 5
        %v4107 = vsel %vm2016, %v4105, %v4106
        %v4108 = vrot.slane %v4106, 4
        %v4109 = vrot.slane %v4010, 5
        %v4110 = vsel %vm2016, %v4108, %v4109
        %v4111 = vrot.slane %v4011, 5
        %v4112 = vrot.slane %v4111, 4
        %v4113 = vrot.slane %v4012, 5
        %v4114 = vsel %vm2016, %v4112, %v4113
        %v4115 = vrot.slane %v4113, 4
        %v4116 = vrot.slane %v4013, 5
        %v4117 = vsel %vm2016, %v4115, %v4116
        %v4118 = vrot.slane %v4014, 5
        %v4119 = vrot.slane %v4118, 4
        %v4120 = vrot.slane %v4015, 5
        %v4121 = vsel %vm2016, %v4119, %v4120
        %v4122 = vrot.slane %v4120, 4
        %v4123 = vrot.slane %v4016, 5
        %v4124 = vsel %vm2016, %v4122, %v4123
        %v4125 = vrot.slane %v4017, 5
        %v4126 = vrot.slane %v4125, 4
        %v4127 = vrot.slane %v4018, 5
        %v4128 = vsel %vm2016, %v4126, %v4127
        %v4129 = vrot.slane %v4127, 4
        %v4130 = vrot.slane %v4019, 5
        %v4131 = vsel %vm2016, %v4129, %v4130
        %v4132 = vrot.slane %v4020, 5
        %v4133 = vrot.slane %v4132, 4
        %v4134 = vrot.slane %v4021, 5
        %v4135 = vsel %vm2016, %v4133, %v4134
        %v4136 = vrot.slane %v4134, 4
        %v4137 = vrot.slane %v4022, 5
        %v4138 = vsel %vm2016, %v4136, %v4137
        %v4139 = vrot.slane %v4023, 5
        %v4140 = vrot.slane %v4139, 4
        %v4141 = vrot.slane %v4024, 5
        %v4142 = vsel %vm2016, %v4140, %v4141
        %v4143 = vrot.slane %v4141, 4
        %v4144 = vrot.slane %v4025, 5
        %v4145 = vsel %vm2016, %v4143, %v4144
        %v4146 = vrot.slane %v4026, 5
        %v4147 = vrot.slane %v4146, 4
        %v4148 = vrot.slane %v4027, 5
        %v4149 = vsel %vm2016, %v4147, %v4148
        %v4150 = vrot.slane %v4148, 4
        %v4151 = vrot.slane %v4028, 5
        %v4152 = vsel %vm2016, %v4150, %v4151
        %v4153 = vrot.slane %v4029, 5
        %v4154 = vrot.slane %v4153, 4
        %v4155 = vrot.slane %v4030, 5
        %v4156 = vsel %vm2016, %v4154, %v4155
        %v4157 = vrot.slane %v4155, 4
        %v4158 = vrot.slane %v4031, 5
        %v4159 = vsel %vm2016, %v4157, %v4158
        %v4160 = vrot.slane %v4032, 5
        %v4161 = vrot.slane %v4160, 4
        %v4162 = vrot.slane %v4033, 5
        %v4163 = vsel %vm2016, %v4161, %v4162
        %v4164 = vrot.slane %v4162, 4
        %v4165 = vrot.slane %v4034, 5
        %v4166 = vsel %vm2016, %v4164, %v4165
        %v4167 = vrot.slane %v4035, 5
        %v4168 = vrot.slane %v4167, 4
        %v4169 = vrot.slane %v4036, 5
        %v4170 = vsel %vm2016, %v4168, %v4169
        %v4171 = vrot.slane %v4169, 4
        %v4172 = vrot.slane %v4037, 5
        %v4173 = vsel %vm2016, %v4171, %v4172
        %v4174 = vrot.slane %v4038, 5
        %v4175 = vrot.slane %v4174, 4
        %v4176 = vrot.slane %v4039, 5
        %v4177 = vsel %vm2016, %v4175, %v4176
        %v4178 = vrot.slane %v4176, 4
        %v4179 = vrot.slane %v4040, 5
        %v4180 = vsel %vm2016, %v4178, %v4179
        %v4181 = vrot.slane %v4041, 5
        %v4182 = vrot.slane %v4181, 4
        %v4183 = vrot.slane %v4042, 5
        %v4184 = vsel %vm2016, %v4182, %v4183
        %v4185 = vrot.slane %v4183, 4
        %v4186 = vrot.slane %v4043, 5
        %v4187 = vsel %vm2016, %v4185, %v4186
        %v4188 = vrot.slane %v4044, 5
        %v4189 = vrot.slane %v4188, 4
        %v4190 = vrot.slane %v4045, 5
        %v4191 = vsel %vm2016, %v4189, %v4190
        %v4192 = vrot.slane %v4190, 4
        %v4193 = vrot.slane %v4046, 5
        %v4194 = vsel %vm2016, %v4192, %v4193
        %v4195 = vrot.slane %v4047, 5
        %v4196 = vrot.slane %v4195, 4
        %v4197 = vrot.slane %v4048, 5
        %v4198 = vsel %vm2016, %v4196, %v4197
        %v4199 = vrot.slane %v4197, 4
        %v4200 = vrot.slane %v4049, 5
        %v4201 = vsel %vm2016, %v4199, %v4200
        %v4202 = vrot.slane %v4050, 5
        %v4203 = vrot.slane %v4202, 4
        %v4204 = vrot.slane %v4051, 5
        %v4205 = vsel %vm2016, %v4203, %v4204
        %v4206 = vrot.slane %v4204, 4
        %v4207 = vrot.slane %v4052, 5
        %v4208 = vsel %vm2016, %v4206, %v4207
        %v4209 = vrot.slane %v4053, 5
        %v4210 = vrot.slane %v4209, 4
        %v4211 = vrot.slane %v4054, 5
        %v4212 = vsel %vm2016, %v4210, %v4211
        %v4213 = vrot.slane %v4211, 4
        %v4214 = vrot.slane %v4055, 5
        %v4215 = vsel %vm2016, %v4213, %v4214
        %v4216 = vunpack.c.l.b16 %v4107
        %v4217 = vunpack.c.l.b16 %v4110
        %v4218 = vunpack.c.l.b16 %v4114
        %v4219 = vunpack.c.l.b16 %v4117
        %v4220 = vunpack.c.l.b16 %v4121
        %v4221 = vunpack.c.l.b16 %v4124
        %v4222 = vunpack.c.l.b16 %v4128
        %v4223 = vunpack.c.l.b16 %v4131
        %v4224 = vunpack.c.l.b16 %v4135
        %v4225 = vunpack.c.l.b16 %v4138
        %v4226 = vunpack.c.l.b16 %v4142
        %v4227 = vunpack.c.l.b16 %v4145
        %v4228 = vunpack.c.l.b16 %v4149
        %v4229 = vunpack.c.l.b16 %v4152
        %v4230 = vunpack.c.l.b16 %v4156
        %v4231 = vunpack.c.l.b16 %v4159
        %v4232 = vunpack.c.l.b16 %v4163
        %v4233 = vunpack.c.l.b16 %v4166
        %v4234 = vunpack.c.l.b16 %v4170
        %v4235 = vunpack.c.l.b16 %v4173
        %v4236 = vunpack.c.l.b16 %v4177
        %v4237 = vunpack.c.l.b16 %v4180
        %v4238 = vunpack.c.l.b16 %v4184
        %v4239 = vunpack.c.l.b16 %v4187
        %v4240 = vunpack.c.l.b16 %v4191
        %v4241 = vunpack.c.l.b16 %v4194
        %v4242 = vunpack.c.l.b16 %v4198
        %v4243 = vunpack.c.l.b16 %v4201
        %v4244 = vunpack.c.l.b16 %v4205
        %v4245 = vunpack.c.l.b16 %v4208
        %v4246 = vunpack.c.l.b16 %v4212
        %v4247 = vunpack.c.l.b16 %v4215
        %v4248 = vpack.c.b16 %v4217, %v4216
        %v4249 = vpack.c.b16 %v4219, %v4218
        %v4250 = vpack.c.b16 %v4221, %v4220
        %v4251 = vpack.c.b16 %v4223, %v4222
        %v4252 = vpack.c.b16 %v4225, %v4224
        %v4253 = vpack.c.b16 %v4227, %v4226
        %v4254 = vpack.c.b16 %v4229, %v4228
        %v4255 = vpack.c.b16 %v4231, %v4230
        %v4256 = vpack.c.b16 %v4233, %v4232
        %v4257 = vpack.c.b16 %v4235, %v4234
        %v4258 = vpack.c.b16 %v4237, %v4236
        %v4259 = vpack.c.b16 %v4239, %v4238
        %v4260 = vpack.c.b16 %v4241, %v4240
        %v4261 = vpack.c.b16 %v4243, %v4242
        %v4262 = vpack.c.b16 %v4245, %v4244
        %v4263 = vpack.c.b16 %v4247, %v4246
        %4280 = vst.msk [vmem:[#allocation3 + $0x8] sm:$0xff] %vm1353, %v4248
        %4281 = vst.msk [vmem:[#allocation3 + $0x18] sm:$0xff] %vm1353, %v4249
        %4282 = vst.msk [vmem:[#allocation3 + $0x28] sm:$0xff] %vm1353, %v4250
        %4283 = vst.msk [vmem:[#allocation3 + $0x38] sm:$0xff] %vm1353, %v4251
        %4284 = vst.msk [vmem:[#allocation3 + $0x48] sm:$0xff] %vm1353, %v4252
        %4285 = vst.msk [vmem:[#allocation3 + $0x58] sm:$0xff] %vm1353, %v4253
        %4286 = vst.msk [vmem:[#allocation3 + $0x68] sm:$0xff] %vm1353, %v4254
        %4287 = vst.msk [vmem:[#allocation3 + $0x78] sm:$0xff] %vm1353, %v4255
        %4288 = vst.msk [vmem:[#allocation3 + $0x88] sm:$0xff] %vm1353, %v4256
        %4289 = vst.msk [vmem:[#allocation3 + $0x98] sm:$0xff] %vm1353, %v4257
        %4290 = vst.msk [vmem:[#allocation3 + $0xa8] sm:$0xff] %vm1353, %v4258
        %4291 = vst.msk [vmem:[#allocation3 + $0xb8] sm:$0xff] %vm1353, %v4259
        %4292 = vst.msk [vmem:[#allocation3 + $0xc8] sm:$0xff] %vm1353, %v4260
        %4293 = vst.msk [vmem:[#allocation3 + $0xd8] sm:$0xff] %vm1353, %v4261
        %4294 = vst.msk [vmem:[#allocation3 + $0xe8] sm:$0xff] %vm1353, %v4262
        %4295 = vst.msk [vmem:[#allocation3 + $0xf8] sm:$0xff] %vm1353, %v4263
        %v4296 = vld [vmem:[#allocation3] sm:$0xff]
        %v4297 = vld [vmem:[#allocation3 + $0x8] sm:$0xff]
        %v4298 = vld [vmem:[#allocation3 + $0x10] sm:$0xff]
        %v4299 = vld [vmem:[#allocation3 + $0x18] sm:$0xff]
        %v4300 = vld [vmem:[#allocation3 + $0x20] sm:$0xff]
        %v4301 = vld [vmem:[#allocation3 + $0x28] sm:$0xff]
        %v4302 = vld [vmem:[#allocation3 + $0x30] sm:$0xff]
        %v4303 = vld [vmem:[#allocation3 + $0x38] sm:$0xff]
        %v4304 = vld [vmem:[#allocation3 + $0x40] sm:$0xff]
        %v4305 = vld [vmem:[#allocation3 + $0x48] sm:$0xff]
        %v4306 = vld [vmem:[#allocation3 + $0x50] sm:$0xff]
        %v4307 = vld [vmem:[#allocation3 + $0x58] sm:$0xff]
        %v4308 = vld [vmem:[#allocation3 + $0x60] sm:$0xff]
        %v4309 = vld [vmem:[#allocation3 + $0x68] sm:$0xff]
        %v4310 = vld [vmem:[#allocation3 + $0x70] sm:$0xff]
        %v4311 = vld [vmem:[#allocation3 + $0x78] sm:$0xff]
        %v4312 = vld [vmem:[#allocation3 + $0x80] sm:$0xff]
        %v4313 = vld [vmem:[#allocation3 + $0x88] sm:$0xff]
        %v4314 = vld [vmem:[#allocation3 + $0x90] sm:$0xff]
        %v4315 = vld [vmem:[#allocation3 + $0x98] sm:$0xff]
        %v4316 = vld [vmem:[#allocation3 + $0xa0] sm:$0xff]
        %v4317 = vld [vmem:[#allocation3 + $0xa8] sm:$0xff]
        %v4318 = vld [vmem:[#allocation3 + $0xb0] sm:$0xff]
        %v4319 = vld [vmem:[#allocation3 + $0xb8] sm:$0xff]
        %v4320 = vld [vmem:[#allocation3 + $0xc0] sm:$0xff]
        %v4321 = vld [vmem:[#allocation3 + $0xc8] sm:$0xff]
        %v4322 = vld [vmem:[#allocation3 + $0xd0] sm:$0xff]
        %v4323 = vld [vmem:[#allocation3 + $0xd8] sm:$0xff]
        %v4324 = vld [vmem:[#allocation3 + $0xe0] sm:$0xff]
        %v4325 = vld [vmem:[#allocation3 + $0xe8] sm:$0xff]
        %v4326 = vld [vmem:[#allocation3 + $0xf0] sm:$0xff]
        %v4327 = vld [vmem:[#allocation3 + $0xf8] sm:$0xff]
        %v4328 = vld [vmem:[%s3] sm:$0xf]
        %v4329 = vld [vmem:[%s3 + $0x4] sm:$0xf]
        %v4330 = vld [vmem:[%s3 + $0x8] sm:$0xf]
        %v4331 = vld [vmem:[%s3 + $0xc] sm:$0xf]
        %v4332 = vld [vmem:[%s3 + $0x10] sm:$0xf]
        %v4333 = vld [vmem:[%s3 + $0x14] sm:$0xf]
        %v4334 = vld [vmem:[%s3 + $0x18] sm:$0xf]
        %v4335 = vld [vmem:[%s3 + $0x1c] sm:$0xf]
        %v4336 = vld [vmem:[%s3 + $0x20] sm:$0xf]
        %v4337 = vld [vmem:[%s3 + $0x24] sm:$0xf]
        %v4338 = vld [vmem:[%s3 + $0x28] sm:$0xf]
        %v4339 = vld [vmem:[%s3 + $0x2c] sm:$0xf]
        %v4340 = vld [vmem:[%s3 + $0x30] sm:$0xf]
        %v4341 = vld [vmem:[%s3 + $0x34] sm:$0xf]
        %v4342 = vld [vmem:[%s3 + $0x38] sm:$0xf]
        %v4343 = vld [vmem:[%s3 + $0x3c] sm:$0xf]
        %v4344 = vld [vmem:[%s3 + $0x40] sm:$0xf]
        %v4345 = vld [vmem:[%s3 + $0x44] sm:$0xf]
        %v4346 = vld [vmem:[%s4] sm:$0x1]
        %v4348 = vlaneseq
        %v4349 = vshrl.u32 %v4348, 7
        %v4350 = vsub.s32 0, %v4349
        %v4351 = vrot.slane %v4346, %v4350
        %v4371 = vunpack.c.l.b16 %v4328
        %v4372 = vunpack.c.l.b16 %v4329
        %v4373 = vunpack.c.l.b16 %v4330
        %v4374 = vunpack.c.l.b16 %v4331
        %v4375 = vunpack.c.l.b16 %v4332
        %v4376 = vunpack.c.l.b16 %v4333
        %v4377 = vunpack.c.l.b16 %v4334
        %v4378 = vunpack.c.l.b16 %v4335
        %v4379 = vunpack.c.l.b16 %v4336
        %v4380 = vunpack.c.l.b16 %v4337
        %v4381 = vunpack.c.l.b16 %v4338
        %v4382 = vunpack.c.l.b16 %v4339
        %v4383 = vunpack.c.l.b16 %v4340
        %v4384 = vunpack.c.l.b16 %v4341
        %v4385 = vunpack.c.l.b16 %v4342
        %v4386 = vunpack.c.l.b16 %v4343
        %v4387 = vunpack.c.l.b16 %v4344
        %v4388 = vunpack.c.l.b16 %v4345
        %v4389 = vpack.c.b16 %v4372, %v4371
        %v4390 = vpack.c.b16 %v4374, %v4373
        %v4391 = vpack.c.b16 %v4376, %v4375
        %v4392 = vpack.c.b16 %v4378, %v4377
        %v4393 = vpack.c.b16 %v4380, %v4379
        %v4394 = vpack.c.b16 %v4382, %v4381
        %v4395 = vpack.c.b16 %v4384, %v4383
        %v4396 = vpack.c.b16 %v4386, %v4385
        %v4397 = vpack.c.b16 %v4388, %v4387
        %v4408 = vsel %vm1353, %v4297, 0
        %v4411 = vsel %vm1353, %v4299, 0
        %v4414 = vsel %vm1353, %v4301, 0
        %v4417 = vsel %vm1353, %v4303, 0
        %v4420 = vsel %vm1353, %v4305, 0
        %v4423 = vsel %vm1353, %v4307, 0
        %v4426 = vsel %vm1353, %v4309, 0
        %v4429 = vsel %vm1353, %v4311, 0
        %v4432 = vsel %vm1353, %v4313, 0
        %v4435 = vsel %vm1353, %v4315, 0
        %v4438 = vsel %vm1353, %v4317, 0
        %v4441 = vsel %vm1353, %v4319, 0
        %v4444 = vsel %vm1353, %v4321, 0
        %v4447 = vsel %vm1353, %v4323, 0
        %v4450 = vsel %vm1353, %v4325, 0
        %v4453 = vsel %vm1353, %v4327, 0
        %4455 = vmatprep.subr.bf16.mxu0 0
        %4456 = vmatpush1.bf16.msra.mxu0 %v4389
        %4457 = vmatprep.subr.bf16.mxu0 0
        %4458 = vmatpush1.bf16.msra.mxu0 %v4390
        %4459 = vmatprep.subr.bf16.mxu0 0
        %4460 = vmatpush1.bf16.msra.mxu0 %v4391
        %4461 = vmatprep.subr.bf16.mxu0 0
        %4462 = vmatpush1.bf16.msra.mxu0 %v4392
        %4463 = vmatprep.subr.bf16.mxu0 0
        %4464 = vmatpush1.bf16.msra.mxu0 %v4393
        %4465 = vmatprep.subr.bf16.mxu0 0
        %4466 = vmatpush1.bf16.msra.mxu0 %v4394
        %4467 = vmatprep.subr.bf16.mxu0 0
        %4468 = vmatpush1.bf16.msra.mxu0 %v4395
        %4469 = vmatprep.subr.bf16.mxu0 0
        %4470 = vmatpush1.bf16.msra.mxu0 %v4396
        %4471 = vmatprep.subr.bf16.mxu0 0
        %4472 = vmatpush1.bf16.msra.mxu0 %v4397
        %4473 = vmatprep.subr.bf16.mxu0 0
        %4474 = vmatpush1.bf16.msra.mxu0 0
        %4475 = vmatprep.subr.bf16.mxu0 0
        %4476 = vmatpush1.bf16.msra.mxu0 0
        %4477 = vmatprep.subr.bf16.mxu0 0
        %4478 = vmatpush1.bf16.msra.mxu0 0
        %4479 = vmatprep.subr.bf16.mxu0 0
        %4480 = vmatpush1.bf16.msra.mxu0 0
        %4481 = vmatprep.subr.bf16.mxu0 0
        %4482 = vmatpush1.bf16.msra.mxu0 0
        %4483 = vmatprep.subr.bf16.mxu0 0
        %4484 = vmatpush1.bf16.msra.mxu0 0
        %4485 = vmatprep.subr.bf16.mxu0 0
        %4486 = vmatpush1.bf16.msra.mxu0 0
        %4487 = vmatprep.mubr.bf16.mxu0 %v4408
        %4488 = vmatmul.mubr.bf16.gmra.mrb[0].mxu0 %v4296
        %v4489 = vpop.f32.mrb[0].mxu0
        %v4490 = vadd.f32 %v4351, %v4489
        %v4491 = vpop.f32.mrb[0].mxu0
        %v4492 = vpop.f32.mrb[0].mxu0
        %v4493 = vadd.f32 %v4351, %v4492
        %v4494 = vpop.f32.mrb[0].mxu0
        %4495 = vmatprep.mubr.bf16.mxu0 %v4411
        %4496 = vmatmul.mubr.bf16.gmra.mrb[0].mxu0 %v4298
        %v4497 = vpop.f32.mrb[0].mxu0
        %v4498 = vadd.f32 %v4351, %v4497
        %v4499 = vpop.f32.mrb[0].mxu0
        %v4500 = vpop.f32.mrb[0].mxu0
        %v4501 = vadd.f32 %v4351, %v4500
        %v4502 = vpop.f32.mrb[0].mxu0
        %4503 = vmatprep.mubr.bf16.mxu0 %v4414
        %4504 = vmatmul.mubr.bf16.gmra.mrb[0].mxu0 %v4300
        %v4505 = vpop.f32.mrb[0].mxu0
        %v4506 = vadd.f32 %v4351, %v4505
        %v4507 = vpop.f32.mrb[0].mxu0
        %v4508 = vpop.f32.mrb[0].mxu0
        %v4509 = vadd.f32 %v4351, %v4508
        %v4510 = vpop.f32.mrb[0].mxu0
        %4511 = vmatprep.mubr.bf16.mxu0 %v4417
        %4512 = vmatmul.mubr.bf16.gmra.mrb[0].mxu0 %v4302
        %v4513 = vpop.f32.mrb[0].mxu0
        %v4514 = vadd.f32 %v4351, %v4513
        %v4515 = vpop.f32.mrb[0].mxu0
        %v4516 = vpop.f32.mrb[0].mxu0
        %v4517 = vadd.f32 %v4351, %v4516
        %v4518 = vpop.f32.mrb[0].mxu0
        %4519 = vmatprep.mubr.bf16.mxu0 %v4420
        %4520 = vmatmul.mubr.bf16.gmra.mrb[0].mxu0 %v4304
        %v4521 = vpop.f32.mrb[0].mxu0
        %v4522 = vadd.f32 %v4351, %v4521
        %v4523 = vpop.f32.mrb[0].mxu0
        %v4524 = vpop.f32.mrb[0].mxu0
        %v4525 = vadd.f32 %v4351, %v4524
        %v4526 = vpop.f32.mrb[0].mxu0
        %4527 = vmatprep.mubr.bf16.mxu0 %v4423
        %4528 = vmatmul.mubr.bf16.gmra.mrb[0].mxu0 %v4306
        %v4529 = vpop.f32.mrb[0].mxu0
        %v4530 = vadd.f32 %v4351, %v4529
        %v4531 = vpop.f32.mrb[0].mxu0
        %v4532 = vpop.f32.mrb[0].mxu0
        %v4533 = vadd.f32 %v4351, %v4532
        %v4534 = vpop.f32.mrb[0].mxu0
        %4535 = vmatprep.mubr.bf16.mxu0 %v4426
        %4536 = vmatmul.mubr.bf16.gmra.mrb[0].mxu0 %v4308
        %v4537 = vpop.f32.mrb[0].mxu0
        %v4538 = vadd.f32 %v4351, %v4537
        %v4539 = vpop.f32.mrb[0].mxu0
        %v4540 = vpop.f32.mrb[0].mxu0
        %v4541 = vadd.f32 %v4351, %v4540
        %v4542 = vpop.f32.mrb[0].mxu0
        %4543 = vmatprep.mubr.bf16.mxu0 %v4429
        %4544 = vmatmul.mubr.bf16.gmra.mrb[0].mxu0 %v4310
        %v4545 = vpop.f32.mrb[0].mxu0
        %v4546 = vadd.f32 %v4351, %v4545
        %v4547 = vpop.f32.mrb[0].mxu0
        %v4548 = vpop.f32.mrb[0].mxu0
        %v4549 = vadd.f32 %v4351, %v4548
        %v4550 = vpop.f32.mrb[0].mxu0
        %4551 = vmatprep.mubr.bf16.mxu0 %v4432
        %4552 = vmatmul.mubr.bf16.gmra.mrb[0].mxu0 %v4312
        %v4553 = vpop.f32.mrb[0].mxu0
        %v4554 = vadd.f32 %v4351, %v4553
        %v4555 = vpop.f32.mrb[0].mxu0
        %v4556 = vpop.f32.mrb[0].mxu0
        %v4557 = vadd.f32 %v4351, %v4556
        %v4558 = vpop.f32.mrb[0].mxu0
        %4559 = vmatprep.mubr.bf16.mxu0 %v4435
        %4560 = vmatmul.mubr.bf16.gmra.mrb[0].mxu0 %v4314
        %v4561 = vpop.f32.mrb[0].mxu0
        %v4562 = vadd.f32 %v4351, %v4561
        %v4563 = vpop.f32.mrb[0].mxu0
        %v4564 = vpop.f32.mrb[0].mxu0
        %v4565 = vadd.f32 %v4351, %v4564
        %v4566 = vpop.f32.mrb[0].mxu0
        %4567 = vmatprep.mubr.bf16.mxu0 %v4438
        %4568 = vmatmul.mubr.bf16.gmra.mrb[0].mxu0 %v4316
        %v4569 = vpop.f32.mrb[0].mxu0
        %v4570 = vadd.f32 %v4351, %v4569
        %v4571 = vpop.f32.mrb[0].mxu0
        %v4572 = vpop.f32.mrb[0].mxu0
        %v4573 = vadd.f32 %v4351, %v4572
        %v4574 = vpop.f32.mrb[0].mxu0
        %4575 = vmatprep.mubr.bf16.mxu0 %v4441
        %4576 = vmatmul.mubr.bf16.gmra.mrb[0].mxu0 %v4318
        %v4577 = vpop.f32.mrb[0].mxu0
        %v4578 = vadd.f32 %v4351, %v4577
        %v4579 = vpop.f32.mrb[0].mxu0
        %v4580 = vpop.f32.mrb[0].mxu0
        %v4581 = vadd.f32 %v4351, %v4580
        %v4582 = vpop.f32.mrb[0].mxu0
        %4583 = vmatprep.mubr.bf16.mxu0 %v4444
        %4584 = vmatmul.mubr.bf16.gmra.mrb[0].mxu0 %v4320
        %v4585 = vpop.f32.mrb[0].mxu0
        %v4586 = vadd.f32 %v4351, %v4585
        %v4587 = vpop.f32.mrb[0].mxu0
        %v4588 = vpop.f32.mrb[0].mxu0
        %v4589 = vadd.f32 %v4351, %v4588
        %v4590 = vpop.f32.mrb[0].mxu0
        %4591 = vmatprep.mubr.bf16.mxu0 %v4447
        %4592 = vmatmul.mubr.bf16.gmra.mrb[0].mxu0 %v4322
        %v4593 = vpop.f32.mrb[0].mxu0
        %v4594 = vadd.f32 %v4351, %v4593
        %v4595 = vpop.f32.mrb[0].mxu0
        %v4596 = vpop.f32.mrb[0].mxu0
        %v4597 = vadd.f32 %v4351, %v4596
        %v4598 = vpop.f32.mrb[0].mxu0
        %4599 = vmatprep.mubr.bf16.mxu0 %v4450
        %4600 = vmatmul.mubr.bf16.gmra.mrb[0].mxu0 %v4324
        %v4601 = vpop.f32.mrb[0].mxu0
        %v4602 = vadd.f32 %v4351, %v4601
        %v4603 = vpop.f32.mrb[0].mxu0
        %v4604 = vpop.f32.mrb[0].mxu0
        %v4605 = vadd.f32 %v4351, %v4604
        %v4606 = vpop.f32.mrb[0].mxu0
        %4607 = vmatprep.mubr.bf16.mxu0 %v4453
        %4608 = vmatmul.mubr.bf16.gmra.mrb[0].mxu0 %v4326
        %v4609 = vpop.f32.mrb[0].mxu0
        %v4610 = vadd.f32 %v4351, %v4609
        %v4611 = vpop.f32.mrb[0].mxu0
        %v4612 = vpop.f32.mrb[0].mxu0
        %v4613 = vadd.f32 %v4351, %v4612
        %v4614 = vpop.f32.mrb[0].mxu0
        %4615 = vdwg.mxu0
        %v4616 = vmax.f32 %v4490, 0.0
        %v4617 = vmax.f32 %v4493, 0.0
        %v4618 = vmax.f32 %v4498, 0.0
        %v4619 = vmax.f32 %v4501, 0.0
        %v4620 = vmax.f32 %v4506, 0.0
        %v4621 = vmax.f32 %v4509, 0.0
        %v4622 = vmax.f32 %v4514, 0.0
        %v4623 = vmax.f32 %v4517, 0.0
        %v4624 = vmax.f32 %v4522, 0.0
        %v4625 = vmax.f32 %v4525, 0.0
        %v4626 = vmax.f32 %v4530, 0.0
        %v4627 = vmax.f32 %v4533, 0.0
        %v4628 = vmax.f32 %v4538, 0.0
        %v4629 = vmax.f32 %v4541, 0.0
        %v4630 = vmax.f32 %v4546, 0.0
        %v4631 = vmax.f32 %v4549, 0.0
        %v4632 = vmax.f32 %v4554, 0.0
        %v4633 = vmax.f32 %v4557, 0.0
        %v4634 = vmax.f32 %v4562, 0.0
        %v4635 = vmax.f32 %v4565, 0.0
        %v4636 = vmax.f32 %v4570, 0.0
        %v4637 = vmax.f32 %v4573, 0.0
        %v4638 = vmax.f32 %v4578, 0.0
        %v4639 = vmax.f32 %v4581, 0.0
        %v4640 = vmax.f32 %v4586, 0.0
        %v4641 = vmax.f32 %v4589, 0.0
        %v4642 = vmax.f32 %v4594, 0.0
        %v4643 = vmax.f32 %v4597, 0.0
        %v4644 = vmax.f32 %v4602, 0.0
        %v4645 = vmax.f32 %v4605, 0.0
        %v4646 = vmax.f32 %v4610, 0.0
        %v4647 = vmax.f32 %v4613, 0.0
        %v4648 = vpack.c.bf16 %v4617, %v4616
        %v4649 = vpack.c.bf16 %v4619, %v4618
        %v4650 = vpack.c.bf16 %v4621, %v4620
        %v4651 = vpack.c.bf16 %v4623, %v4622
        %v4652 = vpack.c.bf16 %v4625, %v4624
        %v4653 = vpack.c.bf16 %v4627, %v4626
        %v4654 = vpack.c.bf16 %v4629, %v4628
        %v4655 = vpack.c.bf16 %v4631, %v4630
        %v4656 = vpack.c.bf16 %v4633, %v4632
        %v4657 = vpack.c.bf16 %v4635, %v4634
        %v4658 = vpack.c.bf16 %v4637, %v4636
        %v4659 = vpack.c.bf16 %v4639, %v4638
        %v4660 = vpack.c.bf16 %v4641, %v4640
        %v4661 = vpack.c.bf16 %v4643, %v4642
        %v4662 = vpack.c.bf16 %v4645, %v4644
        %v4663 = vpack.c.bf16 %v4647, %v4646
        %v4664 = vld [vmem:[%s5] sm:$0xf]
        %v4665 = vld [vmem:[%s5 + $0x4] sm:$0xf]
        %v4666 = vld [vmem:[%s6] sm:$0x1]
        %v4668 = vlaneseq
        %v4669 = vshrl.u32 %v4668, 7
        %v4670 = vsub.s32 0, %v4669
        %v4671 = vrot.slane %v4666, %v4670
        %v4675 = vunpack.c.l.b16 %v4664
        %v4676 = vunpack.c.l.b16 %v4665
        %v4677 = vpack.c.b16 %v4676, %v4675
        %v4680 = vsel %vm1353, %v4648, 0
        %v4683 = vsel %vm1353, %v4649, 0
        %v4686 = vsel %vm1353, %v4650, 0
        %v4689 = vsel %vm1353, %v4651, 0
        %v4692 = vsel %vm1353, %v4652, 0
        %v4695 = vsel %vm1353, %v4653, 0
        %v4698 = vsel %vm1353, %v4654, 0
        %v4701 = vsel %vm1353, %v4655, 0
        %v4704 = vsel %vm1353, %v4656, 0
        %v4707 = vsel %vm1353, %v4657, 0
        %v4710 = vsel %vm1353, %v4658, 0
        %v4713 = vsel %vm1353, %v4659, 0
        %v4716 = vsel %vm1353, %v4660, 0
        %v4719 = vsel %vm1353, %v4661, 0
        %v4722 = vsel %vm1353, %v4662, 0
        %v4725 = vsel %vm1353, %v4663, 0
        %4727 = vmatprep.subr.bf16.mxu0 0
        %4728 = vmatpush1.bf16.msra.mxu0 %v4677
        %4729 = vmatprep.subr.bf16.mxu0 0
        %4730 = vmatpush1.bf16.msra.mxu0 0
        %4731 = vmatprep.subr.bf16.mxu0 0
        %4732 = vmatpush1.bf16.msra.mxu0 0
        %4733 = vmatprep.subr.bf16.mxu0 0
        %4734 = vmatpush1.bf16.msra.mxu0 0
        %4735 = vmatprep.subr.bf16.mxu0 0
        %4736 = vmatpush1.bf16.msra.mxu0 0
        %4737 = vmatprep.subr.bf16.mxu0 0
        %4738 = vmatpush1.bf16.msra.mxu0 0
        %4739 = vmatprep.subr.bf16.mxu0 0
        %4740 = vmatpush1.bf16.msra.mxu0 0
        %4741 = vmatprep.subr.bf16.mxu0 0
        %4742 = vmatpush1.bf16.msra.mxu0 0
        %4743 = vmatprep.subr.bf16.mxu0 0
        %4744 = vmatpush1.bf16.msra.mxu0 0
        %4745 = vmatprep.subr.bf16.mxu0 0
        %4746 = vmatpush1.bf16.msra.mxu0 0
        %4747 = vmatprep.subr.bf16.mxu0 0
        %4748 = vmatpush1.bf16.msra.mxu0 0
        %4749 = vmatprep.subr.bf16.mxu0 0
        %4750 = vmatpush1.bf16.msra.mxu0 0
        %4751 = vmatprep.subr.bf16.mxu0 0
        %4752 = vmatpush1.bf16.msra.mxu0 0
        %4753 = vmatprep.subr.bf16.mxu0 0
        %4754 = vmatpush1.bf16.msra.mxu0 0
        %4755 = vmatprep.subr.bf16.mxu0 0
        %4756 = vmatpush1.bf16.msra.mxu0 0
        %4757 = vmatprep.subr.bf16.mxu0 0
        %4758 = vmatpush1.bf16.msra.mxu0 0
        %4759 = vmatprep.mubr.bf16.mxu0 0
        %4760 = vmatmul.mubr.bf16.gmra.mrb[0].mxu0 %v4680
        %v4761 = vpop.f32.mrb[0].mxu0
        %v4762 = vadd.f32 %v4671, %v4761
        %v4763 = vpop.f32.mrb[0].mxu0
        %v4764 = vpop.f32.mrb[0].mxu0
        %v4765 = vadd.f32 %v4671, %v4764
        %v4766 = vpop.f32.mrb[0].mxu0
        %4767 = vmatprep.mubr.bf16.mxu0 0
        %4768 = vmatmul.mubr.bf16.gmra.mrb[0].mxu0 %v4683
        %v4769 = vpop.f32.mrb[0].mxu0
        %v4770 = vadd.f32 %v4671, %v4769
        %v4771 = vpop.f32.mrb[0].mxu0
        %v4772 = vpop.f32.mrb[0].mxu0
        %v4773 = vadd.f32 %v4671, %v4772
        %v4774 = vpop.f32.mrb[0].mxu0
        %4775 = vmatprep.mubr.bf16.mxu0 0
        %4776 = vmatmul.mubr.bf16.gmra.mrb[0].mxu0 %v4686
        %v4777 = vpop.f32.mrb[0].mxu0
        %v4778 = vadd.f32 %v4671, %v4777
        %v4779 = vpop.f32.mrb[0].mxu0
        %v4780 = vpop.f32.mrb[0].mxu0
        %v4781 = vadd.f32 %v4671, %v4780
        %v4782 = vpop.f32.mrb[0].mxu0
        %4783 = vmatprep.mubr.bf16.mxu0 0
        %4784 = vmatmul.mubr.bf16.gmra.mrb[0].mxu0 %v4689
        %v4785 = vpop.f32.mrb[0].mxu0
        %v4786 = vadd.f32 %v4671, %v4785
        %v4787 = vpop.f32.mrb[0].mxu0
        %v4788 = vpop.f32.mrb[0].mxu0
        %v4789 = vadd.f32 %v4671, %v4788
        %v4790 = vpop.f32.mrb[0].mxu0
        %4791 = vmatprep.mubr.bf16.mxu0 0
        %4792 = vmatmul.mubr.bf16.gmra.mrb[0].mxu0 %v4692
        %v4793 = vpop.f32.mrb[0].mxu0
        %v4794 = vadd.f32 %v4671, %v4793
        %v4795 = vpop.f32.mrb[0].mxu0
        %v4796 = vpop.f32.mrb[0].mxu0
        %v4797 = vadd.f32 %v4671, %v4796
        %v4798 = vpop.f32.mrb[0].mxu0
        %4799 = vmatprep.mubr.bf16.mxu0 0
        %4800 = vmatmul.mubr.bf16.gmra.mrb[0].mxu0 %v4695
        %v4801 = vpop.f32.mrb[0].mxu0
        %v4802 = vadd.f32 %v4671, %v4801
        %v4803 = vpop.f32.mrb[0].mxu0
        %v4804 = vpop.f32.mrb[0].mxu0
        %v4805 = vadd.f32 %v4671, %v4804
        %v4806 = vpop.f32.mrb[0].mxu0
        %4807 = vmatprep.mubr.bf16.mxu0 0
        %4808 = vmatmul.mubr.bf16.gmra.mrb[0].mxu0 %v4698
        %v4809 = vpop.f32.mrb[0].mxu0
        %v4810 = vadd.f32 %v4671, %v4809
        %v4811 = vpop.f32.mrb[0].mxu0
        %v4812 = vpop.f32.mrb[0].mxu0
        %v4813 = vadd.f32 %v4671, %v4812
        %v4814 = vpop.f32.mrb[0].mxu0
        %4815 = vmatprep.mubr.bf16.mxu0 0
        %4816 = vmatmul.mubr.bf16.gmra.mrb[0].mxu0 %v4701
        %v4817 = vpop.f32.mrb[0].mxu0
        %v4818 = vadd.f32 %v4671, %v4817
        %v4819 = vpop.f32.mrb[0].mxu0
        %v4820 = vpop.f32.mrb[0].mxu0
        %v4821 = vadd.f32 %v4671, %v4820
        %v4822 = vpop.f32.mrb[0].mxu0
        %4823 = vmatprep.mubr.bf16.mxu0 0
        %4824 = vmatmul.mubr.bf16.gmra.mrb[0].mxu0 %v4704
        %v4825 = vpop.f32.mrb[0].mxu0
        %v4826 = vadd.f32 %v4671, %v4825
        %v4827 = vpop.f32.mrb[0].mxu0
        %v4828 = vpop.f32.mrb[0].mxu0
        %v4829 = vadd.f32 %v4671, %v4828
        %v4830 = vpop.f32.mrb[0].mxu0
        %4831 = vmatprep.mubr.bf16.mxu0 0
        %4832 = vmatmul.mubr.bf16.gmra.mrb[0].mxu0 %v4707
        %v4833 = vpop.f32.mrb[0].mxu0
        %v4834 = vadd.f32 %v4671, %v4833
        %v4835 = vpop.f32.mrb[0].mxu0
        %v4836 = vpop.f32.mrb[0].mxu0
        %v4837 = vadd.f32 %v4671, %v4836
        %v4838 = vpop.f32.mrb[0].mxu0
        %4839 = vmatprep.mubr.bf16.mxu0 0
        %4840 = vmatmul.mubr.bf16.gmra.mrb[0].mxu0 %v4710
        %v4841 = vpop.f32.mrb[0].mxu0
        %v4842 = vadd.f32 %v4671, %v4841
        %v4843 = vpop.f32.mrb[0].mxu0
        %v4844 = vpop.f32.mrb[0].mxu0
        %v4845 = vadd.f32 %v4671, %v4844
        %v4846 = vpop.f32.mrb[0].mxu0
        %4847 = vmatprep.mubr.bf16.mxu0 0
        %4848 = vmatmul.mubr.bf16.gmra.mrb[0].mxu0 %v4713
        %v4849 = vpop.f32.mrb[0].mxu0
        %v4850 = vadd.f32 %v4671, %v4849
        %v4851 = vpop.f32.mrb[0].mxu0
        %v4852 = vpop.f32.mrb[0].mxu0
        %v4853 = vadd.f32 %v4671, %v4852
        %v4854 = vpop.f32.mrb[0].mxu0
        %4855 = vmatprep.mubr.bf16.mxu0 0
        %4856 = vmatmul.mubr.bf16.gmra.mrb[0].mxu0 %v4716
        %v4857 = vpop.f32.mrb[0].mxu0
        %v4858 = vadd.f32 %v4671, %v4857
        %v4859 = vpop.f32.mrb[0].mxu0
        %v4860 = vpop.f32.mrb[0].mxu0
        %v4861 = vadd.f32 %v4671, %v4860
        %v4862 = vpop.f32.mrb[0].mxu0
        %4863 = vmatprep.mubr.bf16.mxu0 0
        %4864 = vmatmul.mubr.bf16.gmra.mrb[0].mxu0 %v4719
        %v4865 = vpop.f32.mrb[0].mxu0
        %v4866 = vadd.f32 %v4671, %v4865
        %v4867 = vpop.f32.mrb[0].mxu0
        %v4868 = vpop.f32.mrb[0].mxu0
        %v4869 = vadd.f32 %v4671, %v4868
        %v4870 = vpop.f32.mrb[0].mxu0
        %4871 = vmatprep.mubr.bf16.mxu0 0
        %4872 = vmatmul.mubr.bf16.gmra.mrb[0].mxu0 %v4722
        %v4873 = vpop.f32.mrb[0].mxu0
        %v4874 = vadd.f32 %v4671, %v4873
        %v4875 = vpop.f32.mrb[0].mxu0
        %v4876 = vpop.f32.mrb[0].mxu0
        %v4877 = vadd.f32 %v4671, %v4876
        %v4878 = vpop.f32.mrb[0].mxu0
        %4879 = vmatprep.mubr.bf16.mxu0 0
        %4880 = vmatmul.mubr.bf16.gmra.mrb[0].mxu0 %v4725
        %v4881 = vpop.f32.mrb[0].mxu0
        %v4882 = vadd.f32 %v4671, %v4881
        %v4883 = vpop.f32.mrb[0].mxu0
        %v4884 = vpop.f32.mrb[0].mxu0
        %v4885 = vadd.f32 %v4671, %v4884
        %v4886 = vpop.f32.mrb[0].mxu0
        %4887 = vdwg.mxu0
        %v4888 = vadd.f32 %v4762, %v298
        %v4889 = vadd.f32 %v4765, %v299
        %v4890 = vadd.f32 %v4770, %v300
        %v4891 = vadd.f32 %v4773, %v301
        %v4892 = vadd.f32 %v4778, %v302
        %v4893 = vadd.f32 %v4781, %v303
        %v4894 = vadd.f32 %v4786, %v304
        %v4895 = vadd.f32 %v4789, %v305
        %v4896 = vadd.f32 %v4794, %v306
        %v4897 = vadd.f32 %v4797, %v307
        %v4898 = vadd.f32 %v4802, %v308
        %v4899 = vadd.f32 %v4805, %v309
        %v4900 = vadd.f32 %v4810, %v310
        %v4901 = vadd.f32 %v4813, %v311
        %v4902 = vadd.f32 %v4818, %v312
        %v4903 = vadd.f32 %v4821, %v313
        %v4904 = vadd.f32 %v4826, %v314
        %v4905 = vadd.f32 %v4829, %v315
        %v4906 = vadd.f32 %v4834, %v316
        %v4907 = vadd.f32 %v4837, %v317
        %v4908 = vadd.f32 %v4842, %v318
        %v4909 = vadd.f32 %v4845, %v319
        %v4910 = vadd.f32 %v4850, %v320
        %v4911 = vadd.f32 %v4853, %v321
        %v4912 = vadd.f32 %v4858, %v322
        %v4913 = vadd.f32 %v4861, %v323
        %v4914 = vadd.f32 %v4866, %v324
        %v4915 = vadd.f32 %v4869, %v325
        %v4916 = vadd.f32 %v4874, %v326
        %v4917 = vadd.f32 %v4877, %v327
        %v4918 = vadd.f32 %v4882, %v328
        %v4919 = vadd.f32 %v4885, %v329
        %v4920 = vmax.f32 %v4888, 0.0
        %v4921 = vmax.f32 %v4889, 0.0
        %v4922 = vmax.f32 %v4890, 0.0
        %v4923 = vmax.f32 %v4891, 0.0
        %v4924 = vmax.f32 %v4892, 0.0
        %v4925 = vmax.f32 %v4893, 0.0
        %v4926 = vmax.f32 %v4894, 0.0
        %v4927 = vmax.f32 %v4895, 0.0
        %v4928 = vmax.f32 %v4896, 0.0
        %v4929 = vmax.f32 %v4897, 0.0
        %v4930 = vmax.f32 %v4898, 0.0
        %v4931 = vmax.f32 %v4899, 0.0
        %v4932 = vmax.f32 %v4900, 0.0
        %v4933 = vmax.f32 %v4901, 0.0
        %v4934 = vmax.f32 %v4902, 0.0
        %v4935 = vmax.f32 %v4903, 0.0
        %v4936 = vmax.f32 %v4904, 0.0
        %v4937 = vmax.f32 %v4905, 0.0
        %v4938 = vmax.f32 %v4906, 0.0
        %v4939 = vmax.f32 %v4907, 0.0
        %v4940 = vmax.f32 %v4908, 0.0
        %v4941 = vmax.f32 %v4909, 0.0
        %v4942 = vmax.f32 %v4910, 0.0
        %v4943 = vmax.f32 %v4911, 0.0
        %v4944 = vmax.f32 %v4912, 0.0
        %v4945 = vmax.f32 %v4913, 0.0
        %v4946 = vmax.f32 %v4914, 0.0
        %v4947 = vmax.f32 %v4915, 0.0
        %v4948 = vmax.f32 %v4916, 0.0
        %v4949 = vmax.f32 %v4917, 0.0
        %v4950 = vmax.f32 %v4918, 0.0
        %v4951 = vmax.f32 %v4919, 0.0
        %4952 = vst.msk [vmem:[%s296] sm:$0xff] %vm445, %v4920
        %4953 = vst.msk [vmem:[%s296 + $0x8] sm:$0xff] %vm445, %v4921
        %4954 = vst.msk [vmem:[%s296 + $0x10] sm:$0xff] %vm445, %v4922
        %4955 = vst.msk [vmem:[%s296 + $0x18] sm:$0xff] %vm445, %v4923
        %4956 = vst.msk [vmem:[%s296 + $0x20] sm:$0xff] %vm445, %v4924
        %4957 = vst.msk [vmem:[%s296 + $0x28] sm:$0xff] %vm445, %v4925
        %4958 = vst.msk [vmem:[%s296 + $0x30] sm:$0xff] %vm445, %v4926
        %4959 = vst.msk [vmem:[%s296 + $0x38] sm:$0xff] %vm445, %v4927
        %4960 = vst.msk [vmem:[%s296 + $0x40] sm:$0xff] %vm445, %v4928
        %4961 = vst.msk [vmem:[%s296 + $0x48] sm:$0xff] %vm445, %v4929
        %4962 = vst.msk [vmem:[%s296 + $0x50] sm:$0xff] %vm445, %v4930
        %4963 = vst.msk [vmem:[%s296 + $0x58] sm:$0xff] %vm445, %v4931
        %4964 = vst.msk [vmem:[%s296 + $0x60] sm:$0xff] %vm445, %v4932
        %4965 = vst.msk [vmem:[%s296 + $0x68] sm:$0xff] %vm445, %v4933
        %4966 = vst.msk [vmem:[%s296 + $0x70] sm:$0xff] %vm445, %v4934
        %4967 = vst.msk [vmem:[%s296 + $0x78] sm:$0xff] %vm445, %v4935
        %4968 = vst.msk [vmem:[%s296 + $0x80] sm:$0xff] %vm445, %v4936
        %4969 = vst.msk [vmem:[%s296 + $0x88] sm:$0xff] %vm445, %v4937
        %4970 = vst.msk [vmem:[%s296 + $0x90] sm:$0xff] %vm445, %v4938
        %4971 = vst.msk [vmem:[%s296 + $0x98] sm:$0xff] %vm445, %v4939
        %4972 = vst.msk [vmem:[%s296 + $0xa0] sm:$0xff] %vm445, %v4940
        %4973 = vst.msk [vmem:[%s296 + $0xa8] sm:$0xff] %vm445, %v4941
        %4974 = vst.msk [vmem:[%s296 + $0xb0] sm:$0xff] %vm445, %v4942
        %4975 = vst.msk [vmem:[%s296 + $0xb8] sm:$0xff] %vm445, %v4943
        %4976 = vst.msk [vmem:[%s296 + $0xc0] sm:$0xff] %vm445, %v4944
        %4977 = vst.msk [vmem:[%s296 + $0xc8] sm:$0xff] %vm445, %v4945
        %4978 = vst.msk [vmem:[%s296 + $0xd0] sm:$0xff] %vm445, %v4946
        %4979 = vst.msk [vmem:[%s296 + $0xd8] sm:$0xff] %vm445, %v4947
        %4980 = vst.msk [vmem:[%s296 + $0xe0] sm:$0xff] %vm445, %v4948
        %4981 = vst.msk [vmem:[%s296 + $0xe8] sm:$0xff] %vm445, %v4949
        %4982 = vst.msk [vmem:[%s296 + $0xf0] sm:$0xff] %vm445, %v4950
        %4983 = vst.msk [vmem:[%s296 + $0xf8] sm:$0xff] %vm445, %v4951
        %s4984 = sand.u32 %s184, 1
        %s4985 = scalar_lea.sflag [#allocation6], %s4984
        %s4986 = sand.u32 %s184, 1
        %s4987 = smul.addr %s4986, 256
        %s4988 = scalar_lea.vmem [#allocation7], %s4987
        // Predicated region
        $region57: #{tpu_custom_call.1} parent=47 // pred_check
          %p4989 = pneg %p194
        $region58: #{tpu_custom_call.1} parent=47 // pred_check_branch
          %4991 = sbr.rel (%p4989) target = $region60
        $region59: #{tpu_custom_call.1} parent=47 // pred_region
          %s4993 = ssub.s32 4096, 4096
          %4994 = vsyncadd %s4985, %s4993
          %s4995 = smul.addr %s24, 32
          %s4996 = smul.addr %s4995, 128
          %s4997 = scalar_lea.hbm %s7, %s4996
          %s4998 = sshll.u32 %s4988, 4
          %s4999 = int_to_ptr.vmem [resolvable:$true] %s4998
          %5004 = dma.vmem_to_hbm [thread:$0]  %s4999, 4096, %s4997, %s4985, 128, 128, 8
        $region60: #{tpu_custom_call.1} parent=47 // pred_fallthru
          _
      $region48: #{tpu_custom_call.1} parent=5 // pred_fallthru
        _
      %p5005 = scmp.le.s32.totalorder 2, %s19
      // Predicated region
      $region61: #{tpu_custom_call.1} parent=5 // pred_check
        %p5006 = pneg %p5005
      $region62: #{tpu_custom_call.1} parent=5 // pred_check_branch
        %5008 = sbr.rel (%p5006) target = $region64
      $region63: #{tpu_custom_call.1} parent=5 // pred_region
        %s5009 = ssub.s32 %s19, 2
        // Predicated region
        $region65: #{tpu_custom_call.1} parent=63 // pred_check
          %p5010 = pneg %p200
        $region66: #{tpu_custom_call.1} parent=63 // pred_check_branch
          %5012 = sbr.rel (%p5010) target = $region68
        $region67: #{tpu_custom_call.1} parent=63 // pred_region
          %s5013 = sand.u32 %s185, 1
          %s5014 = scalar_lea.sflag [#allocation6], %s5013
          %s5015 = sand.u32 %s185, 1
          %s5016 = smul.addr %s5015, 256
          %s5017 = scalar_lea.vmem [#allocation7], %s5016
          %5018 = dma.done %s5014, 4096
        $region68: #{tpu_custom_call.1} parent=63 // pred_fallthru
          _
      $region64: #{tpu_custom_call.1} parent=5 // pred_fallthru
        _
    $region6: #{tpu_custom_call.1} parent=1 // loop_footer
      %s23 = sadd.s32 1, %s19
    $region7: #{tpu_custom_call.1} parent=1 // loop_footer_branch
      %18 = sbr.rel target = $region3
    $region8: #{tpu_custom_call.1} parent=1 // loop_exit
      _
    %5019 = vsyncpa [#allocation5], 1
    %s5020 = scalar_lea.sflag [#allocation5], 1
    %5021 = vsyncpa %s5020, 1
    %5022 = vsyncpa [#allocation6], 1
    %s5023 = scalar_lea.sflag [#allocation6], 1
    %5024 = vsyncpa %s5023, 1

</llo_original>
